<compile_context>
chip_gen: v5e
topology: v5e:2x2
jax: 0.10.0
libtpu: 0.0.40
codegen_flags: <defaults>
</compile_context>

<pallas_src>
import functools
import math

import jax
import jax.numpy as jnp
from jax.experimental import pallas as pl
from jax.experimental.pallas import tpu as pltpu


COMPUTE_DTYPE = jnp.bfloat16      # MXU operand dtype (accumulation stays f32)
NEG_INF = -1e9
LN_EPS = 1e-5


def _default_vmem_limit():
    """Generation-aware VMEM budget: ~3/4 of physical VMEM, capped at 112 MiB."""
    cap = None
    try:
        cap = int(pltpu.get_tpu_info().vmem_capacity_bytes)
    except Exception:
        cap = None
    if not cap or cap <= 0:
        cap = 64 * 1024 * 1024          # conservative fallback: safe on v7x too
    return int(min(cap * 3 // 4, 112 * 1024 * 1024))


_VMEM_LIMIT = _default_vmem_limit()

# Default matmul tiles derived from the VMEM budget (bigger blocks on v5e/v6e
# amortize per-grid-step overhead; smaller on v7x's 64 MiB VMEM).
if _VMEM_LIMIT >= 80 * 1024 * 1024:
    _TM, _TN, _TK = 512, 1024, 1024
else:
    _TM, _TN, _TK = 256, 512, 512


def _pick_tile(dim, target, align):
    """Largest multiple of `align` (<= target) dividing `dim`; else the full dim.

    Keeps BlockSpec shapes either full-extent or (8,128)-aligned divisors so the
    grid divides evenly.
    TODO(synk): for awkward large dims with no aligned divisor, pad or use cdiv
    edge blocks instead of falling back to the full dimension."""
    if dim <= target:
        return dim
    t = (target // align) * align
    while t >= align:
        if dim % t == 0:
            return t
        t -= align
    return dim


def _w_spec(block_shape, index_map, k_blocks):
    """Weight BlockSpec; deeper pipelining when the reduction axis is streamed
    (hides DMA issue latency on BW-bound chips, mainly v5e)."""
    if k_blocks > 2 and hasattr(pl, "Buffered"):
        return pl.BlockSpec(block_shape, index_map, pipeline_mode=pl.Buffered(3))
    return pl.BlockSpec(block_shape, index_map)


# ----------------------------- Pallas kernels ------------------------------

def _matmul_bias_kernel(x_ref, w_ref, b_ref, o_ref, acc_ref, *, activation,
                        k_axis):
    """o = act(x @ W + b); K-reduction over grid axis `k_axis`, f32 accumulator."""
    @pl.when(pl.program_id(k_axis) == 0)
    def _init():
        acc_ref[...] = jnp.zeros_like(acc_ref)

    acc_ref[...] += jnp.dot(x_ref[...], w_ref[...],
                            preferred_element_type=jnp.float32)

    @pl.when(pl.program_id(k_axis) == pl.num_programs(k_axis) - 1)
    def _finalize():
        y = acc_ref[...] + b_ref[...]
        if activation == "relu":
            y = jnp.maximum(y, 0.0)
        o_ref[...] = y.astype(o_ref.dtype)


def _matmul_bias_res_ln_kernel(x_ref, w_ref, b_ref, r_ref, g_ref, beta_ref,
                               o_ref, acc_ref, *, eps):
    """o = LayerNorm(residual + x @ W + b) * gamma + beta (LN over full N)."""
    @pl.when(pl.program_id(1) == 0)
    def _init():
        acc_ref[...] = jnp.zeros_like(acc_ref)

    acc_ref[...] += jnp.dot(x_ref[...], w_ref[...],
                            preferred_element_type=jnp.float32)

    @pl.when(pl.program_id(1) == pl.num_programs(1) - 1)
    def _finalize():
        y = acc_ref[...] + b_ref[...] + r_ref[...].astype(jnp.float32)
        mu = jnp.mean(y, axis=-1, keepdims=True)
        var = jnp.mean((y - mu) * (y - mu), axis=-1, keepdims=True)
        o_ref[...] = ((y - mu) * jax.lax.rsqrt(var + eps) * g_ref[...]
                      + beta_ref[...]).astype(o_ref.dtype)


def _ffn_fused_kernel(x_ref, w1_ref, b1_ref, w2_ref, b2_ref, g_ref, beta_ref,
                      o_ref, acc_ref, *, eps):
    """acc += relu(x @ W1[:,f] + b1[f]) @ W2[f,:]; epilogue: residual + LN."""
    @pl.when(pl.program_id(1) == 0)
    def _init():
        acc_ref[...] = jnp.zeros_like(acc_ref)

    h = jnp.dot(x_ref[...], w1_ref[...], preferred_element_type=jnp.float32)
    h = jnp.maximum(h + b1_ref[...], 0.0).astype(x_ref.dtype)
    acc_ref[...] += jnp.dot(h, w2_ref[...], preferred_element_type=jnp.float32)

    @pl.when(pl.program_id(1) == pl.num_programs(1) - 1)
    def _finalize():
        y = acc_ref[...] + b2_ref[...] + x_ref[...].astype(jnp.float32)
        mu = jnp.mean(y, axis=-1, keepdims=True)
        var = jnp.mean((y - mu) * (y - mu), axis=-1, keepdims=True)
        o_ref[...] = ((y - mu) * jax.lax.rsqrt(var + eps) * g_ref[...]
                      + beta_ref[...]).astype(o_ref.dtype)


def _flash_attn_kernel(q_ref, k_ref, v_ref, bias_ref, o_ref,
                       m_scr, l_scr, acc_scr, *, n_head, scale, causal):
    """Flash-style SDPA for ALL heads of one (batch, q-tile), KV streamed.

    q_ref: (tq, D); k_ref/v_ref: (tkv, D); bias_ref: (1, tkv) additive
    key-padding bias (0 / -1e9).  Causal mask generated from iota in-kernel."""
    tq, d_model = q_ref.shape
    tkv = k_ref.shape[0]
    dh = d_model // n_head
    ki = pl.program_id(2)

    @pl.when(ki == 0)
    def _init():
        m_scr[...] = jnp.full_like(m_scr, -jnp.inf)
        l_scr[...] = jnp.zeros_like(l_scr)
        acc_scr[...] = jnp.zeros_like(acc_scr)

    q = q_ref[...]
    k = k_ref[...]
    v = v_ref[...]

    bias = bias_ref[...].astype(jnp.float32)                  # (1, tkv)
    if causal:
        q_pos = (pl.program_id(1) * tq
                 + jax.lax.broadcasted_iota(jnp.int32, (tq, tkv), 0))
        k_pos = ki * tkv + jax.lax.broadcasted_iota(jnp.int32, (tq, tkv), 1)
        bias = jnp.where(k_pos <= q_pos, bias, NEG_INF)        # (tq, tkv)

    for h in range(n_head):                                    # static unroll
        lo = h * dh
        qh = q[:, lo:lo + dh]
        kh = k[:, lo:lo + dh]
        vh = v[:, lo:lo + dh]
        # QK^T without materializing a transpose of K.
        s = jax.lax.dot_general(qh, kh, (((1,), (1,)), ((), ())),
                                preferred_element_type=jnp.float32) * scale
        s = s + bias
        m_prev = m_scr[h]
        m_new = jnp.maximum(m_prev, jnp.max(s, axis=-1, keepdims=True))
        alpha = jnp.exp(m_prev - m_new)
        p = jnp.exp(s - m_new)
        l_scr[h] = alpha * l_scr[h] + jnp.sum(p, axis=-1, keepdims=True)
        acc_scr[h] = alpha * acc_scr[h] + jnp.dot(
            p.astype(vh.dtype), vh, preferred_element_type=jnp.float32)
        m_scr[h] = m_new

    @pl.when(ki == pl.num_programs(2) - 1)
    def _finalize():
        if dh >= 128:
            # lane-aligned per-head stores; caps live state to one head
            for h in range(n_head):
                inv = pl.reciprocal(l_scr[h], approx=True)
                o_ref[:, h * dh:(h + 1) * dh] = (acc_scr[h] * inv).astype(o_ref.dtype)
        else:
            # dh < 128: keep one lane-dense (tq, D) store
            outs = [acc_scr[h] * pl.reciprocal(l_scr[h], approx=True)
                    for h in range(n_head)]
            o_ref[...] = jnp.concatenate(outs, axis=-1).astype(o_ref.dtype)


# ------------------------------ kernel wrappers ------------------------------

def linear(x2d, w, b, *, activation=None, out_dtype=COMPUTE_DTYPE,
           tm=None, tn=None, tk=None):
    """Tiled y = act(x @ W + b).  x2d: (M,K) bf16, w: (K,N) bf16, b: (1,N) f32."""
    M, K = x2d.shape
    N = w.shape[1]
    tm = _pick_tile(M, tm or _TM, 8)
    tn = _pick_tile(N, tn or _TN, 128)
    tk = _pick_tile(K, tk or _TK, 128)
    kb = K // tk
    grid = (M // tm, N // tn, kb)
    kernel = functools.partial(_matmul_bias_kernel, activation=activation,
                               k_axis=2)
    ob = jnp.dtype(out_dtype).itemsize
    cost = pl.CostEstimate(flops=2 * M * N * K, transcendentals=0,
                           bytes_accessed=int(M * K * 2 + K * N * 2 + N * 4
                                              + M * N * ob))
    return pl.pallas_call(
        kernel,
        out_shape=jax.ShapeDtypeStruct((M, N), out_dtype),
        grid=grid,
        in_specs=[
            pl.BlockSpec((tm, tk), lambda i, j, k: (i, k)),
            _w_spec((tk, tn), lambda i, j, k: (k, j), kb),
            pl.BlockSpec((1, tn), lambda i, j, k: (0, j)),
        ],
        out_specs=pl.BlockSpec((tm, tn), lambda i, j, k: (i, j)),
        scratch_shapes=[pltpu.VMEM((tm, tn), jnp.float32)],
        compiler_params=pltpu.CompilerParams(
            dimension_semantics=("parallel", "parallel", "arbitrary"),
            vmem_limit_bytes=_VMEM_LIMIT),
        cost_estimate=cost,
    )(x2d, w, b)


def packed_linear(x2d, w, b, *, activation=None, out_dtype=COMPUTE_DTYPE,
                  tm=None, tn=None, tk=None):
    """y[s] = act(x @ W[s] + b[s]) with weight stack W: (S,K,N), b: (S,1,N).

    Output layout (S, M, N) lets the attention kernel index Q/K/V slabs via
    BlockSpecs directly (no HBM round-trip of jnp slices)."""
    M, K = x2d.shape
    S, _, N = w.shape
    tm = _pick_tile(M, tm or _TM, 8)
    tn = _pick_tile(N, tn or _TN, 128)
    tk = _pick_tile(K, tk or _TK, 128)
    kb = K // tk
    grid = (S, M // tm, N // tn, kb)
    kernel = functools.partial(_matmul_bias_kernel, activation=activation,
                               k_axis=3)
    cost = pl.CostEstimate(flops=2 * S * M * N * K, transcendentals=0,
                           bytes_accessed=int(S * M * K * 2 + S * K * N * 2
                                              + S * N * 4 + S * M * N * 2))
    return pl.pallas_call(
        kernel,
        out_shape=jax.ShapeDtypeStruct((S, M, N), out_dtype),
        grid=grid,
        in_specs=[
            pl.BlockSpec((tm, tk), lambda s, i, j, k: (i, k)),
            _w_spec((None, tk, tn), lambda s, i, j, k: (s, k, j), kb),
            pl.BlockSpec((None, 1, tn), lambda s, i, j, k: (s, 0, j)),
        ],
        out_specs=pl.BlockSpec((None, tm, tn), lambda s, i, j, k: (s, i, j)),
        scratch_shapes=[pltpu.VMEM((tm, tn), jnp.float32)],
        compiler_params=pltpu.CompilerParams(
            dimension_semantics=("parallel", "parallel", "parallel",
                                 "arbitrary"),
            vmem_limit_bytes=_VMEM_LIMIT),
        cost_estimate=cost,
    )(x2d, w, b)


def matmul_bias_residual_layernorm(x2d, w, b, res2d, gamma, beta,
                                   *, eps=LN_EPS, tm=None, tk=None):
    """Tiled y = LN(res + x @ W + b) * gamma + beta.  N (= d_model) kept whole so
    the LayerNorm reduction stays inside one block.
    TODO(synk): for very large d_model on v7x, tile N with partial mean/sumsq
    accumulation instead of a full-N accumulator block."""
    M, K = x2d.shape
    N = w.shape[1]
    tm = _pick_tile(M, tm or 256, 8)
    tk = _pick_tile(K, tk or _TK, 128)
    kb = K // tk
    grid = (M // tm, kb)
    kernel = functools.partial(_matmul_bias_res_ln_kernel, eps=eps)
    cost = pl.CostEstimate(flops=2 * M * N * K + 10 * M * N, transcendentals=M,
                           bytes_accessed=int(M * K * 2 + K * N * 2
                                              + 2 * M * N * 2 + 3 * N * 4))
    return pl.pallas_call(
        kernel,
        out_shape=jax.ShapeDtypeStruct((M, N), COMPUTE_DTYPE),
        grid=grid,
        in_specs=[
            pl.BlockSpec((tm, tk), lambda i, k: (i, k)),
            _w_spec((tk, N), lambda i, k: (k, 0), kb),
            pl.BlockSpec((1, N), lambda i, k: (0, 0)),
            pl.BlockSpec((tm, N), lambda i, k: (i, 0)),   # residual (resident)
            pl.BlockSpec((1, N), lambda i, k: (0, 0)),
            pl.BlockSpec((1, N), lambda i, k: (0, 0)),
        ],
        out_specs=pl.BlockSpec((tm, N), lambda i, k: (i, 0)),
        scratch_shapes=[pltpu.VMEM((tm, N), jnp.float32)],
        compiler_params=pltpu.CompilerParams(
            dimension_semantics=("parallel", "arbitrary"),
            vmem_limit_bytes=_VMEM_LIMIT),
        cost_estimate=cost,
    )(x2d, w, b, res2d, gamma, beta)


def ffn_fused(x2d, w1, b1, w2, b2, gamma, beta, *, eps=LN_EPS, tm=None, tf=None):
    """y = LN(x + relu(x@W1+b1) @ W2 + b2) * gamma + beta; the (M, ffn_hidden)
    intermediate lives only in VMEM (never written to HBM)."""
    M, D = x2d.shape
    F = w1.shape[1]
    tm = _pick_tile(M, tm or 256, 8)
    tf = _pick_tile(F, tf or 512, 128)
    fb = F // tf
    grid = (M // tm, fb)
    kernel = functools.partial(_ffn_fused_kernel, eps=eps)
    cost = pl.CostEstimate(flops=4 * M * F * D, transcendentals=M,
                           bytes_accessed=int(2 * M * D * 2 + 2 * F * D * 2
                                              + (F + 3 * D) * 4))
    return pl.pallas_call(
        kernel,
        out_shape=jax.ShapeDtypeStruct((M, D), COMPUTE_DTYPE),
        grid=grid,
        in_specs=[
            pl.BlockSpec((tm, D), lambda i, f: (i, 0)),     # x (also residual)
            _w_spec((D, tf), lambda i, f: (0, f), fb),
            pl.BlockSpec((1, tf), lambda i, f: (0, f)),
            _w_spec((tf, D), lambda i, f: (f, 0), fb),
            pl.BlockSpec((1, D), lambda i, f: (0, 0)),
            pl.BlockSpec((1, D), lambda i, f: (0, 0)),
            pl.BlockSpec((1, D), lambda i, f: (0, 0)),
        ],
        out_specs=pl.BlockSpec((tm, D), lambda i, f: (i, 0)),
        scratch_shapes=[pltpu.VMEM((tm, D), jnp.float32)],
        compiler_params=pltpu.CompilerParams(
            dimension_semantics=("parallel", "arbitrary"),
            vmem_limit_bytes=_VMEM_LIMIT),
        cost_estimate=cost,
    )(x2d, w1, b1, w2, b2, gamma, beta)


def flash_attention(q_pack, q_sel, kv_pack, k_sel, v_sel, kv_bias, n_head,
                    *, causal, tq=None, tkv=None):
    """Flash-style multi-head SDPA.

    q_pack:  (Sq, B, Lq, D) packed projections; the Q slab is q_pack[q_sel].
    kv_pack: (Sk, B, Lk, D) packed projections; K/V slabs are [k_sel]/[v_sel].
    kv_bias: (B, 1, Lk) additive key-padding bias (0 or -1e9), bf16.
    The causal mask is generated in-kernel (no dense mask streamed from HBM)."""
    _, B, Lq, D = q_pack.shape
    Lk = kv_pack.shape[2]
    tq = _pick_tile(Lq, tq or 256, 8)
    tkv = _pick_tile(Lk, tkv or 512, 128)
    dh = D // n_head
    scale = 1.0 / math.sqrt(dh)
    grid = (B, Lq // tq, Lk // tkv)
    kernel = functools.partial(_flash_attn_kernel, n_head=n_head, scale=scale,
                               causal=causal)
    cost = pl.CostEstimate(
        flops=4 * B * Lq * Lk * D,
        transcendentals=B * n_head * Lq * Lk,
        bytes_accessed=int((2 * B * Lq * D + 2 * B * Lk * D) * 2 + B * Lk * 2))
    return pl.pallas_call(
        kernel,
        out_shape=jax.ShapeDtypeStruct((B, Lq, D), COMPUTE_DTYPE),
        grid=grid,
        in_specs=[
            pl.BlockSpec((None, None, tq, D),
                         lambda b, qi, ki, s=q_sel: (s, b, qi, 0)),
            pl.BlockSpec((None, None, tkv, D),
                         lambda b, qi, ki, s=k_sel: (s, b, ki, 0)),
            pl.BlockSpec((None, None, tkv, D),
                         lambda b, qi, ki, s=v_sel: (s, b, ki, 0)),
            pl.BlockSpec((None, 1, tkv), lambda b, qi, ki: (b, 0, ki)),
        ],
        out_specs=pl.BlockSpec((None, tq, D), lambda b, qi, ki: (b, qi, 0)),
        scratch_shapes=[
            pltpu.VMEM((n_head, tq, 1), jnp.float32),    # running max
            pltpu.VMEM((n_head, tq, 1), jnp.float32),    # running denom
            pltpu.VMEM((n_head, tq, dh), jnp.float32),   # running output
        ],
        compiler_params=pltpu.CompilerParams(
            dimension_semantics=("parallel", "parallel", "arbitrary"),
            vmem_limit_bytes=_VMEM_LIMIT),
        cost_estimate=cost,
    )(q_pack, kv_pack, kv_pack, kv_bias)


# ------------------------------ decoder blocks ------------------------------

def self_attention_block(x, kv_bias, p, n_head, norm):
    B, L, D = x.shape
    x2 = x.reshape(B * L, D)
    qkv = packed_linear(x2, p["w_qkv"], p["b_qkv"])          # (3, B*L, D)
    qkv = qkv.reshape(3, B, L, D)                            # free reshape
    o = flash_attention(qkv, 0, qkv, 1, 2, kv_bias, n_head, causal=True)
    y = matmul_bias_residual_layernorm(o.reshape(B * L, D), p["wo"], p["bo"],
                                       x2, norm["g"], norm["b"])
    return y.reshape(B, L, D)


def cross_attention_block(x, enc2, Ls, kv_bias, p, n_head, norm):
    B, Lq, D = x.shape
    x2 = x.reshape(B * Lq, D)
    q = linear(x2, p["wq"], p["bq"]).reshape(1, B, Lq, D)    # free reshape
    kv = packed_linear(enc2, p["w_kv"], p["b_kv"]).reshape(2, B, Ls, D)
    o = flash_attention(q, 0, kv, 0, 1, kv_bias, n_head, causal=False)
    y = matmul_bias_residual_layernorm(o.reshape(B * Lq, D), p["wo"], p["bo"],
                                       x2, norm["g"], norm["b"])
    return y.reshape(B, Lq, D)


def ffn_block(x, p, norm):
    B, L, D = x.shape
    x2 = x.reshape(B * L, D)
    y = ffn_fused(x2, p["w1"], p["b1"], p["w2"], p["b2"], norm["g"], norm["b"])
    return y.reshape(B, L, D)


# ------------------------------ parameters ------------------------------

def _init_linear(key, fan_in, fan_out):
    kw, kb = jax.random.split(key)
    # pre-cast weights to bf16 once at init (no per-forward converts)
    w = (jax.random.normal(kw, (fan_in, fan_out), jnp.float32) * 0.02
         ).astype(COMPUTE_DTYPE)
    b = (jax.random.normal(kb, (fan_out,), jnp.float32) * 0.02
         ).reshape(1, fan_out)
    return w, b


def _init_ln(d_model):
    return dict(g=jnp.ones((1, d_model), jnp.float32),
                b=jnp.zeros((1, d_model), jnp.float32))


def _init_self_attn(key, d_model):
    ks = jax.random.split(key, 4)
    wq, bq = _init_linear(ks[0], d_model, d_model)
    wk, bk = _init_linear(ks[1], d_model, d_model)
    wv, bv = _init_linear(ks[2], d_model, d_model)
    wo, bo = _init_linear(ks[3], d_model, d_model)
    return dict(w_qkv=jnp.stack([wq, wk, wv], axis=0),      # (3, D, D) bf16
                b_qkv=jnp.stack([bq, bk, bv], axis=0),      # (3, 1, D) f32
                wo=wo, bo=bo)


def _init_cross_attn(key, d_model):
    ks = jax.random.split(key, 4)
    wq, bq = _init_linear(ks[0], d_model, d_model)
    wk, bk = _init_linear(ks[1], d_model, d_model)
    wv, bv = _init_linear(ks[2], d_model, d_model)
    wo, bo = _init_linear(ks[3], d_model, d_model)
    return dict(wq=wq, bq=bq,
                w_kv=jnp.stack([wk, wv], axis=0),           # (2, D, D)
                b_kv=jnp.stack([bk, bv], axis=0),           # (2, 1, D)
                wo=wo, bo=bo)


def init_decoder_params(key, vocab, max_len, d_model, ffn_hidden, n_layers):
    keys = jax.random.split(key, n_layers + 2)
    params = {}
    params["emb_table"] = jax.random.normal(
        keys[0], (vocab, d_model), jnp.float32) * 0.02

    # sinusoidal positional encoding (non-learned)
    pos = jnp.arange(max_len, dtype=jnp.float32)[:, None]
    i2 = jnp.arange(0, d_model, 2, dtype=jnp.float32)
    div = jnp.exp(-jnp.log(10000.0) * i2 / d_model)
    pe = jnp.zeros((max_len, d_model), jnp.float32)
    pe = pe.at[:, 0::2].set(jnp.sin(pos * div))
    pe = pe.at[:, 1::2].set(jnp.cos(pos * div))
    params["pos_enc"] = pe

    layers = []
    for l in range(n_layers):
        ks = jax.random.split(keys[1 + l], 3)
        w1, b1 = _init_linear(jax.random.fold_in(ks[2], 0), d_model, ffn_hidden)
        w2, b2 = _init_linear(jax.random.fold_in(ks[2], 1), ffn_hidden, d_model)
        layers.append(dict(
            self_attn=_init_self_attn(ks[0], d_model),
            norm1=_init_ln(d_model),
            cross_attn=_init_cross_attn(ks[1], d_model),
            norm2=_init_ln(d_model),
            ffn=dict(w1=w1, b1=b1, w2=w2, b2=b2),
            norm3=_init_ln(d_model),
        ))
    params["layers"] = layers

    # vocab projection padded to a multiple of 128 lanes -> lane-dense stores
    w_out, b_out = _init_linear(keys[-1], d_model, vocab)
    v_pad = (-vocab) % 128
    if v_pad:
        w_out = jnp.pad(w_out, ((0, 0), (0, v_pad)))
        b_out = jnp.pad(b_out, ((0, 0), (0, v_pad)))
    params["w_out"], params["b_out"] = w_out, b_out
    return params


# ------------------------------ decoder forward ------------------------------

def _key_padding_bias(mask4, B, Lk):
    """Reduce a (B,1,*,Lk) keep-mask to an additive (B,1,Lk) key-padding bias.

    For the usual constructions (padding mask, or padding & causal) the last
    query row of the mask equals the key-padding mask; the causal component is
    regenerated inside the attention kernel from iota.
    TODO(synk): arbitrary dense (B,Lq,Lk) masks are not streamed; add an
    additive bf16 mask input if such masks are required."""
    m4 = jnp.broadcast_to(mask4.astype(jnp.float32),
                          (B, 1, mask4.shape[2], Lk))
    m = m4[:, 0, -1, :]                                       # (B, Lk)
    bias = jnp.where(m > 0, 0.0, NEG_INF).astype(COMPUTE_DTYPE)
    return bias.reshape(B, 1, Lk)


def decoder_forward(params, trg_ids, enc_src, trg_mask, src_mask, n_head,
                    vocab_size):
    B, Lt = trg_ids.shape
    Ls = enc_src.shape[1]
    D = params["emb_table"].shape[1]

    # InputEmbedding: token gather + sinusoidal positions (dropout = identity).
    # TODO(synk): embedding gather stays in JAX (jnp.take) — no Pallas gather.
    x = jnp.take(params["emb_table"], trg_ids, axis=0) \
        + params["pos_enc"][:Lt][None, :, :]
    x = x.astype(COMPUTE_DTYPE)
    enc2 = enc_src.astype(COMPUTE_DTYPE).reshape(B * Ls, D)

    trg_bias = _key_padding_bias(trg_mask, B, Lt)   # causal part made in-kernel
    src_bias = _key_padding_bias(src_mask, B, Ls)

    for lp in params["layers"]:
        x = self_attention_block(x, trg_bias, lp["self_attn"], n_head,
                                 lp["norm1"])
        x = cross_attention_block(x, enc2, Ls, src_bias, lp["cross_attn"],
                                  n_head, lp["norm2"])
        x = ffn_block(x, lp["ffn"], lp["norm3"])

    logits = linear(x.reshape(B * Lt, D), params["w_out"], params["b_out"],
                    out_dtype=jnp.float32)
    return logits.reshape(B, Lt, -1)[..., :vocab_size]


# ------------------------------ main ------------------------------

if __name__ == "__main__":
    dec_voc_size = 50
    max_len = 16
    d_model = 32
    ffn_hidden = 64
    n_head = 4
    n_layers = 2

    B, Lt, Ls = 2, 8, 8

    root = jax.random.PRNGKey(0)
    k_par, k_trg, k_enc = jax.random.split(root, 3)

    params = init_decoder_params(k_par, dec_voc_size, max_len, d_model,
                                 ffn_hidden, n_layers)

    trg = jax.random.randint(k_trg, (B, Lt), 0, dec_voc_size, dtype=jnp.int32)
    enc_src = jax.random.normal(k_enc, (B, Ls, d_model), jnp.float32)

    # causal target mask (B, 1, Lt, Lt); full source mask (B, 1, 1, Ls)
    trg_mask = jnp.broadcast_to(
        jnp.tril(jnp.ones((Lt, Lt), jnp.float32))[None, None], (B, 1, Lt, Lt))
    src_mask = jnp.ones((B, 1, 1, Ls), jnp.float32)

    fwd = jax.jit(decoder_forward, static_argnums=(5, 6))
    out = fwd(params, trg, enc_src, trg_mask, src_mask, n_head, dec_voc_size)
    out = jax.block_until_ready(out)
    assert out.shape == (B, Lt, dec_voc_size), out.shape
    assert bool(jnp.all(jnp.isfinite(out)))
    print("KERNEL_OK")
</pallas_src>

<mosaic_0001>
module attributes {stable_mosaic.version = 11 : i64} {
  func.func @_matmul_bias_kernel(%arg0: i32, %arg1: i32, %arg2: i32, %arg3: i32, %arg4: memref<16x32xbf16, #tpu.memory_space<vmem>>, %arg5: memref<1x32x32xbf16, #tpu.memory_space<vmem>>, %arg6: memref<1x1x32xf32, #tpu.memory_space<vmem>>, %arg7: memref<1x16x32xbf16, #tpu.memory_space<vmem>>, %arg8: memref<16x32xf32, #tpu.memory_space<vmem>>) attributes {dimension_semantics = [#tpu.dimension_semantics<parallel>, #tpu.dimension_semantics<parallel>, #tpu.dimension_semantics<parallel>, #tpu.dimension_semantics<arbitrary>], iteration_bounds = array<i64: 3, 1, 1, 1>, scalar_prefetch = 0 : i64, scratch_operands = 1 : i64, tpu.core_type = #tpu.core_type<tc>, window_params = [{transform_indices = @transform_0, window_bounds = array<i64: 16, 32>}, {transform_indices = @transform_1, window_bounds = array<i64: 1, 32, 32>}, {transform_indices = @transform_2, window_bounds = array<i64: 1, 1, 32>}, {transform_indices = @transform_3, window_bounds = array<i64: 1, 16, 32>}]} {
    %c0_i32 = arith.constant 0 : i32
    %0 = arith.cmpi eq, %arg3, %c0_i32 : i32
    %1 = arith.extui %0 : i1 to i32
    %c0_i32_0 = arith.constant 0 : i32
    %2 = arith.cmpi ne, %1, %c0_i32_0 : i32
    scf.if %2 {
      %cst_11 = arith.constant 0.000000e+00 : f32
      %13 = vector.broadcast %cst_11 : f32 to vector<16x32xf32>
      %c0_12 = arith.constant 0 : index
      %c0_13 = arith.constant 0 : index
      %14 = vector.load %arg8[%c0_12, %c0_13] : memref<16x32xf32, #tpu.memory_space<vmem>>, vector<16x32xf32>
      tpu.vector_store %arg8[%c0_12, %c0_13], %13 {strides = array<i32>} : memref<16x32xf32, #tpu.memory_space<vmem>>, vector<16x32xf32>,
    } else {
    }
    %c0 = arith.constant 0 : index
    %c0_1 = arith.constant 0 : index
    %3 = vector.load %arg8[%c0, %c0_1] : memref<16x32xf32, #tpu.memory_space<vmem>>, vector<16x32xf32>
    %c0_2 = arith.constant 0 : index
    %c0_3 = arith.constant 0 : index
    %4 = vector.load %arg4[%c0_2, %c0_3] : memref<16x32xbf16, #tpu.memory_space<vmem>>, vector<16x32xbf16>
    %c0_4 = arith.constant 0 : index
    %c0_5 = arith.constant 0 : index
    %c0_6 = arith.constant 0 : index
    %5 = vector.load %arg5[%c0_4, %c0_5, %c0_6] : memref<1x32x32xbf16, #tpu.memory_space<vmem>>, vector<1x32x32xbf16>
    %6 = vector.shape_cast %5 : vector<1x32x32xbf16> to vector<32x32xbf16>
    %cst = arith.constant dense<0.000000e+00> : vector<16x32xf32>
    %7 = tpu.matmul %4, %6, %cst {dimension_numbers = #tpu.dot_dimension_numbers<[1], [0], [0], [1], [0, 0, 1, 1], [], []>} : vector<16x32xbf16>, vector<32x32xbf16>, vector<16x32xf32> -> vector<16x32xf32>
    %8 = arith.addf %3, %7 : vector<16x32xf32>
    %c0_7 = arith.constant 0 : index
    %c0_8 = arith.constant 0 : index
    %9 = vector.load %arg8[%c0_7, %c0_8] : memref<16x32xf32, #tpu.memory_space<vmem>>, vector<16x32xf32>
    tpu.vector_store %arg8[%c0_7, %c0_8], %8 {strides = array<i32>} : memref<16x32xf32, #tpu.memory_space<vmem>>, vector<16x32xf32>,
    %c0_i32_9 = arith.constant 0 : i32
    %10 = arith.cmpi eq, %arg3, %c0_i32_9 : i32
    %11 = arith.extui %10 : i1 to i32
    %c0_i32_10 = arith.constant 0 : i32
    %12 = arith.cmpi ne, %11, %c0_i32_10 : i32
    scf.if %12 {
      %c0_11 = arith.constant 0 : index
      %c0_12 = arith.constant 0 : index
      %13 = vector.load %arg8[%c0_11, %c0_12] : memref<16x32xf32, #tpu.memory_space<vmem>>, vector<16x32xf32>
      %c0_13 = arith.constant 0 : index
      %c0_14 = arith.constant 0 : index
      %c0_15 = arith.constant 0 : index
      %14 = vector.load %arg6[%c0_13, %c0_14, %c0_15] : memref<1x1x32xf32, #tpu.memory_space<vmem>>, vector<1x1x32xf32>
      %15 = vector.shape_cast %14 : vector<1x1x32xf32> to vector<1x32xf32>
      %16 = vector.broadcast %15 : vector<1x32xf32> to vector<16x32xf32>
      %17 = arith.addf %13, %16 : vector<16x32xf32>
      %18 = arith.truncf %17 : vector<16x32xf32> to vector<16x32xbf16>
      %c0_16 = arith.constant 0 : index
      %c0_17 = arith.constant 0 : index
      %c0_18 = arith.constant 0 : index
      %19 = vector.load %arg7[%c0_16, %c0_17, %c0_18] : memref<1x16x32xbf16, #tpu.memory_space<vmem>>, vector<1x16x32xbf16>
      %20 = vector.shape_cast %19 : vector<1x16x32xbf16> to vector<16x32xbf16>
      %21 = vector.shape_cast %18 : vector<16x32xbf16> to vector<1x16x32xbf16>
      tpu.vector_store %arg7[%c0_16, %c0_17, %c0_18], %21 {strides = array<i32>} : memref<1x16x32xbf16, #tpu.memory_space<vmem>>, vector<1x16x32xbf16>,
    } else {
    }
    return
  }
  func.func @transform_0(%arg0: i32, %arg1: i32, %arg2: i32, %arg3: i32) -> (i32, i32) {
    %c0_i32 = arith.constant 0 : i32
    return %arg1, %arg3 : i32, i32
  }
  func.func @transform_1(%arg0: i32, %arg1: i32, %arg2: i32, %arg3: i32) -> (i32, i32, i32) {
    %c0_i32 = arith.constant 0 : i32
    return %arg0, %arg3, %arg2 : i32, i32, i32
  }
  func.func @transform_2(%arg0: i32, %arg1: i32, %arg2: i32, %arg3: i32) -> (i32, i32, i32) {
    %c0_i32 = arith.constant 0 : i32
    %c0_i32_0 = arith.constant 0 : i32
    return %arg0, %c0_i32, %arg2 : i32, i32, i32
  }
  func.func @transform_3(%arg0: i32, %arg1: i32, %arg2: i32, %arg3: i32) -> (i32, i32, i32) {
    %c0_i32 = arith.constant 0 : i32
    return %arg0, %arg1, %arg2 : i32, i32, i32
  }
}

module attributes {stable_mosaic.version = 11 : i64} {
  func.func @_matmul_bias_kernel(%arg0: i32, %arg1: i32, %arg2: i32, %arg3: memref<16x32xbf16, #tpu.memory_space<vmem>>, %arg4: memref<32x32xbf16, #tpu.memory_space<vmem>>, %arg5: memref<1x32xf32, #tpu.memory_space<vmem>>, %arg6: memref<16x32xbf16, #tpu.memory_space<vmem>>, %arg7: memref<16x32xf32, #tpu.memory_space<vmem>>) attributes {dimension_semantics = [#tpu.dimension_semantics<parallel>, #tpu.dimension_semantics<parallel>, #tpu.dimension_semantics<arbitrary>], iteration_bounds = array<i64: 1, 1, 1>, scalar_prefetch = 0 : i64, scratch_operands = 1 : i64, tpu.core_type = #tpu.core_type<tc>, window_params = [{transform_indices = @transform_0, window_bounds = array<i64: 16, 32>}, {transform_indices = @transform_1, window_bounds = array<i64: 32, 32>}, {transform_indices = @transform_2, window_bounds = array<i64: 1, 32>}, {transform_indices = @transform_3, window_bounds = array<i64: 16, 32>}]} {
    %c0_i32 = arith.constant 0 : i32
    %0 = arith.cmpi eq, %arg2, %c0_i32 : i32
    %1 = arith.extui %0 : i1 to i32
    %c0_i32_0 = arith.constant 0 : i32
    %2 = arith.cmpi ne, %1, %c0_i32_0 : i32
    scf.if %2 {
      %cst_10 = arith.constant 0.000000e+00 : f32
      %12 = vector.broadcast %cst_10 : f32 to vector<16x32xf32>
      %c0_11 = arith.constant 0 : index
      %c0_12 = arith.constant 0 : index
      %13 = vector.load %arg7[%c0_11, %c0_12] : memref<16x32xf32, #tpu.memory_space<vmem>>, vector<16x32xf32>
      tpu.vector_store %arg7[%c0_11, %c0_12], %12 {strides = array<i32>} : memref<16x32xf32, #tpu.memory_space<vmem>>, vector<16x32xf32>,
    } else {
    }
    %c0 = arith.constant 0 : index
    %c0_1 = arith.constant 0 : index
    %3 = vector.load %arg7[%c0, %c0_1] : memref<16x32xf32, #tpu.memory_space<vmem>>, vector<16x32xf32>
    %c0_2 = arith.constant 0 : index
    %c0_3 = arith.constant 0 : index
    %4 = vector.load %arg3[%c0_2, %c0_3] : memref<16x32xbf16, #tpu.memory_space<vmem>>, vector<16x32xbf16>
    %c0_4 = arith.constant 0 : index
    %c0_5 = arith.constant 0 : index
    %5 = vector.load %arg4[%c0_4, %c0_5] : memref<32x32xbf16, #tpu.memory_space<vmem>>, vector<32x32xbf16>
    %cst = arith.constant dense<0.000000e+00> : vector<16x32xf32>
    %6 = tpu.matmul %4, %5, %cst {dimension_numbers = #tpu.dot_dimension_numbers<[1], [0], [0], [1], [0, 0, 1, 1], [], []>} : vector<16x32xbf16>, vector<32x32xbf16>, vector<16x32xf32> -> vector<16x32xf32>
    %7 = arith.addf %3, %6 : vector<16x32xf32>
    %c0_6 = arith.constant 0 : index
    %c0_7 = arith.constant 0 : index
    %8 = vector.load %arg7[%c0_6, %c0_7] : memref<16x32xf32, #tpu.memory_space<vmem>>, vector<16x32xf32>
    tpu.vector_store %arg7[%c0_6, %c0_7], %7 {strides = array<i32>} : memref<16x32xf32, #tpu.memory_space<vmem>>, vector<16x32xf32>,
    %c0_i32_8 = arith.constant 0 : i32
    %9 = arith.cmpi eq, %arg2, %c0_i32_8 : i32
    %10 = arith.extui %9 : i1 to i32
    %c0_i32_9 = arith.constant 0 : i32
    %11 = arith.cmpi ne, %10, %c0_i32_9 : i32
    scf.if %11 {
      %c0_10 = arith.constant 0 : index
      %c0_11 = arith.constant 0 : index
      %12 = vector.load %arg7[%c0_10, %c0_11] : memref<16x32xf32, #tpu.memory_space<vmem>>, vector<16x32xf32>
      %c0_12 = arith.constant 0 : index
      %c0_13 = arith.constant 0 : index
      %13 = vector.load %arg5[%c0_12, %c0_13] : memref<1x32xf32, #tpu.memory_space<vmem>>, vector<1x32xf32>
      %14 = vector.broadcast %13 : vector<1x32xf32> to vector<16x32xf32>
      %15 = arith.addf %12, %14 : vector<16x32xf32>
      %16 = arith.truncf %15 : vector<16x32xf32> to vector<16x32xbf16>
      %c0_14 = arith.constant 0 : index
      %c0_15 = arith.constant 0 : index
      %17 = vector.load %arg6[%c0_14, %c0_15] : memref<16x32xbf16, #tpu.memory_space<vmem>>, vector<16x32xbf16>
      tpu.vector_store %arg6[%c0_14, %c0_15], %16 {strides = array<i32>} : memref<16x32xbf16, #tpu.memory_space<vmem>>, vector<16x32xbf16>,
    } else {
    }
    return
  }
  func.func @transform_0(%arg0: i32, %arg1: i32, %arg2: i32) -> (i32, i32) {
    %c0_i32 = arith.constant 0 : i32
    return %arg0, %arg2 : i32, i32
  }
  func.func @transform_1(%arg0: i32, %arg1: i32, %arg2: i32) -> (i32, i32) {
    %c0_i32 = arith.constant 0 : i32
    return %arg2, %arg1 : i32, i32
  }
  func.func @transform_2(%arg0: i32, %arg1: i32, %arg2: i32) -> (i32, i32) {
    %c0_i32 = arith.constant 0 : i32
    %c0_i32_0 = arith.constant 0 : i32
    return %c0_i32, %arg1 : i32, i32
  }
  func.func @transform_3(%arg0: i32, %arg1: i32, %arg2: i32) -> (i32, i32) {
    %c0_i32 = arith.constant 0 : i32
    return %arg0, %arg1 : i32, i32
  }
}

module attributes {stable_mosaic.version = 11 : i64} {
  func.func @_matmul_bias_res_ln_kernel(%arg0: i32, %arg1: i32, %arg2: memref<16x32xbf16, #tpu.memory_space<vmem>>, %arg3: memref<32x32xbf16, #tpu.memory_space<vmem>>, %arg4: memref<1x32xf32, #tpu.memory_space<vmem>>, %arg5: memref<16x32xbf16, #tpu.memory_space<vmem>>, %arg6: memref<1x32xf32, #tpu.memory_space<vmem>>, %arg7: memref<1x32xf32, #tpu.memory_space<vmem>>, %arg8: memref<16x32xbf16, #tpu.memory_space<vmem>>, %arg9: memref<16x32xf32, #tpu.memory_space<vmem>>) attributes {dimension_semantics = [#tpu.dimension_semantics<parallel>, #tpu.dimension_semantics<arbitrary>], iteration_bounds = array<i64: 1, 1>, scalar_prefetch = 0 : i64, scratch_operands = 1 : i64, tpu.core_type = #tpu.core_type<tc>, window_params = [{transform_indices = @transform_0, window_bounds = array<i64: 16, 32>}, {transform_indices = @transform_1, window_bounds = array<i64: 32, 32>}, {pipeline_mode = #tpu.pipeline_mode<synchronous>, transform_indices = @transform_2, window_bounds = array<i64: 1, 32>}, {transform_indices = @transform_3, window_bounds = array<i64: 16, 32>}, {pipeline_mode = #tpu.pipeline_mode<synchronous>, transform_indices = @transform_4, window_bounds = array<i64: 1, 32>}, {pipeline_mode = #tpu.pipeline_mode<synchronous>, transform_indices = @transform_5, window_bounds = array<i64: 1, 32>}, {transform_indices = @transform_6, window_bounds = array<i64: 16, 32>}]} {
    %c0_i32 = arith.constant 0 : i32
    %0 = arith.cmpi eq, %arg1, %c0_i32 : i32
    %1 = arith.extui %0 : i1 to i32
    %c0_i32_0 = arith.constant 0 : i32
    %2 = arith.cmpi ne, %1, %c0_i32_0 : i32
    scf.if %2 {
      %cst_10 = arith.constant 0.000000e+00 : f32
      %12 = vector.broadcast %cst_10 : f32 to vector<16x32xf32>
      %c0_11 = arith.constant 0 : index
      %c0_12 = arith.constant 0 : index
      %13 = vector.load %arg9[%c0_11, %c0_12] : memref<16x32xf32, #tpu.memory_space<vmem>>, vector<16x32xf32>
      tpu.vector_store %arg9[%c0_11, %c0_12], %12 {strides = array<i32>} : memref<16x32xf32, #tpu.memory_space<vmem>>, vector<16x32xf32>,
    } else {
    }
    %c0 = arith.constant 0 : index
    %c0_1 = arith.constant 0 : index
    %3 = vector.load %arg9[%c0, %c0_1] : memref<16x32xf32, #tpu.memory_space<vmem>>, vector<16x32xf32>
    %c0_2 = arith.constant 0 : index
    %c0_3 = arith.constant 0 : index
    %4 = vector.load %arg2[%c0_2, %c0_3] : memref<16x32xbf16, #tpu.memory_space<vmem>>, vector<16x32xbf16>
    %c0_4 = arith.constant 0 : index
    %c0_5 = arith.constant 0 : index
    %5 = vector.load %arg3[%c0_4, %c0_5] : memref<32x32xbf16, #tpu.memory_space<vmem>>, vector<32x32xbf16>
    %cst = arith.constant dense<0.000000e+00> : vector<16x32xf32>
    %6 = tpu.matmul %4, %5, %cst {dimension_numbers = #tpu.dot_dimension_numbers<[1], [0], [0], [1], [0, 0, 1, 1], [], []>} : vector<16x32xbf16>, vector<32x32xbf16>, vector<16x32xf32> -> vector<16x32xf32>
    %7 = arith.addf %3, %6 : vector<16x32xf32>
    %c0_6 = arith.constant 0 : index
    %c0_7 = arith.constant 0 : index
    %8 = vector.load %arg9[%c0_6, %c0_7] : memref<16x32xf32, #tpu.memory_space<vmem>>, vector<16x32xf32>
    tpu.vector_store %arg9[%c0_6, %c0_7], %7 {strides = array<i32>} : memref<16x32xf32, #tpu.memory_space<vmem>>, vector<16x32xf32>,
    %c0_i32_8 = arith.constant 0 : i32
    %9 = arith.cmpi eq, %arg1, %c0_i32_8 : i32
    %10 = arith.extui %9 : i1 to i32
    %c0_i32_9 = arith.constant 0 : i32
    %11 = arith.cmpi ne, %10, %c0_i32_9 : i32
    scf.if %11 {
      %c0_10 = arith.constant 0 : index
      %c0_11 = arith.constant 0 : index
      %12 = vector.load %arg9[%c0_10, %c0_11] : memref<16x32xf32, #tpu.memory_space<vmem>>, vector<16x32xf32>
      %c0_12 = arith.constant 0 : index
      %c0_13 = arith.constant 0 : index
      %13 = vector.load %arg4[%c0_12, %c0_13] : memref<1x32xf32, #tpu.memory_space<vmem>>, vector<1x32xf32>
      %14 = vector.broadcast %13 : vector<1x32xf32> to vector<16x32xf32>
      %15 = arith.addf %12, %14 : vector<16x32xf32>
      %c0_14 = arith.constant 0 : index
      %c0_15 = arith.constant 0 : index
      %16 = vector.load %arg5[%c0_14, %c0_15] : memref<16x32xbf16, #tpu.memory_space<vmem>>, vector<16x32xbf16>
      %17 = arith.extf %16 : vector<16x32xbf16> to vector<16x32xf32>
      %18 = arith.addf %15, %17 : vector<16x32xf32>
      %cst_16 = arith.constant dense<0.000000e+00> : vector<16xf32>
      %19 = vector.multi_reduction <add>, %18, %cst_16 [1] : vector<16x32xf32> to vector<16xf32>
      %20 = vector.shape_cast %19 : vector<16xf32> to vector<16x1xf32>
      %cst_17 = arith.constant 3.200000e+01 : f32
      %21 = vector.broadcast %cst_17 : f32 to vector<16x1xf32>
      %22 = arith.divf %20, %21 : vector<16x1xf32>
      %23 = vector.broadcast %22 : vector<16x1xf32> to vector<16x32xf32>
      %24 = arith.subf %18, %23 : vector<16x32xf32>
      %25 = vector.broadcast %22 : vector<16x1xf32> to vector<16x32xf32>
      %26 = arith.subf %18, %25 : vector<16x32xf32>
      %27 = arith.mulf %24, %26 : vector<16x32xf32>
      %cst_18 = arith.constant dense<0.000000e+00> : vector<16xf32>
      %28 = vector.multi_reduction <add>, %27, %cst_18 [1] : vector<16x32xf32> to vector<16xf32>
      %29 = vector.shape_cast %28 : vector<16xf32> to vector<16x1xf32>
      %cst_19 = arith.constant 3.200000e+01 : f32
      %30 = vector.broadcast %cst_19 : f32 to vector<16x1xf32>
      %31 = arith.divf %29, %30 : vector<16x1xf32>
      %32 = vector.broadcast %22 : vector<16x1xf32> to vector<16x32xf32>
      %33 = arith.subf %18, %32 : vector<16x32xf32>
      %cst_20 = arith.constant 9.99999974E-6 : f32
      %34 = vector.broadcast %cst_20 : f32 to vector<16x1xf32>
      %35 = arith.addf %31, %34 : vector<16x1xf32>
      %36 = math.rsqrt %35 : vector<16x1xf32>
      %37 = vector.broadcast %36 : vector<16x1xf32> to vector<16x32xf32>
      %38 = arith.mulf %33, %37 : vector<16x32xf32>
      %c0_21 = arith.constant 0 : index
      %c0_22 = arith.constant 0 : index
      %39 = vector.load %arg6[%c0_21, %c0_22] : memref<1x32xf32, #tpu.memory_space<vmem>>, vector<1x32xf32>
      %40 = vector.broadcast %39 : vector<1x32xf32> to vector<16x32xf32>
      %41 = arith.mulf %38, %40 : vector<16x32xf32>
      %c0_23 = arith.constant 0 : index
      %c0_24 = arith.constant 0 : index
      %42 = vector.load %arg7[%c0_23, %c0_24] : memref<1x32xf32, #tpu.memory_space<vmem>>, vector<1x32xf32>
      %43 = vector.broadcast %42 : vector<1x32xf32> to vector<16x32xf32>
      %44 = arith.addf %41, %43 : vector<16x32xf32>
      %45 = arith.truncf %44 : vector<16x32xf32> to vector<16x32xbf16>
      %c0_25 = arith.constant 0 : index
      %c0_26 = arith.constant 0 : index
      %46 = vector.load %arg8[%c0_25, %c0_26] : memref<16x32xbf16, #tpu.memory_space<vmem>>, vector<16x32xbf16>
      tpu.vector_store %arg8[%c0_25, %c0_26], %45 {strides = array<i32>} : memref<16x32xbf16, #tpu.memory_space<vmem>>, vector<16x32xbf16>,
    } else {
    }
    return
  }
  func.func @transform_0(%arg0: i32, %arg1: i32) -> (i32, i32) {
    %c0_i32 = arith.constant 0 : i32
    return %arg0, %arg1 : i32, i32
  }
  func.func @transform_1(%arg0: i32, %arg1: i32) -> (i32, i32) {
    %c0_i32 = arith.constant 0 : i32
    %c0_i32_0 = arith.constant 0 : i32
    return %arg1, %c0_i32 : i32, i32
  }
  func.func @transform_2(%arg0: i32, %arg1: i32) -> (i32, i32) {
    %c0_i32 = arith.constant 0 : i32
    %c0_i32_0 = arith.constant 0 : i32
    %c0_i32_1 = arith.constant 0 : i32
    return %c0_i32, %c0_i32_0 : i32, i32
  }
  func.func @transform_3(%arg0: i32, %arg1: i32) -> (i32, i32) {
    %c0_i32 = arith.constant 0 : i32
    %c0_i32_0 = arith.constant 0 : i32
    return %arg0, %c0_i32 : i32, i32
  }
  func.func @transform_4(%arg0: i32, %arg1: i32) -> (i32, i32) {
    %c0_i32 = arith.constant 0 : i32
    %c0_i32_0 = arith.constant 0 : i32
    %c0_i32_1 = arith.constant 0 : i32
    return %c0_i32, %c0_i32_0 : i32, i32
  }
  func.func @transform_5(%arg0: i32, %arg1: i32) -> (i32, i32) {
    %c0_i32 = arith.constant 0 : i32
    %c0_i32_0 = arith.constant 0 : i32
    %c0_i32_1 = arith.constant 0 : i32
    return %c0_i32, %c0_i32_0 : i32, i32
  }
  func.func @transform_6(%arg0: i32, %arg1: i32) -> (i32, i32) {
    %c0_i32 = arith.constant 0 : i32
    %c0_i32_0 = arith.constant 0 : i32
    return %arg0, %c0_i32 : i32, i32
  }
}

module attributes {stable_mosaic.version = 11 : i64} {
  func.func @_flash_attn_kernel(%arg0: i32, %arg1: i32, %arg2: i32, %arg3: memref<1x1x8x32xbf16, #tpu.memory_space<vmem>>, %arg4: memref<1x1x8x32xbf16, #tpu.memory_space<vmem>>, %arg5: memref<1x1x8x32xbf16, #tpu.memory_space<vmem>>, %arg6: memref<1x1x8xbf16, #tpu.memory_space<vmem>>, %arg7: memref<1x8x32xbf16, #tpu.memory_space<vmem>>, %arg8: memref<4x8x1xf32, #tpu.memory_space<vmem>>, %arg9: memref<4x8x1xf32, #tpu.memory_space<vmem>>, %arg10: memref<4x8x8xf32, #tpu.memory_space<vmem>>) attributes {dimension_semantics = [#tpu.dimension_semantics<parallel>, #tpu.dimension_semantics<parallel>, #tpu.dimension_semantics<arbitrary>], iteration_bounds = array<i64: 2, 1, 1>, scalar_prefetch = 0 : i64, scratch_operands = 3 : i64, tpu.core_type = #tpu.core_type<tc>, window_params = [{transform_indices = @transform_0, window_bounds = array<i64: 1, 1, 8, 32>}, {transform_indices = @transform_1, window_bounds = array<i64: 1, 1, 8, 32>}, {transform_indices = @transform_2, window_bounds = array<i64: 1, 1, 8, 32>}, {transform_indices = @transform_3, window_bounds = array<i64: 1, 1, 8>}, {transform_indices = @transform_4, window_bounds = array<i64: 1, 8, 32>}]} {
    %c0_i32 = arith.constant 0 : i32
    %0 = arith.cmpi eq, %arg2, %c0_i32 : i32
    %1 = arith.extui %0 : i1 to i32
    %c0_i32_0 = arith.constant 0 : i32
    %2 = arith.cmpi ne, %1, %c0_i32_0 : i32
    scf.if %2 {
      %cst_107 = arith.constant 0xFF800000 : f32
      %184 = vector.broadcast %cst_107 : f32 to vector<4x8x1xf32>
      %c0_108 = arith.constant 0 : index
      %c0_109 = arith.constant 0 : index
      %c0_110 = arith.constant 0 : index
      %185 = vector.load %arg8[%c0_108, %c0_109, %c0_110] : memref<4x8x1xf32, #tpu.memory_space<vmem>>, vector<4x8x1xf32>
      tpu.vector_store %arg8[%c0_108, %c0_109, %c0_110], %184 {strides = array<i32>} : memref<4x8x1xf32, #tpu.memory_space<vmem>>, vector<4x8x1xf32>,
      %cst_111 = arith.constant 0.000000e+00 : f32
      %186 = vector.broadcast %cst_111 : f32 to vector<4x8x1xf32>
      %c0_112 = arith.constant 0 : index
      %c0_113 = arith.constant 0 : index
      %c0_114 = arith.constant 0 : index
      %187 = vector.load %arg9[%c0_112, %c0_113, %c0_114] : memref<4x8x1xf32, #tpu.memory_space<vmem>>, vector<4x8x1xf32>
      tpu.vector_store %arg9[%c0_112, %c0_113, %c0_114], %186 {strides = array<i32>} : memref<4x8x1xf32, #tpu.memory_space<vmem>>, vector<4x8x1xf32>,
      %cst_115 = arith.constant 0.000000e+00 : f32
      %188 = vector.broadcast %cst_115 : f32 to vector<4x8x8xf32>
      %c0_116 = arith.constant 0 : index
      %c0_117 = arith.constant 0 : index
      %c0_118 = arith.constant 0 : index
      %189 = vector.load %arg10[%c0_116, %c0_117, %c0_118] : memref<4x8x8xf32, #tpu.memory_space<vmem>>, vector<4x8x8xf32>
      tpu.vector_store %arg10[%c0_116, %c0_117, %c0_118], %188 {strides = array<i32>} : memref<4x8x8xf32, #tpu.memory_space<vmem>>, vector<4x8x8xf32>,
    } else {
    }
    %c0 = arith.constant 0 : index
    %c0_1 = arith.constant 0 : index
    %c0_2 = arith.constant 0 : index
    %c0_3 = arith.constant 0 : index
    %3 = vector.load %arg3[%c0, %c0_1, %c0_2, %c0_3] : memref<1x1x8x32xbf16, #tpu.memory_space<vmem>>, vector<1x1x8x32xbf16>
    %4 = vector.shape_cast %3 : vector<1x1x8x32xbf16> to vector<8x32xbf16>
    %c0_4 = arith.constant 0 : index
    %c0_5 = arith.constant 0 : index
    %c0_6 = arith.constant 0 : index
    %c0_7 = arith.constant 0 : index
    %5 = vector.load %arg4[%c0_4, %c0_5, %c0_6, %c0_7] : memref<1x1x8x32xbf16, #tpu.memory_space<vmem>>, vector<1x1x8x32xbf16>
    %6 = vector.shape_cast %5 : vector<1x1x8x32xbf16> to vector<8x32xbf16>
    %c0_8 = arith.constant 0 : index
    %c0_9 = arith.constant 0 : index
    %c0_10 = arith.constant 0 : index
    %c0_11 = arith.constant 0 : index
    %7 = vector.load %arg5[%c0_8, %c0_9, %c0_10, %c0_11] : memref<1x1x8x32xbf16, #tpu.memory_space<vmem>>, vector<1x1x8x32xbf16>
    %8 = vector.shape_cast %7 : vector<1x1x8x32xbf16> to vector<8x32xbf16>
    %c0_12 = arith.constant 0 : index
    %c0_13 = arith.constant 0 : index
    %c0_14 = arith.constant 0 : index
    %9 = vector.load %arg6[%c0_12, %c0_13, %c0_14] : memref<1x1x8xbf16, #tpu.memory_space<vmem>>, vector<1x1x8xbf16>
    %10 = vector.shape_cast %9 : vector<1x1x8xbf16> to vector<1x8xbf16>
    %11 = arith.extf %10 : vector<1x8xbf16> to vector<1x8xf32>
    %c8_i32 = arith.constant 8 : i32
    %12 = arith.muli %arg1, %c8_i32 : i32
    %13 = tpu.iota {dimensions = array<i32: 0>} : vector<8x8xi32>
    %14 = vector.broadcast %12 : i32 to vector<8x8xi32>
    %15 = arith.addi %14, %13 : vector<8x8xi32>
    %c8_i32_15 = arith.constant 8 : i32
    %16 = arith.muli %arg2, %c8_i32_15 : i32
    %17 = tpu.iota {dimensions = array<i32: 1>} : vector<8x8xi32>
    %18 = vector.broadcast %16 : i32 to vector<8x8xi32>
    %19 = arith.addi %18, %17 : vector<8x8xi32>
    %20 = arith.cmpi sle, %19, %15 : vector<8x8xi32>
    %cst = arith.constant -1.000000e+09 : f32
    %21 = vector.shape_cast %11 : vector<1x8xf32> to vector<1x8xf32>
    %22 = vector.broadcast %21 : vector<1x8xf32> to vector<8x8xf32>
    %23 = vector.broadcast %cst : f32 to vector<8x8xf32>
    %24 = arith.select %20, %22, %23 : vector<8x8xi1>, vector<8x8xf32>
    %25 = vector.extract_strided_slice %4 {offsets = [0, 0], sizes = [8, 8], strides = [1, 1]} : vector<8x32xbf16> to vector<8x8xbf16>
    %26 = vector.extract_strided_slice %6 {offsets = [0, 0], sizes = [8, 8], strides = [1, 1]} : vector<8x32xbf16> to vector<8x8xbf16>
    %27 = vector.extract_strided_slice %8 {offsets = [0, 0], sizes = [8, 8], strides = [1, 1]} : vector<8x32xbf16> to vector<8x8xbf16>
    %cst_16 = arith.constant dense<0.000000e+00> : vector<8x8xf32>
    %28 = tpu.matmul %25, %26, %cst_16 {dimension_numbers = #tpu.dot_dimension_numbers<[1], [1], [0], [0], [0, 0, 1, 0], [], []>} : vector<8x8xbf16>, vector<8x8xbf16>, vector<8x8xf32> -> vector<8x8xf32>
    %cst_17 = arith.constant 0.353553385 : f32
    %29 = vector.broadcast %cst_17 : f32 to vector<8x8xf32>
    %30 = arith.mulf %28, %29 : vector<8x8xf32>
    %31 = arith.addf %30, %24 : vector<8x8xf32>
    %c0_18 = arith.constant 0 : index
    %c0_19 = arith.constant 0 : index
    %c0_20 = arith.constant 0 : index
    %32 = vector.load %arg8[%c0_18, %c0_19, %c0_20] : memref<4x8x1xf32, #tpu.memory_space<vmem>>, vector<1x8x1xf32>
    %33 = vector.shape_cast %32 : vector<1x8x1xf32> to vector<8x1xf32>
    %cst_21 = arith.constant dense<0xFF800000> : vector<8xf32>
    %34 = vector.multi_reduction <maximumf>, %31, %cst_21 [1] : vector<8x8xf32> to vector<8xf32>
    %35 = vector.shape_cast %34 : vector<8xf32> to vector<8x1xf32>
    %36 = arith.maximumf %33, %35 : vector<8x1xf32>
    %37 = arith.subf %33, %36 : vector<8x1xf32>
    %38 = math.exp %37 : vector<8x1xf32>
    %39 = vector.broadcast %36 : vector<8x1xf32> to vector<8x8xf32>
    %40 = arith.subf %31, %39 : vector<8x8xf32>
    %41 = math.exp %40 : vector<8x8xf32>
    %c0_22 = arith.constant 0 : index
    %c0_23 = arith.constant 0 : index
    %c0_24 = arith.constant 0 : index
    %42 = vector.load %arg9[%c0_22, %c0_23, %c0_24] : memref<4x8x1xf32, #tpu.memory_space<vmem>>, vector<1x8x1xf32>
    %43 = vector.shape_cast %42 : vector<1x8x1xf32> to vector<8x1xf32>
    %44 = arith.mulf %38, %43 : vector<8x1xf32>
    %cst_25 = arith.constant dense<0.000000e+00> : vector<8xf32>
    %45 = vector.multi_reduction <add>, %41, %cst_25 [1] : vector<8x8xf32> to vector<8xf32>
    %46 = vector.shape_cast %45 : vector<8xf32> to vector<8x1xf32>
    %47 = arith.addf %44, %46 : vector<8x1xf32>
    %c0_26 = arith.constant 0 : index
    %c0_27 = arith.constant 0 : index
    %c0_28 = arith.constant 0 : index
    %48 = vector.load %arg9[%c0_26, %c0_27, %c0_28] : memref<4x8x1xf32, #tpu.memory_space<vmem>>, vector<1x8x1xf32>
    %49 = vector.shape_cast %48 : vector<1x8x1xf32> to vector<8x1xf32>
    %50 = vector.shape_cast %47 : vector<8x1xf32> to vector<1x8x1xf32>
    tpu.vector_store %arg9[%c0_26, %c0_27, %c0_28], %50 {strides = array<i32>} : memref<4x8x1xf32, #tpu.memory_space<vmem>>, vector<1x8x1xf32>,
    %c0_29 = arith.constant 0 : index
    %c0_30 = arith.constant 0 : index
    %c0_31 = arith.constant 0 : index
    %51 = vector.load %arg10[%c0_29, %c0_30, %c0_31] : memref<4x8x8xf32, #tpu.memory_space<vmem>>, vector<1x8x8xf32>
    %52 = vector.shape_cast %51 : vector<1x8x8xf32> to vector<8x8xf32>
    %53 = vector.broadcast %38 : vector<8x1xf32> to vector<8x8xf32>
    %54 = arith.mulf %53, %52 : vector<8x8xf32>
    %55 = arith.truncf %41 : vector<8x8xf32> to vector<8x8xbf16>
    %cst_32 = arith.constant dense<0.000000e+00> : vector<8x8xf32>
    %56 = tpu.matmul %55, %27, %cst_32 {dimension_numbers = #tpu.dot_dimension_numbers<[1], [0], [0], [1], [0, 0, 1, 1], [], []>} : vector<8x8xbf16>, vector<8x8xbf16>, vector<8x8xf32> -> vector<8x8xf32>
    %57 = arith.addf %54, %56 : vector<8x8xf32>
    %c0_33 = arith.constant 0 : index
    %c0_34 = arith.constant 0 : index
    %c0_35 = arith.constant 0 : index
    %58 = vector.load %arg10[%c0_33, %c0_34, %c0_35] : memref<4x8x8xf32, #tpu.memory_space<vmem>>, vector<1x8x8xf32>
    %59 = vector.shape_cast %58 : vector<1x8x8xf32> to vector<8x8xf32>
    %60 = vector.shape_cast %57 : vector<8x8xf32> to vector<1x8x8xf32>
    tpu.vector_store %arg10[%c0_33, %c0_34, %c0_35], %60 {strides = array<i32>} : memref<4x8x8xf32, #tpu.memory_space<vmem>>, vector<1x8x8xf32>,
    %c0_36 = arith.constant 0 : index
    %c0_37 = arith.constant 0 : index
    %c0_38 = arith.constant 0 : index
    %61 = vector.load %arg8[%c0_36, %c0_37, %c0_38] : memref<4x8x1xf32, #tpu.memory_space<vmem>>, vector<1x8x1xf32>
    %62 = vector.shape_cast %61 : vector<1x8x1xf32> to vector<8x1xf32>
    %63 = vector.shape_cast %36 : vector<8x1xf32> to vector<1x8x1xf32>
    tpu.vector_store %arg8[%c0_36, %c0_37, %c0_38], %63 {strides = array<i32>} : memref<4x8x1xf32, #tpu.memory_space<vmem>>, vector<1x8x1xf32>,
    %64 = vector.extract_strided_slice %4 {offsets = [0, 8], sizes = [8, 8], strides = [1, 1]} : vector<8x32xbf16> to vector<8x8xbf16>
    %65 = vector.extract_strided_slice %6 {offsets = [0, 8], sizes = [8, 8], strides = [1, 1]} : vector<8x32xbf16> to vector<8x8xbf16>
    %66 = vector.extract_strided_slice %8 {offsets = [0, 8], sizes = [8, 8], strides = [1, 1]} : vector<8x32xbf16> to vector<8x8xbf16>
    %cst_39 = arith.constant dense<0.000000e+00> : vector<8x8xf32>
    %67 = tpu.matmul %64, %65, %cst_39 {dimension_numbers = #tpu.dot_dimension_numbers<[1], [1], [0], [0], [0, 0, 1, 0], [], []>} : vector<8x8xbf16>, vector<8x8xbf16>, vector<8x8xf32> -> vector<8x8xf32>
    %cst_40 = arith.constant 0.353553385 : f32
    %68 = vector.broadcast %cst_40 : f32 to vector<8x8xf32>
    %69 = arith.mulf %67, %68 : vector<8x8xf32>
    %70 = arith.addf %69, %24 : vector<8x8xf32>
    %c1 = arith.constant 1 : index
    %c0_41 = arith.constant 0 : index
    %c0_42 = arith.constant 0 : index
    %71 = vector.load %arg8[%c1, %c0_41, %c0_42] : memref<4x8x1xf32, #tpu.memory_space<vmem>>, vector<1x8x1xf32>
    %72 = vector.shape_cast %71 : vector<1x8x1xf32> to vector<8x1xf32>
    %cst_43 = arith.constant dense<0xFF800000> : vector<8xf32>
    %73 = vector.multi_reduction <maximumf>, %70, %cst_43 [1] : vector<8x8xf32> to vector<8xf32>
    %74 = vector.shape_cast %73 : vector<8xf32> to vector<8x1xf32>
    %75 = arith.maximumf %72, %74 : vector<8x1xf32>
    %76 = arith.subf %72, %75 : vector<8x1xf32>
    %77 = math.exp %76 : vector<8x1xf32>
    %78 = vector.broadcast %75 : vector<8x1xf32> to vector<8x8xf32>
    %79 = arith.subf %70, %78 : vector<8x8xf32>
    %80 = math.exp %79 : vector<8x8xf32>
    %c1_44 = arith.constant 1 : index
    %c0_45 = arith.constant 0 : index
    %c0_46 = arith.constant 0 : index
    %81 = vector.load %arg9[%c1_44, %c0_45, %c0_46] : memref<4x8x1xf32, #tpu.memory_space<vmem>>, vector<1x8x1xf32>
    %82 = vector.shape_cast %81 : vector<1x8x1xf32> to vector<8x1xf32>
    %83 = arith.mulf %77, %82 : vector<8x1xf32>
    %cst_47 = arith.constant dense<0.000000e+00> : vector<8xf32>
    %84 = vector.multi_reduction <add>, %80, %cst_47 [1] : vector<8x8xf32> to vector<8xf32>
    %85 = vector.shape_cast %84 : vector<8xf32> to vector<8x1xf32>
    %86 = arith.addf %83, %85 : vector<8x1xf32>
    %c1_48 = arith.constant 1 : index
    %c0_49 = arith.constant 0 : index
    %c0_50 = arith.constant 0 : index
    %87 = vector.load %arg9[%c1_48, %c0_49, %c0_50] : memref<4x8x1xf32, #tpu.memory_space<vmem>>, vector<1x8x1xf32>
    %88 = vector.shape_cast %87 : vector<1x8x1xf32> to vector<8x1xf32>
    %89 = vector.shape_cast %86 : vector<8x1xf32> to vector<1x8x1xf32>
    tpu.vector_store %arg9[%c1_48, %c0_49, %c0_50], %89 {strides = array<i32>} : memref<4x8x1xf32, #tpu.memory_space<vmem>>, vector<1x8x1xf32>,
    %c1_51 = arith.constant 1 : index
    %c0_52 = arith.constant 0 : index
    %c0_53 = arith.constant 0 : index
    %90 = vector.load %arg10[%c1_51, %c0_52, %c0_53] : memref<4x8x8xf32, #tpu.memory_space<vmem>>, vector<1x8x8xf32>
    %91 = vector.shape_cast %90 : vector<1x8x8xf32> to vector<8x8xf32>
    %92 = vector.broadcast %77 : vector<8x1xf32> to vector<8x8xf32>
    %93 = arith.mulf %92, %91 : vector<8x8xf32>
    %94 = arith.truncf %80 : vector<8x8xf32> to vector<8x8xbf16>
    %cst_54 = arith.constant dense<0.000000e+00> : vector<8x8xf32>
    %95 = tpu.matmul %94, %66, %cst_54 {dimension_numbers = #tpu.dot_dimension_numbers<[1], [0], [0], [1], [0, 0, 1, 1], [], []>} : vector<8x8xbf16>, vector<8x8xbf16>, vector<8x8xf32> -> vector<8x8xf32>
    %96 = arith.addf %93, %95 : vector<8x8xf32>
    %c1_55 = arith.constant 1 : index
    %c0_56 = arith.constant 0 : index
    %c0_57 = arith.constant 0 : index
    %97 = vector.load %arg10[%c1_55, %c0_56, %c0_57] : memref<4x8x8xf32, #tpu.memory_space<vmem>>, vector<1x8x8xf32>
    %98 = vector.shape_cast %97 : vector<1x8x8xf32> to vector<8x8xf32>
    %99 = vector.shape_cast %96 : vector<8x8xf32> to vector<1x8x8xf32>
    tpu.vector_store %arg10[%c1_55, %c0_56, %c0_57], %99 {strides = array<i32>} : memref<4x8x8xf32, #tpu.memory_space<vmem>>, vector<1x8x8xf32>,
    %c1_58 = arith.constant 1 : index
    %c0_59 = arith.constant 0 : index
    %c0_60 = arith.constant 0 : index
    %100 = vector.load %arg8[%c1_58, %c0_59, %c0_60] : memref<4x8x1xf32, #tpu.memory_space<vmem>>, vector<1x8x1xf32>
    %101 = vector.shape_cast %100 : vector<1x8x1xf32> to vector<8x1xf32>
    %102 = vector.shape_cast %75 : vector<8x1xf32> to vector<1x8x1xf32>
    tpu.vector_store %arg8[%c1_58, %c0_59, %c0_60], %102 {strides = array<i32>} : memref<4x8x1xf32, #tpu.memory_space<vmem>>, vector<1x8x1xf32>,
    %103 = vector.extract_strided_slice %4 {offsets = [0, 16], sizes = [8, 8], strides = [1, 1]} : vector<8x32xbf16> to vector<8x8xbf16>
    %104 = vector.extract_strided_slice %6 {offsets = [0, 16], sizes = [8, 8], strides = [1, 1]} : vector<8x32xbf16> to vector<8x8xbf16>
    %105 = vector.extract_strided_slice %8 {offsets = [0, 16], sizes = [8, 8], strides = [1, 1]} : vector<8x32xbf16> to vector<8x8xbf16>
    %cst_61 = arith.constant dense<0.000000e+00> : vector<8x8xf32>
    %106 = tpu.matmul %103, %104, %cst_61 {dimension_numbers = #tpu.dot_dimension_numbers<[1], [1], [0], [0], [0, 0, 1, 0], [], []>} : vector<8x8xbf16>, vector<8x8xbf16>, vector<8x8xf32> -> vector<8x8xf32>
    %cst_62 = arith.constant 0.353553385 : f32
    %107 = vector.broadcast %cst_62 : f32 to vector<8x8xf32>
    %108 = arith.mulf %106, %107 : vector<8x8xf32>
    %109 = arith.addf %108, %24 : vector<8x8xf32>
    %c2 = arith.constant 2 : index
    %c0_63 = arith.constant 0 : index
    %c0_64 = arith.constant 0 : index
    %110 = vector.load %arg8[%c2, %c0_63, %c0_64] : memref<4x8x1xf32, #tpu.memory_space<vmem>>, vector<1x8x1xf32>
    %111 = vector.shape_cast %110 : vector<1x8x1xf32> to vector<8x1xf32>
    %cst_65 = arith.constant dense<0xFF800000> : vector<8xf32>
    %112 = vector.multi_reduction <maximumf>, %109, %cst_65 [1] : vector<8x8xf32> to vector<8xf32>
    %113 = vector.shape_cast %112 : vector<8xf32> to vector<8x1xf32>
    %114 = arith.maximumf %111, %113 : vector<8x1xf32>
    %115 = arith.subf %111, %114 : vector<8x1xf32>
    %116 = math.exp %115 : vector<8x1xf32>
    %117 = vector.broadcast %114 : vector<8x1xf32> to vector<8x8xf32>
    %118 = arith.subf %109, %117 : vector<8x8xf32>
    %119 = math.exp %118 : vector<8x8xf32>
    %c2_66 = arith.constant 2 : index
    %c0_67 = arith.constant 0 : index
    %c0_68 = arith.constant 0 : index
    %120 = vector.load %arg9[%c2_66, %c0_67, %c0_68] : memref<4x8x1xf32, #tpu.memory_space<vmem>>, vector<1x8x1xf32>
    %121 = vector.shape_cast %120 : vector<1x8x1xf32> to vector<8x1xf32>
    %122 = arith.mulf %116, %121 : vector<8x1xf32>
    %cst_69 = arith.constant dense<0.000000e+00> : vector<8xf32>
    %123 = vector.multi_reduction <add>, %119, %cst_69 [1] : vector<8x8xf32> to vector<8xf32>
    %124 = vector.shape_cast %123 : vector<8xf32> to vector<8x1xf32>
    %125 = arith.addf %122, %124 : vector<8x1xf32>
    %c2_70 = arith.constant 2 : index
    %c0_71 = arith.constant 0 : index
    %c0_72 = arith.constant 0 : index
    %126 = vector.load %arg9[%c2_70, %c0_71, %c0_72] : memref<4x8x1xf32, #tpu.memory_space<vmem>>, vector<1x8x1xf32>
    %127 = vector.shape_cast %126 : vector<1x8x1xf32> to vector<8x1xf32>
    %128 = vector.shape_cast %125 : vector<8x1xf32> to vector<1x8x1xf32>
    tpu.vector_store %arg9[%c2_70, %c0_71, %c0_72], %128 {strides = array<i32>} : memref<4x8x1xf32, #tpu.memory_space<vmem>>, vector<1x8x1xf32>,
    %c2_73 = arith.constant 2 : index
    %c0_74 = arith.constant 0 : index
    %c0_75 = arith.constant 0 : index
    %129 = vector.load %arg10[%c2_73, %c0_74, %c0_75] : memref<4x8x8xf32, #tpu.memory_space<vmem>>, vector<1x8x8xf32>
    %130 = vector.shape_cast %129 : vector<1x8x8xf32> to vector<8x8xf32>
    %131 = vector.broadcast %116 : vector<8x1xf32> to vector<8x8xf32>
    %132 = arith.mulf %131, %130 : vector<8x8xf32>
    %133 = arith.truncf %119 : vector<8x8xf32> to vector<8x8xbf16>
    %cst_76 = arith.constant dense<0.000000e+00> : vector<8x8xf32>
    %134 = tpu.matmul %133, %105, %cst_76 {dimension_numbers = #tpu.dot_dimension_numbers<[1], [0], [0], [1], [0, 0, 1, 1], [], []>} : vector<8x8xbf16>, vector<8x8xbf16>, vector<8x8xf32> -> vector<8x8xf32>
    %135 = arith.addf %132, %134 : vector<8x8xf32>
    %c2_77 = arith.constant 2 : index
    %c0_78 = arith.constant 0 : index
    %c0_79 = arith.constant 0 : index
    %136 = vector.load %arg10[%c2_77, %c0_78, %c0_79] : memref<4x8x8xf32, #tpu.memory_space<vmem>>, vector<1x8x8xf32>
    %137 = vector.shape_cast %136 : vector<1x8x8xf32> to vector<8x8xf32>
    %138 = vector.shape_cast %135 : vector<8x8xf32> to vector<1x8x8xf32>
    tpu.vector_store %arg10[%c2_77, %c0_78, %c0_79], %138 {strides = array<i32>} : memref<4x8x8xf32, #tpu.memory_space<vmem>>, vector<1x8x8xf32>,
    %c2_80 = arith.constant 2 : index
    %c0_81 = arith.constant 0 : index
    %c0_82 = arith.constant 0 : index
    %139 = vector.load %arg8[%c2_80, %c0_81, %c0_82] : memref<4x8x1xf32, #tpu.memory_space<vmem>>, vector<1x8x1xf32>
    %140 = vector.shape_cast %139 : vector<1x8x1xf32> to vector<8x1xf32>
    %141 = vector.shape_cast %114 : vector<8x1xf32> to vector<1x8x1xf32>
    tpu.vector_store %arg8[%c2_80, %c0_81, %c0_82], %141 {strides = array<i32>} : memref<4x8x1xf32, #tpu.memory_space<vmem>>, vector<1x8x1xf32>,
    %142 = vector.extract_strided_slice %4 {offsets = [0, 24], sizes = [8, 8], strides = [1, 1]} : vector<8x32xbf16> to vector<8x8xbf16>
    %143 = vector.extract_strided_slice %6 {offsets = [0, 24], sizes = [8, 8], strides = [1, 1]} : vector<8x32xbf16> to vector<8x8xbf16>
    %144 = vector.extract_strided_slice %8 {offsets = [0, 24], sizes = [8, 8], strides = [1, 1]} : vector<8x32xbf16> to vector<8x8xbf16>
    %cst_83 = arith.constant dense<0.000000e+00> : vector<8x8xf32>
    %145 = tpu.matmul %142, %143, %cst_83 {dimension_numbers = #tpu.dot_dimension_numbers<[1], [1], [0], [0], [0, 0, 1, 0], [], []>} : vector<8x8xbf16>, vector<8x8xbf16>, vector<8x8xf32> -> vector<8x8xf32>
    %cst_84 = arith.constant 0.353553385 : f32
    %146 = vector.broadcast %cst_84 : f32 to vector<8x8xf32>
    %147 = arith.mulf %145, %146 : vector<8x8xf32>
    %148 = arith.addf %147, %24 : vector<8x8xf32>
    %c3 = arith.constant 3 : index
    %c0_85 = arith.constant 0 : index
    %c0_86 = arith.constant 0 : index
    %149 = vector.load %arg8[%c3, %c0_85, %c0_86] : memref<4x8x1xf32, #tpu.memory_space<vmem>>, vector<1x8x1xf32>
    %150 = vector.shape_cast %149 : vector<1x8x1xf32> to vector<8x1xf32>
    %cst_87 = arith.constant dense<0xFF800000> : vector<8xf32>
    %151 = vector.multi_reduction <maximumf>, %148, %cst_87 [1] : vector<8x8xf32> to vector<8xf32>
    %152 = vector.shape_cast %151 : vector<8xf32> to vector<8x1xf32>
    %153 = arith.maximumf %150, %152 : vector<8x1xf32>
    %154 = arith.subf %150, %153 : vector<8x1xf32>
    %155 = math.exp %154 : vector<8x1xf32>
    %156 = vector.broadcast %153 : vector<8x1xf32> to vector<8x8xf32>
    %157 = arith.subf %148, %156 : vector<8x8xf32>
    %158 = math.exp %157 : vector<8x8xf32>
    %c3_88 = arith.constant 3 : index
    %c0_89 = arith.constant 0 : index
    %c0_90 = arith.constant 0 : index
    %159 = vector.load %arg9[%c3_88, %c0_89, %c0_90] : memref<4x8x1xf32, #tpu.memory_space<vmem>>, vector<1x8x1xf32>
    %160 = vector.shape_cast %159 : vector<1x8x1xf32> to vector<8x1xf32>
    %161 = arith.mulf %155, %160 : vector<8x1xf32>
    %cst_91 = arith.constant dense<0.000000e+00> : vector<8xf32>
    %162 = vector.multi_reduction <add>, %158, %cst_91 [1] : vector<8x8xf32> to vector<8xf32>
    %163 = vector.shape_cast %162 : vector<8xf32> to vector<8x1xf32>
    %164 = arith.addf %161, %163 : vector<8x1xf32>
    %c3_92 = arith.constant 3 : index
    %c0_93 = arith.constant 0 : index
    %c0_94 = arith.constant 0 : index
    %165 = vector.load %arg9[%c3_92, %c0_93, %c0_94] : memref<4x8x1xf32, #tpu.memory_space<vmem>>, vector<1x8x1xf32>
    %166 = vector.shape_cast %165 : vector<1x8x1xf32> to vector<8x1xf32>
    %167 = vector.shape_cast %164 : vector<8x1xf32> to vector<1x8x1xf32>
    tpu.vector_store %arg9[%c3_92, %c0_93, %c0_94], %167 {strides = array<i32>} : memref<4x8x1xf32, #tpu.memory_space<vmem>>, vector<1x8x1xf32>,
    %c3_95 = arith.constant 3 : index
    %c0_96 = arith.constant 0 : index
    %c0_97 = arith.constant 0 : index
    %168 = vector.load %arg10[%c3_95, %c0_96, %c0_97] : memref<4x8x8xf32, #tpu.memory_space<vmem>>, vector<1x8x8xf32>
    %169 = vector.shape_cast %168 : vector<1x8x8xf32> to vector<8x8xf32>
    %170 = vector.broadcast %155 : vector<8x1xf32> to vector<8x8xf32>
    %171 = arith.mulf %170, %169 : vector<8x8xf32>
    %172 = arith.truncf %158 : vector<8x8xf32> to vector<8x8xbf16>
    %cst_98 = arith.constant dense<0.000000e+00> : vector<8x8xf32>
    %173 = tpu.matmul %172, %144, %cst_98 {dimension_numbers = #tpu.dot_dimension_numbers<[1], [0], [0], [1], [0, 0, 1, 1], [], []>} : vector<8x8xbf16>, vector<8x8xbf16>, vector<8x8xf32> -> vector<8x8xf32>
    %174 = arith.addf %171, %173 : vector<8x8xf32>
    %c3_99 = arith.constant 3 : index
    %c0_100 = arith.constant 0 : index
    %c0_101 = arith.constant 0 : index
    %175 = vector.load %arg10[%c3_99, %c0_100, %c0_101] : memref<4x8x8xf32, #tpu.memory_space<vmem>>, vector<1x8x8xf32>
    %176 = vector.shape_cast %175 : vector<1x8x8xf32> to vector<8x8xf32>
    %177 = vector.shape_cast %174 : vector<8x8xf32> to vector<1x8x8xf32>
    tpu.vector_store %arg10[%c3_99, %c0_100, %c0_101], %177 {strides = array<i32>} : memref<4x8x8xf32, #tpu.memory_space<vmem>>, vector<1x8x8xf32>,
    %c3_102 = arith.constant 3 : index
    %c0_103 = arith.constant 0 : index
    %c0_104 = arith.constant 0 : index
    %178 = vector.load %arg8[%c3_102, %c0_103, %c0_104] : memref<4x8x1xf32, #tpu.memory_space<vmem>>, vector<1x8x1xf32>
    %179 = vector.shape_cast %178 : vector<1x8x1xf32> to vector<8x1xf32>
    %180 = vector.shape_cast %153 : vector<8x1xf32> to vector<1x8x1xf32>
    tpu.vector_store %arg8[%c3_102, %c0_103, %c0_104], %180 {strides = array<i32>} : memref<4x8x1xf32, #tpu.memory_space<vmem>>, vector<1x8x1xf32>,
    %c0_i32_105 = arith.constant 0 : i32
    %181 = arith.cmpi eq, %arg2, %c0_i32_105 : i32
    %182 = arith.extui %181 : i1 to i32
    %c0_i32_106 = arith.constant 0 : i32
    %183 = arith.cmpi ne, %182, %c0_i32_106 : i32
    scf.if %183 {
      %c0_107 = arith.constant 0 : index
      %c0_108 = arith.constant 0 : index
      %c0_109 = arith.constant 0 : index
      %184 = vector.load %arg10[%c0_107, %c0_108, %c0_109] : memref<4x8x8xf32, #tpu.memory_space<vmem>>, vector<1x8x8xf32>
      %185 = vector.shape_cast %184 : vector<1x8x8xf32> to vector<8x8xf32>
      %c0_110 = arith.constant 0 : index
      %c0_111 = arith.constant 0 : index
      %c0_112 = arith.constant 0 : index
      %186 = vector.load %arg9[%c0_110, %c0_111, %c0_112] : memref<4x8x1xf32, #tpu.memory_space<vmem>>, vector<1x8x1xf32>
      %187 = vector.shape_cast %186 : vector<1x8x1xf32> to vector<8x1xf32>
      %188 = tpu.reciprocal %187 {approx = true} : vector<8x1xf32> -> vector<8x1xf32>
      %189 = vector.broadcast %188 : vector<8x1xf32> to vector<8x8xf32>
      %190 = arith.mulf %185, %189 : vector<8x8xf32>
      %c1_113 = arith.constant 1 : index
      %c0_114 = arith.constant 0 : index
      %c0_115 = arith.constant 0 : index
      %191 = vector.load %arg10[%c1_113, %c0_114, %c0_115] : memref<4x8x8xf32, #tpu.memory_space<vmem>>, vector<1x8x8xf32>
      %192 = vector.shape_cast %191 : vector<1x8x8xf32> to vector<8x8xf32>
      %c1_116 = arith.constant 1 : index
      %c0_117 = arith.constant 0 : index
      %c0_118 = arith.constant 0 : index
      %193 = vector.load %arg9[%c1_116, %c0_117, %c0_118] : memref<4x8x1xf32, #tpu.memory_space<vmem>>, vector<1x8x1xf32>
      %194 = vector.shape_cast %193 : vector<1x8x1xf32> to vector<8x1xf32>
      %195 = tpu.reciprocal %194 {approx = true} : vector<8x1xf32> -> vector<8x1xf32>
      %196 = vector.broadcast %195 : vector<8x1xf32> to vector<8x8xf32>
      %197 = arith.mulf %192, %196 : vector<8x8xf32>
      %c2_119 = arith.constant 2 : index
      %c0_120 = arith.constant 0 : index
      %c0_121 = arith.constant 0 : index
      %198 = vector.load %arg10[%c2_119, %c0_120, %c0_121] : memref<4x8x8xf32, #tpu.memory_space<vmem>>, vector<1x8x8xf32>
      %199 = vector.shape_cast %198 : vector<1x8x8xf32> to vector<8x8xf32>
      %c2_122 = arith.constant 2 : index
      %c0_123 = arith.constant 0 : index
      %c0_124 = arith.constant 0 : index
      %200 = vector.load %arg9[%c2_122, %c0_123, %c0_124] : memref<4x8x1xf32, #tpu.memory_space<vmem>>, vector<1x8x1xf32>
      %201 = vector.shape_cast %200 : vector<1x8x1xf32> to vector<8x1xf32>
      %202 = tpu.reciprocal %201 {approx = true} : vector<8x1xf32> -> vector<8x1xf32>
      %203 = vector.broadcast %202 : vector<8x1xf32> to vector<8x8xf32>
      %204 = arith.mulf %199, %203 : vector<8x8xf32>
      %c3_125 = arith.constant 3 : index
      %c0_126 = arith.constant 0 : index
      %c0_127 = arith.constant 0 : index
      %205 = vector.load %arg10[%c3_125, %c0_126, %c0_127] : memref<4x8x8xf32, #tpu.memory_space<vmem>>, vector<1x8x8xf32>
      %206 = vector.shape_cast %205 : vector<1x8x8xf32> to vector<8x8xf32>
      %c3_128 = arith.constant 3 : index
      %c0_129 = arith.constant 0 : index
      %c0_130 = arith.constant 0 : index
      %207 = vector.load %arg9[%c3_128, %c0_129, %c0_130] : memref<4x8x1xf32, #tpu.memory_space<vmem>>, vector<1x8x1xf32>
      %208 = vector.shape_cast %207 : vector<1x8x1xf32> to vector<8x1xf32>
      %209 = tpu.reciprocal %208 {approx = true} : vector<8x1xf32> -> vector<8x1xf32>
      %210 = vector.broadcast %209 : vector<8x1xf32> to vector<8x8xf32>
      %211 = arith.mulf %206, %210 : vector<8x8xf32>
      %212 = tpu.concatenate %190, %197, %204, %211 in 1 : vector<8x8xf32>, vector<8x8xf32>, vector<8x8xf32>, vector<8x8xf32> -> vector<8x32xf32>
      %213 = arith.truncf %212 : vector<8x32xf32> to vector<8x32xbf16>
      %c0_131 = arith.constant 0 : index
      %c0_132 = arith.constant 0 : index
      %c0_133 = arith.constant 0 : index
      %214 = vector.load %arg7[%c0_131, %c0_132, %c0_133] : memref<1x8x32xbf16, #tpu.memory_space<vmem>>, vector<1x8x32xbf16>
      %215 = vector.shape_cast %214 : vector<1x8x32xbf16> to vector<8x32xbf16>
      %216 = vector.shape_cast %213 : vector<8x32xbf16> to vector<1x8x32xbf16>
      tpu.vector_store %arg7[%c0_131, %c0_132, %c0_133], %216 {strides = array<i32>} : memref<1x8x32xbf16, #tpu.memory_space<vmem>>, vector<1x8x32xbf16>,
    } else {
    }
    return
  }
  func.func @transform_0(%arg0: i32, %arg1: i32, %arg2: i32) -> (i32, i32, i32, i32) {
    %c0_i32 = arith.constant 0 : i32
    %c0_i32_0 = arith.constant 0 : i32
    %c0_i32_1 = arith.constant 0 : i32
    return %c0_i32, %arg0, %arg1, %c0_i32_0 : i32, i32, i32, i32
  }
  func.func @transform_1(%arg0: i32, %arg1: i32, %arg2: i32) -> (i32, i32, i32, i32) {
    %c1_i32 = arith.constant 1 : i32
    %c0_i32 = arith.constant 0 : i32
    %c0_i32_0 = arith.constant 0 : i32
    return %c1_i32, %arg0, %arg2, %c0_i32 : i32, i32, i32, i32
  }
  func.func @transform_2(%arg0: i32, %arg1: i32, %arg2: i32) -> (i32, i32, i32, i32) {
    %c2_i32 = arith.constant 2 : i32
    %c0_i32 = arith.constant 0 : i32
    %c0_i32_0 = arith.constant 0 : i32
    return %c2_i32, %arg0, %arg2, %c0_i32 : i32, i32, i32, i32
  }
  func.func @transform_3(%arg0: i32, %arg1: i32, %arg2: i32) -> (i32, i32, i32) {
    %c0_i32 = arith.constant 0 : i32
    %c0_i32_0 = arith.constant 0 : i32
    return %arg0, %c0_i32, %arg2 : i32, i32, i32
  }
  func.func @transform_4(%arg0: i32, %arg1: i32, %arg2: i32) -> (i32, i32, i32) {
    %c0_i32 = arith.constant 0 : i32
    %c0_i32_0 = arith.constant 0 : i32
    return %arg0, %arg1, %c0_i32 : i32, i32, i32
  }
}

module attributes {stable_mosaic.version = 11 : i64} {
  func.func @_matmul_bias_kernel(%arg0: i32, %arg1: i32, %arg2: i32, %arg3: i32, %arg4: memref<16x32xbf16, #tpu.memory_space<vmem>>, %arg5: memref<1x32x32xbf16, #tpu.memory_space<vmem>>, %arg6: memref<1x1x32xf32, #tpu.memory_space<vmem>>, %arg7: memref<1x16x32xbf16, #tpu.memory_space<vmem>>, %arg8: memref<16x32xf32, #tpu.memory_space<vmem>>) attributes {dimension_semantics = [#tpu.dimension_semantics<parallel>, #tpu.dimension_semantics<parallel>, #tpu.dimension_semantics<parallel>, #tpu.dimension_semantics<arbitrary>], iteration_bounds = array<i64: 2, 1, 1, 1>, scalar_prefetch = 0 : i64, scratch_operands = 1 : i64, tpu.core_type = #tpu.core_type<tc>, window_params = [{transform_indices = @transform_0, window_bounds = array<i64: 16, 32>}, {transform_indices = @transform_1, window_bounds = array<i64: 1, 32, 32>}, {transform_indices = @transform_2, window_bounds = array<i64: 1, 1, 32>}, {transform_indices = @transform_3, window_bounds = array<i64: 1, 16, 32>}]} {
    %c0_i32 = arith.constant 0 : i32
    %0 = arith.cmpi eq, %arg3, %c0_i32 : i32
    %1 = arith.extui %0 : i1 to i32
    %c0_i32_0 = arith.constant 0 : i32
    %2 = arith.cmpi ne, %1, %c0_i32_0 : i32
    scf.if %2 {
      %cst_11 = arith.constant 0.000000e+00 : f32
      %13 = vector.broadcast %cst_11 : f32 to vector<16x32xf32>
      %c0_12 = arith.constant 0 : index
      %c0_13 = arith.constant 0 : index
      %14 = vector.load %arg8[%c0_12, %c0_13] : memref<16x32xf32, #tpu.memory_space<vmem>>, vector<16x32xf32>
      tpu.vector_store %arg8[%c0_12, %c0_13], %13 {strides = array<i32>} : memref<16x32xf32, #tpu.memory_space<vmem>>, vector<16x32xf32>,
    } else {
    }
    %c0 = arith.constant 0 : index
    %c0_1 = arith.constant 0 : index
    %3 = vector.load %arg8[%c0, %c0_1] : memref<16x32xf32, #tpu.memory_space<vmem>>, vector<16x32xf32>
    %c0_2 = arith.constant 0 : index
    %c0_3 = arith.constant 0 : index
    %4 = vector.load %arg4[%c0_2, %c0_3] : memref<16x32xbf16, #tpu.memory_space<vmem>>, vector<16x32xbf16>
    %c0_4 = arith.constant 0 : index
    %c0_5 = arith.constant 0 : index
    %c0_6 = arith.constant 0 : index
    %5 = vector.load %arg5[%c0_4, %c0_5, %c0_6] : memref<1x32x32xbf16, #tpu.memory_space<vmem>>, vector<1x32x32xbf16>
    %6 = vector.shape_cast %5 : vector<1x32x32xbf16> to vector<32x32xbf16>
    %cst = arith.constant dense<0.000000e+00> : vector<16x32xf32>
    %7 = tpu.matmul %4, %6, %cst {dimension_numbers = #tpu.dot_dimension_numbers<[1], [0], [0], [1], [0, 0, 1, 1], [], []>} : vector<16x32xbf16>, vector<32x32xbf16>, vector<16x32xf32> -> vector<16x32xf32>
    %8 = arith.addf %3, %7 : vector<16x32xf32>
    %c0_7 = arith.constant 0 : index
    %c0_8 = arith.constant 0 : index
    %9 = vector.load %arg8[%c0_7, %c0_8] : memref<16x32xf32, #tpu.memory_space<vmem>>, vector<16x32xf32>
    tpu.vector_store %arg8[%c0_7, %c0_8], %8 {strides = array<i32>} : memref<16x32xf32, #tpu.memory_space<vmem>>, vector<16x32xf32>,
    %c0_i32_9 = arith.constant 0 : i32
    %10 = arith.cmpi eq, %arg3, %c0_i32_9 : i32
    %11 = arith.extui %10 : i1 to i32
    %c0_i32_10 = arith.constant 0 : i32
    %12 = arith.cmpi ne, %11, %c0_i32_10 : i32
    scf.if %12 {
      %c0_11 = arith.constant 0 : index
      %c0_12 = arith.constant 0 : index
      %13 = vector.load %arg8[%c0_11, %c0_12] : memref<16x32xf32, #tpu.memory_space<vmem>>, vector<16x32xf32>
      %c0_13 = arith.constant 0 : index
      %c0_14 = arith.constant 0 : index
      %c0_15 = arith.constant 0 : index
      %14 = vector.load %arg6[%c0_13, %c0_14, %c0_15] : memref<1x1x32xf32, #tpu.memory_space<vmem>>, vector<1x1x32xf32>
      %15 = vector.shape_cast %14 : vector<1x1x32xf32> to vector<1x32xf32>
      %16 = vector.broadcast %15 : vector<1x32xf32> to vector<16x32xf32>
      %17 = arith.addf %13, %16 : vector<16x32xf32>
      %18 = arith.truncf %17 : vector<16x32xf32> to vector<16x32xbf16>
      %c0_16 = arith.constant 0 : index
      %c0_17 = arith.constant 0 : index
      %c0_18 = arith.constant 0 : index
      %19 = vector.load %arg7[%c0_16, %c0_17, %c0_18] : memref<1x16x32xbf16, #tpu.memory_space<vmem>>, vector<1x16x32xbf16>
      %20 = vector.shape_cast %19 : vector<1x16x32xbf16> to vector<16x32xbf16>
      %21 = vector.shape_cast %18 : vector<16x32xbf16> to vector<1x16x32xbf16>
      tpu.vector_store %arg7[%c0_16, %c0_17, %c0_18], %21 {strides = array<i32>} : memref<1x16x32xbf16, #tpu.memory_space<vmem>>, vector<1x16x32xbf16>,
    } else {
    }
    return
  }
  func.func @transform_0(%arg0: i32, %arg1: i32, %arg2: i32, %arg3: i32) -> (i32, i32) {
    %c0_i32 = arith.constant 0 : i32
    return %arg1, %arg3 : i32, i32
  }
  func.func @transform_1(%arg0: i32, %arg1: i32, %arg2: i32, %arg3: i32) -> (i32, i32, i32) {
    %c0_i32 = arith.constant 0 : i32
    return %arg0, %arg3, %arg2 : i32, i32, i32
  }
  func.func @transform_2(%arg0: i32, %arg1: i32, %arg2: i32, %arg3: i32) -> (i32, i32, i32) {
    %c0_i32 = arith.constant 0 : i32
    %c0_i32_0 = arith.constant 0 : i32
    return %arg0, %c0_i32, %arg2 : i32, i32, i32
  }
  func.func @transform_3(%arg0: i32, %arg1: i32, %arg2: i32, %arg3: i32) -> (i32, i32, i32) {
    %c0_i32 = arith.constant 0 : i32
    return %arg0, %arg1, %arg2 : i32, i32, i32
  }
}

module attributes {stable_mosaic.version = 11 : i64} {
  func.func @_flash_attn_kernel(%arg0: i32, %arg1: i32, %arg2: i32, %arg3: memref<1x1x8x32xbf16, #tpu.memory_space<vmem>>, %arg4: memref<1x1x8x32xbf16, #tpu.memory_space<vmem>>, %arg5: memref<1x1x8x32xbf16, #tpu.memory_space<vmem>>, %arg6: memref<1x1x8xbf16, #tpu.memory_space<vmem>>, %arg7: memref<1x8x32xbf16, #tpu.memory_space<vmem>>, %arg8: memref<4x8x1xf32, #tpu.memory_space<vmem>>, %arg9: memref<4x8x1xf32, #tpu.memory_space<vmem>>, %arg10: memref<4x8x8xf32, #tpu.memory_space<vmem>>) attributes {dimension_semantics = [#tpu.dimension_semantics<parallel>, #tpu.dimension_semantics<parallel>, #tpu.dimension_semantics<arbitrary>], iteration_bounds = array<i64: 2, 1, 1>, scalar_prefetch = 0 : i64, scratch_operands = 3 : i64, tpu.core_type = #tpu.core_type<tc>, window_params = [{transform_indices = @transform_0, window_bounds = array<i64: 1, 1, 8, 32>}, {transform_indices = @transform_1, window_bounds = array<i64: 1, 1, 8, 32>}, {transform_indices = @transform_2, window_bounds = array<i64: 1, 1, 8, 32>}, {transform_indices = @transform_3, window_bounds = array<i64: 1, 1, 8>}, {transform_indices = @transform_4, window_bounds = array<i64: 1, 8, 32>}]} {
    %c0_i32 = arith.constant 0 : i32
    %0 = arith.cmpi eq, %arg2, %c0_i32 : i32
    %1 = arith.extui %0 : i1 to i32
    %c0_i32_0 = arith.constant 0 : i32
    %2 = arith.cmpi ne, %1, %c0_i32_0 : i32
    scf.if %2 {
      %cst_105 = arith.constant 0xFF800000 : f32
      %175 = vector.broadcast %cst_105 : f32 to vector<4x8x1xf32>
      %c0_106 = arith.constant 0 : index
      %c0_107 = arith.constant 0 : index
      %c0_108 = arith.constant 0 : index
      %176 = vector.load %arg8[%c0_106, %c0_107, %c0_108] : memref<4x8x1xf32, #tpu.memory_space<vmem>>, vector<4x8x1xf32>
      tpu.vector_store %arg8[%c0_106, %c0_107, %c0_108], %175 {strides = array<i32>} : memref<4x8x1xf32, #tpu.memory_space<vmem>>, vector<4x8x1xf32>,
      %cst_109 = arith.constant 0.000000e+00 : f32
      %177 = vector.broadcast %cst_109 : f32 to vector<4x8x1xf32>
      %c0_110 = arith.constant 0 : index
      %c0_111 = arith.constant 0 : index
      %c0_112 = arith.constant 0 : index
      %178 = vector.load %arg9[%c0_110, %c0_111, %c0_112] : memref<4x8x1xf32, #tpu.memory_space<vmem>>, vector<4x8x1xf32>
      tpu.vector_store %arg9[%c0_110, %c0_111, %c0_112], %177 {strides = array<i32>} : memref<4x8x1xf32, #tpu.memory_space<vmem>>, vector<4x8x1xf32>,
      %cst_113 = arith.constant 0.000000e+00 : f32
      %179 = vector.broadcast %cst_113 : f32 to vector<4x8x8xf32>
      %c0_114 = arith.constant 0 : index
      %c0_115 = arith.constant 0 : index
      %c0_116 = arith.constant 0 : index
      %180 = vector.load %arg10[%c0_114, %c0_115, %c0_116] : memref<4x8x8xf32, #tpu.memory_space<vmem>>, vector<4x8x8xf32>
      tpu.vector_store %arg10[%c0_114, %c0_115, %c0_116], %179 {strides = array<i32>} : memref<4x8x8xf32, #tpu.memory_space<vmem>>, vector<4x8x8xf32>,
    } else {
    }
    %c0 = arith.constant 0 : index
    %c0_1 = arith.constant 0 : index
    %c0_2 = arith.constant 0 : index
    %c0_3 = arith.constant 0 : index
    %3 = vector.load %arg3[%c0, %c0_1, %c0_2, %c0_3] : memref<1x1x8x32xbf16, #tpu.memory_space<vmem>>, vector<1x1x8x32xbf16>
    %4 = vector.shape_cast %3 : vector<1x1x8x32xbf16> to vector<8x32xbf16>
    %c0_4 = arith.constant 0 : index
    %c0_5 = arith.constant 0 : index
    %c0_6 = arith.constant 0 : index
    %c0_7 = arith.constant 0 : index
    %5 = vector.load %arg4[%c0_4, %c0_5, %c0_6, %c0_7] : memref<1x1x8x32xbf16, #tpu.memory_space<vmem>>, vector<1x1x8x32xbf16>
    %6 = vector.shape_cast %5 : vector<1x1x8x32xbf16> to vector<8x32xbf16>
    %c0_8 = arith.constant 0 : index
    %c0_9 = arith.constant 0 : index
    %c0_10 = arith.constant 0 : index
    %c0_11 = arith.constant 0 : index
    %7 = vector.load %arg5[%c0_8, %c0_9, %c0_10, %c0_11] : memref<1x1x8x32xbf16, #tpu.memory_space<vmem>>, vector<1x1x8x32xbf16>
    %8 = vector.shape_cast %7 : vector<1x1x8x32xbf16> to vector<8x32xbf16>
    %c0_12 = arith.constant 0 : index
    %c0_13 = arith.constant 0 : index
    %c0_14 = arith.constant 0 : index
    %9 = vector.load %arg6[%c0_12, %c0_13, %c0_14] : memref<1x1x8xbf16, #tpu.memory_space<vmem>>, vector<1x1x8xbf16>
    %10 = vector.shape_cast %9 : vector<1x1x8xbf16> to vector<1x8xbf16>
    %11 = arith.extf %10 : vector<1x8xbf16> to vector<1x8xf32>
    %12 = vector.extract_strided_slice %4 {offsets = [0, 0], sizes = [8, 8], strides = [1, 1]} : vector<8x32xbf16> to vector<8x8xbf16>
    %13 = vector.extract_strided_slice %6 {offsets = [0, 0], sizes = [8, 8], strides = [1, 1]} : vector<8x32xbf16> to vector<8x8xbf16>
    %14 = vector.extract_strided_slice %8 {offsets = [0, 0], sizes = [8, 8], strides = [1, 1]} : vector<8x32xbf16> to vector<8x8xbf16>
    %cst = arith.constant dense<0.000000e+00> : vector<8x8xf32>
    %15 = tpu.matmul %12, %13, %cst {dimension_numbers = #tpu.dot_dimension_numbers<[1], [1], [0], [0], [0, 0, 1, 0], [], []>} : vector<8x8xbf16>, vector<8x8xbf16>, vector<8x8xf32> -> vector<8x8xf32>
    %cst_15 = arith.constant 0.353553385 : f32
    %16 = vector.broadcast %cst_15 : f32 to vector<8x8xf32>
    %17 = arith.mulf %15, %16 : vector<8x8xf32>
    %18 = vector.broadcast %11 : vector<1x8xf32> to vector<8x8xf32>
    %19 = arith.addf %17, %18 : vector<8x8xf32>
    %c0_16 = arith.constant 0 : index
    %c0_17 = arith.constant 0 : index
    %c0_18 = arith.constant 0 : index
    %20 = vector.load %arg8[%c0_16, %c0_17, %c0_18] : memref<4x8x1xf32, #tpu.memory_space<vmem>>, vector<1x8x1xf32>
    %21 = vector.shape_cast %20 : vector<1x8x1xf32> to vector<8x1xf32>
    %cst_19 = arith.constant dense<0xFF800000> : vector<8xf32>
    %22 = vector.multi_reduction <maximumf>, %19, %cst_19 [1] : vector<8x8xf32> to vector<8xf32>
    %23 = vector.shape_cast %22 : vector<8xf32> to vector<8x1xf32>
    %24 = arith.maximumf %21, %23 : vector<8x1xf32>
    %25 = arith.subf %21, %24 : vector<8x1xf32>
    %26 = math.exp %25 : vector<8x1xf32>
    %27 = vector.broadcast %24 : vector<8x1xf32> to vector<8x8xf32>
    %28 = arith.subf %19, %27 : vector<8x8xf32>
    %29 = math.exp %28 : vector<8x8xf32>
    %c0_20 = arith.constant 0 : index
    %c0_21 = arith.constant 0 : index
    %c0_22 = arith.constant 0 : index
    %30 = vector.load %arg9[%c0_20, %c0_21, %c0_22] : memref<4x8x1xf32, #tpu.memory_space<vmem>>, vector<1x8x1xf32>
    %31 = vector.shape_cast %30 : vector<1x8x1xf32> to vector<8x1xf32>
    %32 = arith.mulf %26, %31 : vector<8x1xf32>
    %cst_23 = arith.constant dense<0.000000e+00> : vector<8xf32>
    %33 = vector.multi_reduction <add>, %29, %cst_23 [1] : vector<8x8xf32> to vector<8xf32>
    %34 = vector.shape_cast %33 : vector<8xf32> to vector<8x1xf32>
    %35 = arith.addf %32, %34 : vector<8x1xf32>
    %c0_24 = arith.constant 0 : index
    %c0_25 = arith.constant 0 : index
    %c0_26 = arith.constant 0 : index
    %36 = vector.load %arg9[%c0_24, %c0_25, %c0_26] : memref<4x8x1xf32, #tpu.memory_space<vmem>>, vector<1x8x1xf32>
    %37 = vector.shape_cast %36 : vector<1x8x1xf32> to vector<8x1xf32>
    %38 = vector.shape_cast %35 : vector<8x1xf32> to vector<1x8x1xf32>
    tpu.vector_store %arg9[%c0_24, %c0_25, %c0_26], %38 {strides = array<i32>} : memref<4x8x1xf32, #tpu.memory_space<vmem>>, vector<1x8x1xf32>,
    %c0_27 = arith.constant 0 : index
    %c0_28 = arith.constant 0 : index
    %c0_29 = arith.constant 0 : index
    %39 = vector.load %arg10[%c0_27, %c0_28, %c0_29] : memref<4x8x8xf32, #tpu.memory_space<vmem>>, vector<1x8x8xf32>
    %40 = vector.shape_cast %39 : vector<1x8x8xf32> to vector<8x8xf32>
    %41 = vector.broadcast %26 : vector<8x1xf32> to vector<8x8xf32>
    %42 = arith.mulf %41, %40 : vector<8x8xf32>
    %43 = arith.truncf %29 : vector<8x8xf32> to vector<8x8xbf16>
    %cst_30 = arith.constant dense<0.000000e+00> : vector<8x8xf32>
    %44 = tpu.matmul %43, %14, %cst_30 {dimension_numbers = #tpu.dot_dimension_numbers<[1], [0], [0], [1], [0, 0, 1, 1], [], []>} : vector<8x8xbf16>, vector<8x8xbf16>, vector<8x8xf32> -> vector<8x8xf32>
    %45 = arith.addf %42, %44 : vector<8x8xf32>
    %c0_31 = arith.constant 0 : index
    %c0_32 = arith.constant 0 : index
    %c0_33 = arith.constant 0 : index
    %46 = vector.load %arg10[%c0_31, %c0_32, %c0_33] : memref<4x8x8xf32, #tpu.memory_space<vmem>>, vector<1x8x8xf32>
    %47 = vector.shape_cast %46 : vector<1x8x8xf32> to vector<8x8xf32>
    %48 = vector.shape_cast %45 : vector<8x8xf32> to vector<1x8x8xf32>
    tpu.vector_store %arg10[%c0_31, %c0_32, %c0_33], %48 {strides = array<i32>} : memref<4x8x8xf32, #tpu.memory_space<vmem>>, vector<1x8x8xf32>,
    %c0_34 = arith.constant 0 : index
    %c0_35 = arith.constant 0 : index
    %c0_36 = arith.constant 0 : index
    %49 = vector.load %arg8[%c0_34, %c0_35, %c0_36] : memref<4x8x1xf32, #tpu.memory_space<vmem>>, vector<1x8x1xf32>
    %50 = vector.shape_cast %49 : vector<1x8x1xf32> to vector<8x1xf32>
    %51 = vector.shape_cast %24 : vector<8x1xf32> to vector<1x8x1xf32>
    tpu.vector_store %arg8[%c0_34, %c0_35, %c0_36], %51 {strides = array<i32>} : memref<4x8x1xf32, #tpu.memory_space<vmem>>, vector<1x8x1xf32>,
    %52 = vector.extract_strided_slice %4 {offsets = [0, 8], sizes = [8, 8], strides = [1, 1]} : vector<8x32xbf16> to vector<8x8xbf16>
    %53 = vector.extract_strided_slice %6 {offsets = [0, 8], sizes = [8, 8], strides = [1, 1]} : vector<8x32xbf16> to vector<8x8xbf16>
    %54 = vector.extract_strided_slice %8 {offsets = [0, 8], sizes = [8, 8], strides = [1, 1]} : vector<8x32xbf16> to vector<8x8xbf16>
    %cst_37 = arith.constant dense<0.000000e+00> : vector<8x8xf32>
    %55 = tpu.matmul %52, %53, %cst_37 {dimension_numbers = #tpu.dot_dimension_numbers<[1], [1], [0], [0], [0, 0, 1, 0], [], []>} : vector<8x8xbf16>, vector<8x8xbf16>, vector<8x8xf32> -> vector<8x8xf32>
    %cst_38 = arith.constant 0.353553385 : f32
    %56 = vector.broadcast %cst_38 : f32 to vector<8x8xf32>
    %57 = arith.mulf %55, %56 : vector<8x8xf32>
    %58 = vector.broadcast %11 : vector<1x8xf32> to vector<8x8xf32>
    %59 = arith.addf %57, %58 : vector<8x8xf32>
    %c1 = arith.constant 1 : index
    %c0_39 = arith.constant 0 : index
    %c0_40 = arith.constant 0 : index
    %60 = vector.load %arg8[%c1, %c0_39, %c0_40] : memref<4x8x1xf32, #tpu.memory_space<vmem>>, vector<1x8x1xf32>
    %61 = vector.shape_cast %60 : vector<1x8x1xf32> to vector<8x1xf32>
    %cst_41 = arith.constant dense<0xFF800000> : vector<8xf32>
    %62 = vector.multi_reduction <maximumf>, %59, %cst_41 [1] : vector<8x8xf32> to vector<8xf32>
    %63 = vector.shape_cast %62 : vector<8xf32> to vector<8x1xf32>
    %64 = arith.maximumf %61, %63 : vector<8x1xf32>
    %65 = arith.subf %61, %64 : vector<8x1xf32>
    %66 = math.exp %65 : vector<8x1xf32>
    %67 = vector.broadcast %64 : vector<8x1xf32> to vector<8x8xf32>
    %68 = arith.subf %59, %67 : vector<8x8xf32>
    %69 = math.exp %68 : vector<8x8xf32>
    %c1_42 = arith.constant 1 : index
    %c0_43 = arith.constant 0 : index
    %c0_44 = arith.constant 0 : index
    %70 = vector.load %arg9[%c1_42, %c0_43, %c0_44] : memref<4x8x1xf32, #tpu.memory_space<vmem>>, vector<1x8x1xf32>
    %71 = vector.shape_cast %70 : vector<1x8x1xf32> to vector<8x1xf32>
    %72 = arith.mulf %66, %71 : vector<8x1xf32>
    %cst_45 = arith.constant dense<0.000000e+00> : vector<8xf32>
    %73 = vector.multi_reduction <add>, %69, %cst_45 [1] : vector<8x8xf32> to vector<8xf32>
    %74 = vector.shape_cast %73 : vector<8xf32> to vector<8x1xf32>
    %75 = arith.addf %72, %74 : vector<8x1xf32>
    %c1_46 = arith.constant 1 : index
    %c0_47 = arith.constant 0 : index
    %c0_48 = arith.constant 0 : index
    %76 = vector.load %arg9[%c1_46, %c0_47, %c0_48] : memref<4x8x1xf32, #tpu.memory_space<vmem>>, vector<1x8x1xf32>
    %77 = vector.shape_cast %76 : vector<1x8x1xf32> to vector<8x1xf32>
    %78 = vector.shape_cast %75 : vector<8x1xf32> to vector<1x8x1xf32>
    tpu.vector_store %arg9[%c1_46, %c0_47, %c0_48], %78 {strides = array<i32>} : memref<4x8x1xf32, #tpu.memory_space<vmem>>, vector<1x8x1xf32>,
    %c1_49 = arith.constant 1 : index
    %c0_50 = arith.constant 0 : index
    %c0_51 = arith.constant 0 : index
    %79 = vector.load %arg10[%c1_49, %c0_50, %c0_51] : memref<4x8x8xf32, #tpu.memory_space<vmem>>, vector<1x8x8xf32>
    %80 = vector.shape_cast %79 : vector<1x8x8xf32> to vector<8x8xf32>
    %81 = vector.broadcast %66 : vector<8x1xf32> to vector<8x8xf32>
    %82 = arith.mulf %81, %80 : vector<8x8xf32>
    %83 = arith.truncf %69 : vector<8x8xf32> to vector<8x8xbf16>
    %cst_52 = arith.constant dense<0.000000e+00> : vector<8x8xf32>
    %84 = tpu.matmul %83, %54, %cst_52 {dimension_numbers = #tpu.dot_dimension_numbers<[1], [0], [0], [1], [0, 0, 1, 1], [], []>} : vector<8x8xbf16>, vector<8x8xbf16>, vector<8x8xf32> -> vector<8x8xf32>
    %85 = arith.addf %82, %84 : vector<8x8xf32>
    %c1_53 = arith.constant 1 : index
    %c0_54 = arith.constant 0 : index
    %c0_55 = arith.constant 0 : index
    %86 = vector.load %arg10[%c1_53, %c0_54, %c0_55] : memref<4x8x8xf32, #tpu.memory_space<vmem>>, vector<1x8x8xf32>
    %87 = vector.shape_cast %86 : vector<1x8x8xf32> to vector<8x8xf32>
    %88 = vector.shape_cast %85 : vector<8x8xf32> to vector<1x8x8xf32>
    tpu.vector_store %arg10[%c1_53, %c0_54, %c0_55], %88 {strides = array<i32>} : memref<4x8x8xf32, #tpu.memory_space<vmem>>, vector<1x8x8xf32>,
    %c1_56 = arith.constant 1 : index
    %c0_57 = arith.constant 0 : index
    %c0_58 = arith.constant 0 : index
    %89 = vector.load %arg8[%c1_56, %c0_57, %c0_58] : memref<4x8x1xf32, #tpu.memory_space<vmem>>, vector<1x8x1xf32>
    %90 = vector.shape_cast %89 : vector<1x8x1xf32> to vector<8x1xf32>
    %91 = vector.shape_cast %64 : vector<8x1xf32> to vector<1x8x1xf32>
    tpu.vector_store %arg8[%c1_56, %c0_57, %c0_58], %91 {strides = array<i32>} : memref<4x8x1xf32, #tpu.memory_space<vmem>>, vector<1x8x1xf32>,
    %92 = vector.extract_strided_slice %4 {offsets = [0, 16], sizes = [8, 8], strides = [1, 1]} : vector<8x32xbf16> to vector<8x8xbf16>
    %93 = vector.extract_strided_slice %6 {offsets = [0, 16], sizes = [8, 8], strides = [1, 1]} : vector<8x32xbf16> to vector<8x8xbf16>
    %94 = vector.extract_strided_slice %8 {offsets = [0, 16], sizes = [8, 8], strides = [1, 1]} : vector<8x32xbf16> to vector<8x8xbf16>
    %cst_59 = arith.constant dense<0.000000e+00> : vector<8x8xf32>
    %95 = tpu.matmul %92, %93, %cst_59 {dimension_numbers = #tpu.dot_dimension_numbers<[1], [1], [0], [0], [0, 0, 1, 0], [], []>} : vector<8x8xbf16>, vector<8x8xbf16>, vector<8x8xf32> -> vector<8x8xf32>
    %cst_60 = arith.constant 0.353553385 : f32
    %96 = vector.broadcast %cst_60 : f32 to vector<8x8xf32>
    %97 = arith.mulf %95, %96 : vector<8x8xf32>
    %98 = vector.broadcast %11 : vector<1x8xf32> to vector<8x8xf32>
    %99 = arith.addf %97, %98 : vector<8x8xf32>
    %c2 = arith.constant 2 : index
    %c0_61 = arith.constant 0 : index
    %c0_62 = arith.constant 0 : index
    %100 = vector.load %arg8[%c2, %c0_61, %c0_62] : memref<4x8x1xf32, #tpu.memory_space<vmem>>, vector<1x8x1xf32>
    %101 = vector.shape_cast %100 : vector<1x8x1xf32> to vector<8x1xf32>
    %cst_63 = arith.constant dense<0xFF800000> : vector<8xf32>
    %102 = vector.multi_reduction <maximumf>, %99, %cst_63 [1] : vector<8x8xf32> to vector<8xf32>
    %103 = vector.shape_cast %102 : vector<8xf32> to vector<8x1xf32>
    %104 = arith.maximumf %101, %103 : vector<8x1xf32>
    %105 = arith.subf %101, %104 : vector<8x1xf32>
    %106 = math.exp %105 : vector<8x1xf32>
    %107 = vector.broadcast %104 : vector<8x1xf32> to vector<8x8xf32>
    %108 = arith.subf %99, %107 : vector<8x8xf32>
    %109 = math.exp %108 : vector<8x8xf32>
    %c2_64 = arith.constant 2 : index
    %c0_65 = arith.constant 0 : index
    %c0_66 = arith.constant 0 : index
    %110 = vector.load %arg9[%c2_64, %c0_65, %c0_66] : memref<4x8x1xf32, #tpu.memory_space<vmem>>, vector<1x8x1xf32>
    %111 = vector.shape_cast %110 : vector<1x8x1xf32> to vector<8x1xf32>
    %112 = arith.mulf %106, %111 : vector<8x1xf32>
    %cst_67 = arith.constant dense<0.000000e+00> : vector<8xf32>
    %113 = vector.multi_reduction <add>, %109, %cst_67 [1] : vector<8x8xf32> to vector<8xf32>
    %114 = vector.shape_cast %113 : vector<8xf32> to vector<8x1xf32>
    %115 = arith.addf %112, %114 : vector<8x1xf32>
    %c2_68 = arith.constant 2 : index
    %c0_69 = arith.constant 0 : index
    %c0_70 = arith.constant 0 : index
    %116 = vector.load %arg9[%c2_68, %c0_69, %c0_70] : memref<4x8x1xf32, #tpu.memory_space<vmem>>, vector<1x8x1xf32>
    %117 = vector.shape_cast %116 : vector<1x8x1xf32> to vector<8x1xf32>
    %118 = vector.shape_cast %115 : vector<8x1xf32> to vector<1x8x1xf32>
    tpu.vector_store %arg9[%c2_68, %c0_69, %c0_70], %118 {strides = array<i32>} : memref<4x8x1xf32, #tpu.memory_space<vmem>>, vector<1x8x1xf32>,
    %c2_71 = arith.constant 2 : index
    %c0_72 = arith.constant 0 : index
    %c0_73 = arith.constant 0 : index
    %119 = vector.load %arg10[%c2_71, %c0_72, %c0_73] : memref<4x8x8xf32, #tpu.memory_space<vmem>>, vector<1x8x8xf32>
    %120 = vector.shape_cast %119 : vector<1x8x8xf32> to vector<8x8xf32>
    %121 = vector.broadcast %106 : vector<8x1xf32> to vector<8x8xf32>
    %122 = arith.mulf %121, %120 : vector<8x8xf32>
    %123 = arith.truncf %109 : vector<8x8xf32> to vector<8x8xbf16>
    %cst_74 = arith.constant dense<0.000000e+00> : vector<8x8xf32>
    %124 = tpu.matmul %123, %94, %cst_74 {dimension_numbers = #tpu.dot_dimension_numbers<[1], [0], [0], [1], [0, 0, 1, 1], [], []>} : vector<8x8xbf16>, vector<8x8xbf16>, vector<8x8xf32> -> vector<8x8xf32>
    %125 = arith.addf %122, %124 : vector<8x8xf32>
    %c2_75 = arith.constant 2 : index
    %c0_76 = arith.constant 0 : index
    %c0_77 = arith.constant 0 : index
    %126 = vector.load %arg10[%c2_75, %c0_76, %c0_77] : memref<4x8x8xf32, #tpu.memory_space<vmem>>, vector<1x8x8xf32>
    %127 = vector.shape_cast %126 : vector<1x8x8xf32> to vector<8x8xf32>
    %128 = vector.shape_cast %125 : vector<8x8xf32> to vector<1x8x8xf32>
    tpu.vector_store %arg10[%c2_75, %c0_76, %c0_77], %128 {strides = array<i32>} : memref<4x8x8xf32, #tpu.memory_space<vmem>>, vector<1x8x8xf32>,
    %c2_78 = arith.constant 2 : index
    %c0_79 = arith.constant 0 : index
    %c0_80 = arith.constant 0 : index
    %129 = vector.load %arg8[%c2_78, %c0_79, %c0_80] : memref<4x8x1xf32, #tpu.memory_space<vmem>>, vector<1x8x1xf32>
    %130 = vector.shape_cast %129 : vector<1x8x1xf32> to vector<8x1xf32>
    %131 = vector.shape_cast %104 : vector<8x1xf32> to vector<1x8x1xf32>
    tpu.vector_store %arg8[%c2_78, %c0_79, %c0_80], %131 {strides = array<i32>} : memref<4x8x1xf32, #tpu.memory_space<vmem>>, vector<1x8x1xf32>,
    %132 = vector.extract_strided_slice %4 {offsets = [0, 24], sizes = [8, 8], strides = [1, 1]} : vector<8x32xbf16> to vector<8x8xbf16>
    %133 = vector.extract_strided_slice %6 {offsets = [0, 24], sizes = [8, 8], strides = [1, 1]} : vector<8x32xbf16> to vector<8x8xbf16>
    %134 = vector.extract_strided_slice %8 {offsets = [0, 24], sizes = [8, 8], strides = [1, 1]} : vector<8x32xbf16> to vector<8x8xbf16>
    %cst_81 = arith.constant dense<0.000000e+00> : vector<8x8xf32>
    %135 = tpu.matmul %132, %133, %cst_81 {dimension_numbers = #tpu.dot_dimension_numbers<[1], [1], [0], [0], [0, 0, 1, 0], [], []>} : vector<8x8xbf16>, vector<8x8xbf16>, vector<8x8xf32> -> vector<8x8xf32>
    %cst_82 = arith.constant 0.353553385 : f32
    %136 = vector.broadcast %cst_82 : f32 to vector<8x8xf32>
    %137 = arith.mulf %135, %136 : vector<8x8xf32>
    %138 = vector.broadcast %11 : vector<1x8xf32> to vector<8x8xf32>
    %139 = arith.addf %137, %138 : vector<8x8xf32>
    %c3 = arith.constant 3 : index
    %c0_83 = arith.constant 0 : index
    %c0_84 = arith.constant 0 : index
    %140 = vector.load %arg8[%c3, %c0_83, %c0_84] : memref<4x8x1xf32, #tpu.memory_space<vmem>>, vector<1x8x1xf32>
    %141 = vector.shape_cast %140 : vector<1x8x1xf32> to vector<8x1xf32>
    %cst_85 = arith.constant dense<0xFF800000> : vector<8xf32>
    %142 = vector.multi_reduction <maximumf>, %139, %cst_85 [1] : vector<8x8xf32> to vector<8xf32>
    %143 = vector.shape_cast %142 : vector<8xf32> to vector<8x1xf32>
    %144 = arith.maximumf %141, %143 : vector<8x1xf32>
    %145 = arith.subf %141, %144 : vector<8x1xf32>
    %146 = math.exp %145 : vector<8x1xf32>
    %147 = vector.broadcast %144 : vector<8x1xf32> to vector<8x8xf32>
    %148 = arith.subf %139, %147 : vector<8x8xf32>
    %149 = math.exp %148 : vector<8x8xf32>
    %c3_86 = arith.constant 3 : index
    %c0_87 = arith.constant 0 : index
    %c0_88 = arith.constant 0 : index
    %150 = vector.load %arg9[%c3_86, %c0_87, %c0_88] : memref<4x8x1xf32, #tpu.memory_space<vmem>>, vector<1x8x1xf32>
    %151 = vector.shape_cast %150 : vector<1x8x1xf32> to vector<8x1xf32>
    %152 = arith.mulf %146, %151 : vector<8x1xf32>
    %cst_89 = arith.constant dense<0.000000e+00> : vector<8xf32>
    %153 = vector.multi_reduction <add>, %149, %cst_89 [1] : vector<8x8xf32> to vector<8xf32>
    %154 = vector.shape_cast %153 : vector<8xf32> to vector<8x1xf32>
    %155 = arith.addf %152, %154 : vector<8x1xf32>
    %c3_90 = arith.constant 3 : index
    %c0_91 = arith.constant 0 : index
    %c0_92 = arith.constant 0 : index
    %156 = vector.load %arg9[%c3_90, %c0_91, %c0_92] : memref<4x8x1xf32, #tpu.memory_space<vmem>>, vector<1x8x1xf32>
    %157 = vector.shape_cast %156 : vector<1x8x1xf32> to vector<8x1xf32>
    %158 = vector.shape_cast %155 : vector<8x1xf32> to vector<1x8x1xf32>
    tpu.vector_store %arg9[%c3_90, %c0_91, %c0_92], %158 {strides = array<i32>} : memref<4x8x1xf32, #tpu.memory_space<vmem>>, vector<1x8x1xf32>,
    %c3_93 = arith.constant 3 : index
    %c0_94 = arith.constant 0 : index
    %c0_95 = arith.constant 0 : index
    %159 = vector.load %arg10[%c3_93, %c0_94, %c0_95] : memref<4x8x8xf32, #tpu.memory_space<vmem>>, vector<1x8x8xf32>
    %160 = vector.shape_cast %159 : vector<1x8x8xf32> to vector<8x8xf32>
    %161 = vector.broadcast %146 : vector<8x1xf32> to vector<8x8xf32>
    %162 = arith.mulf %161, %160 : vector<8x8xf32>
    %163 = arith.truncf %149 : vector<8x8xf32> to vector<8x8xbf16>
    %cst_96 = arith.constant dense<0.000000e+00> : vector<8x8xf32>
    %164 = tpu.matmul %163, %134, %cst_96 {dimension_numbers = #tpu.dot_dimension_numbers<[1], [0], [0], [1], [0, 0, 1, 1], [], []>} : vector<8x8xbf16>, vector<8x8xbf16>, vector<8x8xf32> -> vector<8x8xf32>
    %165 = arith.addf %162, %164 : vector<8x8xf32>
    %c3_97 = arith.constant 3 : index
    %c0_98 = arith.constant 0 : index
    %c0_99 = arith.constant 0 : index
    %166 = vector.load %arg10[%c3_97, %c0_98, %c0_99] : memref<4x8x8xf32, #tpu.memory_space<vmem>>, vector<1x8x8xf32>
    %167 = vector.shape_cast %166 : vector<1x8x8xf32> to vector<8x8xf32>
    %168 = vector.shape_cast %165 : vector<8x8xf32> to vector<1x8x8xf32>
    tpu.vector_store %arg10[%c3_97, %c0_98, %c0_99], %168 {strides = array<i32>} : memref<4x8x8xf32, #tpu.memory_space<vmem>>, vector<1x8x8xf32>,
    %c3_100 = arith.constant 3 : index
    %c0_101 = arith.constant 0 : index
    %c0_102 = arith.constant 0 : index
    %169 = vector.load %arg8[%c3_100, %c0_101, %c0_102] : memref<4x8x1xf32, #tpu.memory_space<vmem>>, vector<1x8x1xf32>
    %170 = vector.shape_cast %169 : vector<1x8x1xf32> to vector<8x1xf32>
    %171 = vector.shape_cast %144 : vector<8x1xf32> to vector<1x8x1xf32>
    tpu.vector_store %arg8[%c3_100, %c0_101, %c0_102], %171 {strides = array<i32>} : memref<4x8x1xf32, #tpu.memory_space<vmem>>, vector<1x8x1xf32>,
    %c0_i32_103 = arith.constant 0 : i32
    %172 = arith.cmpi eq, %arg2, %c0_i32_103 : i32
    %173 = arith.extui %172 : i1 to i32
    %c0_i32_104 = arith.constant 0 : i32
    %174 = arith.cmpi ne, %173, %c0_i32_104 : i32
    scf.if %174 {
      %c0_105 = arith.constant 0 : index
      %c0_106 = arith.constant 0 : index
      %c0_107 = arith.constant 0 : index
      %175 = vector.load %arg10[%c0_105, %c0_106, %c0_107] : memref<4x8x8xf32, #tpu.memory_space<vmem>>, vector<1x8x8xf32>
      %176 = vector.shape_cast %175 : vector<1x8x8xf32> to vector<8x8xf32>
      %c0_108 = arith.constant 0 : index
      %c0_109 = arith.constant 0 : index
      %c0_110 = arith.constant 0 : index
      %177 = vector.load %arg9[%c0_108, %c0_109, %c0_110] : memref<4x8x1xf32, #tpu.memory_space<vmem>>, vector<1x8x1xf32>
      %178 = vector.shape_cast %177 : vector<1x8x1xf32> to vector<8x1xf32>
      %179 = tpu.reciprocal %178 {approx = true} : vector<8x1xf32> -> vector<8x1xf32>
      %180 = vector.broadcast %179 : vector<8x1xf32> to vector<8x8xf32>
      %181 = arith.mulf %176, %180 : vector<8x8xf32>
      %c1_111 = arith.constant 1 : index
      %c0_112 = arith.constant 0 : index
      %c0_113 = arith.constant 0 : index
      %182 = vector.load %arg10[%c1_111, %c0_112, %c0_113] : memref<4x8x8xf32, #tpu.memory_space<vmem>>, vector<1x8x8xf32>
      %183 = vector.shape_cast %182 : vector<1x8x8xf32> to vector<8x8xf32>
      %c1_114 = arith.constant 1 : index
      %c0_115 = arith.constant 0 : index
      %c0_116 = arith.constant 0 : index
      %184 = vector.load %arg9[%c1_114, %c0_115, %c0_116] : memref<4x8x1xf32, #tpu.memory_space<vmem>>, vector<1x8x1xf32>
      %185 = vector.shape_cast %184 : vector<1x8x1xf32> to vector<8x1xf32>
      %186 = tpu.reciprocal %185 {approx = true} : vector<8x1xf32> -> vector<8x1xf32>
      %187 = vector.broadcast %186 : vector<8x1xf32> to vector<8x8xf32>
      %188 = arith.mulf %183, %187 : vector<8x8xf32>
      %c2_117 = arith.constant 2 : index
      %c0_118 = arith.constant 0 : index
      %c0_119 = arith.constant 0 : index
      %189 = vector.load %arg10[%c2_117, %c0_118, %c0_119] : memref<4x8x8xf32, #tpu.memory_space<vmem>>, vector<1x8x8xf32>
      %190 = vector.shape_cast %189 : vector<1x8x8xf32> to vector<8x8xf32>
      %c2_120 = arith.constant 2 : index
      %c0_121 = arith.constant 0 : index
      %c0_122 = arith.constant 0 : index
      %191 = vector.load %arg9[%c2_120, %c0_121, %c0_122] : memref<4x8x1xf32, #tpu.memory_space<vmem>>, vector<1x8x1xf32>
      %192 = vector.shape_cast %191 : vector<1x8x1xf32> to vector<8x1xf32>
      %193 = tpu.reciprocal %192 {approx = true} : vector<8x1xf32> -> vector<8x1xf32>
      %194 = vector.broadcast %193 : vector<8x1xf32> to vector<8x8xf32>
      %195 = arith.mulf %190, %194 : vector<8x8xf32>
      %c3_123 = arith.constant 3 : index
      %c0_124 = arith.constant 0 : index
      %c0_125 = arith.constant 0 : index
      %196 = vector.load %arg10[%c3_123, %c0_124, %c0_125] : memref<4x8x8xf32, #tpu.memory_space<vmem>>, vector<1x8x8xf32>
      %197 = vector.shape_cast %196 : vector<1x8x8xf32> to vector<8x8xf32>
      %c3_126 = arith.constant 3 : index
      %c0_127 = arith.constant 0 : index
      %c0_128 = arith.constant 0 : index
      %198 = vector.load %arg9[%c3_126, %c0_127, %c0_128] : memref<4x8x1xf32, #tpu.memory_space<vmem>>, vector<1x8x1xf32>
      %199 = vector.shape_cast %198 : vector<1x8x1xf32> to vector<8x1xf32>
      %200 = tpu.reciprocal %199 {approx = true} : vector<8x1xf32> -> vector<8x1xf32>
      %201 = vector.broadcast %200 : vector<8x1xf32> to vector<8x8xf32>
      %202 = arith.mulf %197, %201 : vector<8x8xf32>
      %203 = tpu.concatenate %181, %188, %195, %202 in 1 : vector<8x8xf32>, vector<8x8xf32>, vector<8x8xf32>, vector<8x8xf32> -> vector<8x32xf32>
      %204 = arith.truncf %203 : vector<8x32xf32> to vector<8x32xbf16>
      %c0_129 = arith.constant 0 : index
      %c0_130 = arith.constant 0 : index
      %c0_131 = arith.constant 0 : index
      %205 = vector.load %arg7[%c0_129, %c0_130, %c0_131] : memref<1x8x32xbf16, #tpu.memory_space<vmem>>, vector<1x8x32xbf16>
      %206 = vector.shape_cast %205 : vector<1x8x32xbf16> to vector<8x32xbf16>
      %207 = vector.shape_cast %204 : vector<8x32xbf16> to vector<1x8x32xbf16>
      tpu.vector_store %arg7[%c0_129, %c0_130, %c0_131], %207 {strides = array<i32>} : memref<1x8x32xbf16, #tpu.memory_space<vmem>>, vector<1x8x32xbf16>,
    } else {
    }
    return
  }
  func.func @transform_0(%arg0: i32, %arg1: i32, %arg2: i32) -> (i32, i32, i32, i32) {
    %c0_i32 = arith.constant 0 : i32
    %c0_i32_0 = arith.constant 0 : i32
    %c0_i32_1 = arith.constant 0 : i32
    return %c0_i32, %arg0, %arg1, %c0_i32_0 : i32, i32, i32, i32
  }
  func.func @transform_1(%arg0: i32, %arg1: i32, %arg2: i32) -> (i32, i32, i32, i32) {
    %c0_i32 = arith.constant 0 : i32
    %c0_i32_0 = arith.constant 0 : i32
    %c0_i32_1 = arith.constant 0 : i32
    return %c0_i32, %arg0, %arg2, %c0_i32_0 : i32, i32, i32, i32
  }
  func.func @transform_2(%arg0: i32, %arg1: i32, %arg2: i32) -> (i32, i32, i32, i32) {
    %c1_i32 = arith.constant 1 : i32
    %c0_i32 = arith.constant 0 : i32
    %c0_i32_0 = arith.constant 0 : i32
    return %c1_i32, %arg0, %arg2, %c0_i32 : i32, i32, i32, i32
  }
  func.func @transform_3(%arg0: i32, %arg1: i32, %arg2: i32) -> (i32, i32, i32) {
    %c0_i32 = arith.constant 0 : i32
    %c0_i32_0 = arith.constant 0 : i32
    return %arg0, %c0_i32, %arg2 : i32, i32, i32
  }
  func.func @transform_4(%arg0: i32, %arg1: i32, %arg2: i32) -> (i32, i32, i32) {
    %c0_i32 = arith.constant 0 : i32
    %c0_i32_0 = arith.constant 0 : i32
    return %arg0, %arg1, %c0_i32 : i32, i32, i32
  }
}

module attributes {stable_mosaic.version = 11 : i64} {
  func.func @_ffn_fused_kernel(%arg0: i32, %arg1: i32, %arg2: memref<16x32xbf16, #tpu.memory_space<vmem>>, %arg3: memref<32x64xbf16, #tpu.memory_space<vmem>>, %arg4: memref<1x64xf32, #tpu.memory_space<vmem>>, %arg5: memref<64x32xbf16, #tpu.memory_space<vmem>>, %arg6: memref<1x32xf32, #tpu.memory_space<vmem>>, %arg7: memref<1x32xf32, #tpu.memory_space<vmem>>, %arg8: memref<1x32xf32, #tpu.memory_space<vmem>>, %arg9: memref<16x32xbf16, #tpu.memory_space<vmem>>, %arg10: memref<16x32xf32, #tpu.memory_space<vmem>>) attributes {dimension_semantics = [#tpu.dimension_semantics<parallel>, #tpu.dimension_semantics<arbitrary>], iteration_bounds = array<i64: 1, 1>, scalar_prefetch = 0 : i64, scratch_operands = 1 : i64, tpu.core_type = #tpu.core_type<tc>, window_params = [{transform_indices = @transform_0, window_bounds = array<i64: 16, 32>}, {transform_indices = @transform_1, window_bounds = array<i64: 32, 64>}, {transform_indices = @transform_2, window_bounds = array<i64: 1, 64>}, {transform_indices = @transform_3, window_bounds = array<i64: 64, 32>}, {pipeline_mode = #tpu.pipeline_mode<synchronous>, transform_indices = @transform_4, window_bounds = array<i64: 1, 32>}, {pipeline_mode = #tpu.pipeline_mode<synchronous>, transform_indices = @transform_5, window_bounds = array<i64: 1, 32>}, {pipeline_mode = #tpu.pipeline_mode<synchronous>, transform_indices = @transform_6, window_bounds = array<i64: 1, 32>}, {transform_indices = @transform_7, window_bounds = array<i64: 16, 32>}]} {
    %c0_i32 = arith.constant 0 : i32
    %0 = arith.cmpi eq, %arg1, %c0_i32 : i32
    %1 = arith.extui %0 : i1 to i32
    %c0_i32_0 = arith.constant 0 : i32
    %2 = arith.cmpi ne, %1, %c0_i32_0 : i32
    scf.if %2 {
      %cst_16 = arith.constant 0.000000e+00 : f32
      %20 = vector.broadcast %cst_16 : f32 to vector<16x32xf32>
      %c0_17 = arith.constant 0 : index
      %c0_18 = arith.constant 0 : index
      %21 = vector.load %arg10[%c0_17, %c0_18] : memref<16x32xf32, #tpu.memory_space<vmem>>, vector<16x32xf32>
      tpu.vector_store %arg10[%c0_17, %c0_18], %20 {strides = array<i32>} : memref<16x32xf32, #tpu.memory_space<vmem>>, vector<16x32xf32>,
    } else {
    }
    %c0 = arith.constant 0 : index
    %c0_1 = arith.constant 0 : index
    %3 = vector.load %arg2[%c0, %c0_1] : memref<16x32xbf16, #tpu.memory_space<vmem>>, vector<16x32xbf16>
    %c0_2 = arith.constant 0 : index
    %c0_3 = arith.constant 0 : index
    %4 = vector.load %arg3[%c0_2, %c0_3] : memref<32x64xbf16, #tpu.memory_space<vmem>>, vector<32x64xbf16>
    %cst = arith.constant dense<0.000000e+00> : vector<16x64xf32>
    %5 = tpu.matmul %3, %4, %cst {dimension_numbers = #tpu.dot_dimension_numbers<[1], [0], [0], [1], [0, 0, 1, 1], [], []>} : vector<16x32xbf16>, vector<32x64xbf16>, vector<16x64xf32> -> vector<16x64xf32>
    %c0_4 = arith.constant 0 : index
    %c0_5 = arith.constant 0 : index
    %6 = vector.load %arg4[%c0_4, %c0_5] : memref<1x64xf32, #tpu.memory_space<vmem>>, vector<1x64xf32>
    %7 = vector.broadcast %6 : vector<1x64xf32> to vector<16x64xf32>
    %8 = arith.addf %5, %7 : vector<16x64xf32>
    %cst_6 = arith.constant 0.000000e+00 : f32
    %9 = vector.broadcast %cst_6 : f32 to vector<16x64xf32>
    %10 = arith.maximumf %8, %9 : vector<16x64xf32>
    %11 = arith.truncf %10 : vector<16x64xf32> to vector<16x64xbf16>
    %c0_7 = arith.constant 0 : index
    %c0_8 = arith.constant 0 : index
    %12 = vector.load %arg10[%c0_7, %c0_8] : memref<16x32xf32, #tpu.memory_space<vmem>>, vector<16x32xf32>
    %c0_9 = arith.constant 0 : index
    %c0_10 = arith.constant 0 : index
    %13 = vector.load %arg5[%c0_9, %c0_10] : memref<64x32xbf16, #tpu.memory_space<vmem>>, vector<64x32xbf16>
    %cst_11 = arith.constant dense<0.000000e+00> : vector<16x32xf32>
    %14 = tpu.matmul %11, %13, %cst_11 {dimension_numbers = #tpu.dot_dimension_numbers<[1], [0], [0], [1], [0, 0, 1, 1], [], []>} : vector<16x64xbf16>, vector<64x32xbf16>, vector<16x32xf32> -> vector<16x32xf32>
    %15 = arith.addf %12, %14 : vector<16x32xf32>
    %c0_12 = arith.constant 0 : index
    %c0_13 = arith.constant 0 : index
    %16 = vector.load %arg10[%c0_12, %c0_13] : memref<16x32xf32, #tpu.memory_space<vmem>>, vector<16x32xf32>
    tpu.vector_store %arg10[%c0_12, %c0_13], %15 {strides = array<i32>} : memref<16x32xf32, #tpu.memory_space<vmem>>, vector<16x32xf32>,
    %c0_i32_14 = arith.constant 0 : i32
    %17 = arith.cmpi eq, %arg1, %c0_i32_14 : i32
    %18 = arith.extui %17 : i1 to i32
    %c0_i32_15 = arith.constant 0 : i32
    %19 = arith.cmpi ne, %18, %c0_i32_15 : i32
    scf.if %19 {
      %c0_16 = arith.constant 0 : index
      %c0_17 = arith.constant 0 : index
      %20 = vector.load %arg10[%c0_16, %c0_17] : memref<16x32xf32, #tpu.memory_space<vmem>>, vector<16x32xf32>
      %c0_18 = arith.constant 0 : index
      %c0_19 = arith.constant 0 : index
      %21 = vector.load %arg6[%c0_18, %c0_19] : memref<1x32xf32, #tpu.memory_space<vmem>>, vector<1x32xf32>
      %22 = vector.broadcast %21 : vector<1x32xf32> to vector<16x32xf32>
      %23 = arith.addf %20, %22 : vector<16x32xf32>
      %c0_20 = arith.constant 0 : index
      %c0_21 = arith.constant 0 : index
      %24 = vector.load %arg2[%c0_20, %c0_21] : memref<16x32xbf16, #tpu.memory_space<vmem>>, vector<16x32xbf16>
      %25 = arith.extf %24 : vector<16x32xbf16> to vector<16x32xf32>
      %26 = arith.addf %23, %25 : vector<16x32xf32>
      %cst_22 = arith.constant dense<0.000000e+00> : vector<16xf32>
      %27 = vector.multi_reduction <add>, %26, %cst_22 [1] : vector<16x32xf32> to vector<16xf32>
      %28 = vector.shape_cast %27 : vector<16xf32> to vector<16x1xf32>
      %cst_23 = arith.constant 3.200000e+01 : f32
      %29 = vector.broadcast %cst_23 : f32 to vector<16x1xf32>
      %30 = arith.divf %28, %29 : vector<16x1xf32>
      %31 = vector.broadcast %30 : vector<16x1xf32> to vector<16x32xf32>
      %32 = arith.subf %26, %31 : vector<16x32xf32>
      %33 = vector.broadcast %30 : vector<16x1xf32> to vector<16x32xf32>
      %34 = arith.subf %26, %33 : vector<16x32xf32>
      %35 = arith.mulf %32, %34 : vector<16x32xf32>
      %cst_24 = arith.constant dense<0.000000e+00> : vector<16xf32>
      %36 = vector.multi_reduction <add>, %35, %cst_24 [1] : vector<16x32xf32> to vector<16xf32>
      %37 = vector.shape_cast %36 : vector<16xf32> to vector<16x1xf32>
      %cst_25 = arith.constant 3.200000e+01 : f32
      %38 = vector.broadcast %cst_25 : f32 to vector<16x1xf32>
      %39 = arith.divf %37, %38 : vector<16x1xf32>
      %40 = vector.broadcast %30 : vector<16x1xf32> to vector<16x32xf32>
      %41 = arith.subf %26, %40 : vector<16x32xf32>
      %cst_26 = arith.constant 9.99999974E-6 : f32
      %42 = vector.broadcast %cst_26 : f32 to vector<16x1xf32>
      %43 = arith.addf %39, %42 : vector<16x1xf32>
      %44 = math.rsqrt %43 : vector<16x1xf32>
      %45 = vector.broadcast %44 : vector<16x1xf32> to vector<16x32xf32>
      %46 = arith.mulf %41, %45 : vector<16x32xf32>
      %c0_27 = arith.constant 0 : index
      %c0_28 = arith.constant 0 : index
      %47 = vector.load %arg7[%c0_27, %c0_28] : memref<1x32xf32, #tpu.memory_space<vmem>>, vector<1x32xf32>
      %48 = vector.broadcast %47 : vector<1x32xf32> to vector<16x32xf32>
      %49 = arith.mulf %46, %48 : vector<16x32xf32>
      %c0_29 = arith.constant 0 : index
      %c0_30 = arith.constant 0 : index
      %50 = vector.load %arg8[%c0_29, %c0_30] : memref<1x32xf32, #tpu.memory_space<vmem>>, vector<1x32xf32>
      %51 = vector.broadcast %50 : vector<1x32xf32> to vector<16x32xf32>
      %52 = arith.addf %49, %51 : vector<16x32xf32>
      %53 = arith.truncf %52 : vector<16x32xf32> to vector<16x32xbf16>
      %c0_31 = arith.constant 0 : index
      %c0_32 = arith.constant 0 : index
      %54 = vector.load %arg9[%c0_31, %c0_32] : memref<16x32xbf16, #tpu.memory_space<vmem>>, vector<16x32xbf16>
      tpu.vector_store %arg9[%c0_31, %c0_32], %53 {strides = array<i32>} : memref<16x32xbf16, #tpu.memory_space<vmem>>, vector<16x32xbf16>,
    } else {
    }
    return
  }
  func.func @transform_0(%arg0: i32, %arg1: i32) -> (i32, i32) {
    %c0_i32 = arith.constant 0 : i32
    %c0_i32_0 = arith.constant 0 : i32
    return %arg0, %c0_i32 : i32, i32
  }
  func.func @transform_1(%arg0: i32, %arg1: i32) -> (i32, i32) {
    %c0_i32 = arith.constant 0 : i32
    %c0_i32_0 = arith.constant 0 : i32
    return %c0_i32, %arg1 : i32, i32
  }
  func.func @transform_2(%arg0: i32, %arg1: i32) -> (i32, i32) {
    %c0_i32 = arith.constant 0 : i32
    %c0_i32_0 = arith.constant 0 : i32
    return %c0_i32, %arg1 : i32, i32
  }
  func.func @transform_3(%arg0: i32, %arg1: i32) -> (i32, i32) {
    %c0_i32 = arith.constant 0 : i32
    %c0_i32_0 = arith.constant 0 : i32
    return %arg1, %c0_i32 : i32, i32
  }
  func.func @transform_4(%arg0: i32, %arg1: i32) -> (i32, i32) {
    %c0_i32 = arith.constant 0 : i32
    %c0_i32_0 = arith.constant 0 : i32
    %c0_i32_1 = arith.constant 0 : i32
    return %c0_i32, %c0_i32_0 : i32, i32
  }
  func.func @transform_5(%arg0: i32, %arg1: i32) -> (i32, i32) {
    %c0_i32 = arith.constant 0 : i32
    %c0_i32_0 = arith.constant 0 : i32
    %c0_i32_1 = arith.constant 0 : i32
    return %c0_i32, %c0_i32_0 : i32, i32
  }
  func.func @transform_6(%arg0: i32, %arg1: i32) -> (i32, i32) {
    %c0_i32 = arith.constant 0 : i32
    %c0_i32_0 = arith.constant 0 : i32
    %c0_i32_1 = arith.constant 0 : i32
    return %c0_i32, %c0_i32_0 : i32, i32
  }
  func.func @transform_7(%arg0: i32, %arg1: i32) -> (i32, i32) {
    %c0_i32 = arith.constant 0 : i32
    %c0_i32_0 = arith.constant 0 : i32
    return %arg0, %c0_i32 : i32, i32
  }
}

module attributes {stable_mosaic.version = 11 : i64} {
  func.func @_matmul_bias_kernel(%arg0: i32, %arg1: i32, %arg2: i32, %arg3: memref<16x32xbf16, #tpu.memory_space<vmem>>, %arg4: memref<32x128xbf16, #tpu.memory_space<vmem>>, %arg5: memref<1x128xf32, #tpu.memory_space<vmem>>, %arg6: memref<16x128xf32, #tpu.memory_space<vmem>>, %arg7: memref<16x128xf32, #tpu.memory_space<vmem>>) attributes {dimension_semantics = [#tpu.dimension_semantics<parallel>, #tpu.dimension_semantics<parallel>, #tpu.dimension_semantics<arbitrary>], iteration_bounds = array<i64: 1, 1, 1>, scalar_prefetch = 0 : i64, scratch_operands = 1 : i64, tpu.core_type = #tpu.core_type<tc>, window_params = [{transform_indices = @transform_0, window_bounds = array<i64: 16, 32>}, {transform_indices = @transform_1, window_bounds = array<i64: 32, 128>}, {transform_indices = @transform_2, window_bounds = array<i64: 1, 128>}, {transform_indices = @transform_3, window_bounds = array<i64: 16, 128>}]} {
    %c0_i32 = arith.constant 0 : i32
    %0 = arith.cmpi eq, %arg2, %c0_i32 : i32
    %1 = arith.extui %0 : i1 to i32
    %c0_i32_0 = arith.constant 0 : i32
    %2 = arith.cmpi ne, %1, %c0_i32_0 : i32
    scf.if %2 {
      %cst_10 = arith.constant 0.000000e+00 : f32
      %12 = vector.broadcast %cst_10 : f32 to vector<16x128xf32>
      %c0_11 = arith.constant 0 : index
      %c0_12 = arith.constant 0 : index
      %13 = vector.load %arg7[%c0_11, %c0_12] : memref<16x128xf32, #tpu.memory_space<vmem>>, vector<16x128xf32>
      tpu.vector_store %arg7[%c0_11, %c0_12], %12 {strides = array<i32>} : memref<16x128xf32, #tpu.memory_space<vmem>>, vector<16x128xf32>,
    } else {
    }
    %c0 = arith.constant 0 : index
    %c0_1 = arith.constant 0 : index
    %3 = vector.load %arg7[%c0, %c0_1] : memref<16x128xf32, #tpu.memory_space<vmem>>, vector<16x128xf32>
    %c0_2 = arith.constant 0 : index
    %c0_3 = arith.constant 0 : index
    %4 = vector.load %arg3[%c0_2, %c0_3] : memref<16x32xbf16, #tpu.memory_space<vmem>>, vector<16x32xbf16>
    %c0_4 = arith.constant 0 : index
    %c0_5 = arith.constant 0 : index
    %5 = vector.load %arg4[%c0_4, %c0_5] : memref<32x128xbf16, #tpu.memory_space<vmem>>, vector<32x128xbf16>
    %cst = arith.constant dense<0.000000e+00> : vector<16x128xf32>
    %6 = tpu.matmul %4, %5, %cst {dimension_numbers = #tpu.dot_dimension_numbers<[1], [0], [0], [1], [0, 0, 1, 1], [], []>} : vector<16x32xbf16>, vector<32x128xbf16>, vector<16x128xf32> -> vector<16x128xf32>
    %7 = arith.addf %3, %6 : vector<16x128xf32>
    %c0_6 = arith.constant 0 : index
    %c0_7 = arith.constant 0 : index
    %8 = vector.load %arg7[%c0_6, %c0_7] : memref<16x128xf32, #tpu.memory_space<vmem>>, vector<16x128xf32>
    tpu.vector_store %arg7[%c0_6, %c0_7], %7 {strides = array<i32>} : memref<16x128xf32, #tpu.memory_space<vmem>>, vector<16x128xf32>,
    %c0_i32_8 = arith.constant 0 : i32
    %9 = arith.cmpi eq, %arg2, %c0_i32_8 : i32
    %10 = arith.extui %9 : i1 to i32
    %c0_i32_9 = arith.constant 0 : i32
    %11 = arith.cmpi ne, %10, %c0_i32_9 : i32
    scf.if %11 {
      %c0_10 = arith.constant 0 : index
      %c0_11 = arith.constant 0 : index
      %12 = vector.load %arg7[%c0_10, %c0_11] : memref<16x128xf32, #tpu.memory_space<vmem>>, vector<16x128xf32>
      %c0_12 = arith.constant 0 : index
      %c0_13 = arith.constant 0 : index
      %13 = vector.load %arg5[%c0_12, %c0_13] : memref<1x128xf32, #tpu.memory_space<vmem>>, vector<1x128xf32>
      %14 = vector.broadcast %13 : vector<1x128xf32> to vector<16x128xf32>
      %15 = arith.addf %12, %14 : vector<16x128xf32>
      %c0_14 = arith.constant 0 : index
      %c0_15 = arith.constant 0 : index
      %16 = vector.load %arg6[%c0_14, %c0_15] : memref<16x128xf32, #tpu.memory_space<vmem>>, vector<16x128xf32>
      tpu.vector_store %arg6[%c0_14, %c0_15], %15 {strides = array<i32>} : memref<16x128xf32, #tpu.memory_space<vmem>>, vector<16x128xf32>,
    } else {
    }
    return
  }
  func.func @transform_0(%arg0: i32, %arg1: i32, %arg2: i32) -> (i32, i32) {
    %c0_i32 = arith.constant 0 : i32
    return %arg0, %arg2 : i32, i32
  }
  func.func @transform_1(%arg0: i32, %arg1: i32, %arg2: i32) -> (i32, i32) {
    %c0_i32 = arith.constant 0 : i32
    return %arg2, %arg1 : i32, i32
  }
  func.func @transform_2(%arg0: i32, %arg1: i32, %arg2: i32) -> (i32, i32) {
    %c0_i32 = arith.constant 0 : i32
    %c0_i32_0 = arith.constant 0 : i32
    return %c0_i32, %arg1 : i32, i32
  }
  func.func @transform_3(%arg0: i32, %arg1: i32, %arg2: i32) -> (i32, i32) {
    %c0_i32 = arith.constant 0 : i32
    return %arg0, %arg1 : i32, i32
  }
}

</mosaic_0001>

<llo_original>
// kernel: decoder_forward.19
$region0: #{decoder_forward.19}
  #allocation0 [shape = 'u32[]', space=smem, size = 0x4, offset = 0x4, fixed_abs, tag = 'smem constant byte address 0x4 - core index']
  #allocation1 [shape = 'u32[72,128]{1,0:T(1,128)}', space=vmem, size = 0x9000, scoped, tag = 'internal scratch']
  #allocation2 [shape = 'f32[16,32]{1,0:T(8,128)}', space=vmem, size = 0x2000, scoped, tag = 'scratch operand']
  %s0 = inlined_call_operand.vmem [shape: bf16[16,32], index: 0, kind: input, shape index: {}]
  %s1 = inlined_call_operand.vmem [shape: bf16[32,32], index: 1, kind: input, shape index: {}]
  %s2 = inlined_call_operand.vmem [shape: f32[1,32], index: 2, kind: input, shape index: {}]
  %s3 = inlined_call_operand.vmem [shape: bf16[16,32], index: 3, kind: input, shape index: {}]
  %s4 = inlined_call_operand.vmem [shape: f32[1,32], index: 4, kind: input, shape index: {}]
  %s5 = inlined_call_operand.vmem [shape: f32[1,32], index: 5, kind: input, shape index: {}]
  %s6 = inlined_call_operand.vmem [shape: bf16[16,32], index: 6, kind: output, shape index: {}]
  %s7 = sld [smem:[#allocation0]]
  $region42: #{decoder_forward.19} parent=0
    _
  %s9 = ssub.s32 1, %s7
  %s10 = scalar_select 0, %s9, %s7
  // Predicated region
  $region2: #{decoder_forward.19} parent=0 // pred_check
    _
  $region3: #{decoder_forward.19} parent=0 // pred_check_branch
    %12 = sbr.rel (0) target = $region5
  $region4: #{decoder_forward.19} parent=0 // pred_region
    _
  $region5: #{decoder_forward.19} parent=0 // pred_fallthru
    _
  // Predicated region
  $region6: #{decoder_forward.19} parent=0 // pred_check
    _
  $region7: #{decoder_forward.19} parent=0 // pred_check_branch
    %14 = sbr.rel (0) target = $region9
  $region8: #{decoder_forward.19} parent=0 // pred_region
    _
  $region9: #{decoder_forward.19} parent=0 // pred_fallthru
    _
  // Predicated region
  $region10: #{decoder_forward.19} parent=0 // pred_check
    _
  $region11: #{decoder_forward.19} parent=0 // pred_check_branch
    %16 = sbr.rel (0) target = $region13
  $region12: #{decoder_forward.19} parent=0 // pred_region
    _
  $region13: #{decoder_forward.19} parent=0 // pred_fallthru
    _
  // Predicated region
  $region14: #{decoder_forward.19} parent=0 // pred_check
    _
  $region15: #{decoder_forward.19} parent=0 // pred_check_branch
    %18 = sbr.rel (0) target = $region17
  $region16: #{decoder_forward.19} parent=0 // pred_region
    _
  $region17: #{decoder_forward.19} parent=0 // pred_fallthru
    _
  // Predicated region
  $region18: #{decoder_forward.19} parent=0 // pred_check
    _
  $region19: #{decoder_forward.19} parent=0 // pred_check_branch
    %20 = sbr.rel (0) target = $region21
  $region20: #{decoder_forward.19} parent=0 // pred_region
    _
  $region21: #{decoder_forward.19} parent=0 // pred_fallthru
    _
  // Predicated region
  $region22: #{decoder_forward.19} parent=0 // pred_check
    _
  $region23: #{decoder_forward.19} parent=0 // pred_check_branch
    %22 = sbr.rel (0) target = $region25
  $region24: #{decoder_forward.19} parent=0 // pred_region
    _
  $region25: #{decoder_forward.19} parent=0 // pred_fallthru
    _
  %p24 = scmp.eq.s32.totalorder 0, 0
  // Predicated region
  $region26: #{decoder_forward.19} parent=0 // pred_check
    %p25 = pneg %p24
  $region27: #{decoder_forward.19} parent=0 // pred_check_branch
    %27 = sbr.rel (%p25) target = $region29
  $region28: #{decoder_forward.19} parent=0 // pred_region
    %vm28 = vcmask 261120
    %29 = vst.msk [vmem:[#allocation2] sm:$0xff] %vm28, 0.0
    %30 = vst.msk [vmem:[#allocation2 + $0x8] sm:$0xff] %vm28, 0.0
  $region29: #{decoder_forward.19} parent=0 // pred_fallthru
    _
  %v31 = vld [vmem:[#allocation2] sm:$0xff]
  %v32 = vld [vmem:[#allocation2 + $0x8] sm:$0xff]
  %v33 = vld [vmem:[%s0] sm:$0xf]
  %v34 = vld [vmem:[%s0 + $0x4] sm:$0xf]
  %v35 = vld [vmem:[%s1] sm:$0xf]
  %v36 = vld [vmem:[%s1 + $0x4] sm:$0xf]
  %v37 = vld [vmem:[%s1 + $0x8] sm:$0xf]
  %v38 = vld [vmem:[%s1 + $0xc] sm:$0xf]
  %v41 = vunpack.c.l.b16 %v33
  %v42 = vunpack.c.l.b16 %v34
  %v43 = vpack.c.b16 %v42, %v41
  %v48 = vunpack.c.l.b16 %v35
  %v49 = vunpack.c.l.b16 %v36
  %v50 = vunpack.c.l.b16 %v37
  %v51 = vunpack.c.l.b16 %v38
  %v52 = vpack.c.b16 %v49, %v48
  %v53 = vpack.c.b16 %v51, %v50
  %vm56 = vcmask 261120
  %v58 = vsel %vm56, %v43, 0
  %60 = vmatpush.bf16.msra.mxu0 0
  %61 = vmatpush.bf16.msra.mxu0 0
  %62 = vmatpush.bf16.msra.mxu0 0
  %63 = vmatpush.bf16.msra.mxu0 0
  %64 = vmatpush.bf16.msra.mxu0 0
  %65 = vmatpush.bf16.msra.mxu0 0
  %66 = vmatpush.bf16.msra.mxu0 %v53
  %67 = vmatpush.bf16.msra.mxu0 %v52
  %68 = vmatmul.bf16.gmra.mxu0 %v58
  %v69 = vpop.f32.mrf.mxu0
  %v70 = vadd.f32 0.0, %v69
  %v71 = vpop.f32.mrf.mxu0
  %v72 = vadd.f32 0.0, %v71
  %73 = vdwg.mxu0
  %v74 = vadd.f32 %v31, %v70
  %v75 = vadd.f32 %v32, %v72
  %76 = vst.msk [vmem:[#allocation2] sm:$0xff] %vm56, %v74
  %77 = vst.msk [vmem:[#allocation2 + $0x8] sm:$0xff] %vm56, %v75
  // Predicated region
  $region30: #{decoder_forward.19} parent=0 // pred_check
    %p78 = pneg %p24
  $region31: #{decoder_forward.19} parent=0 // pred_check_branch
    %80 = sbr.rel (%p78) target = $region33
  $region32: #{decoder_forward.19} parent=0 // pred_region
    %v81 = vld [vmem:[#allocation2] sm:$0xff]
    %v82 = vld [vmem:[#allocation2 + $0x8] sm:$0xff]
    %v83 = vld [vmem:[%s2] sm:$0x1]
    %v85 = vperm.slane %v83, 0
    %v87 = vadd.f32 %v81, %v85
    %v88 = vadd.f32 %v82, %v85
    %v89 = vld [vmem:[%s3] sm:$0xf]
    %v90 = vld [vmem:[%s3 + $0x4] sm:$0xf]
    %v91 = vunpack.c.l.bf16 %v89
    %v92 = vunpack.c.l.bf16 %v90
    %v93 = vadd.f32 %v87, %v91
    %v94 = vadd.f32 %v88, %v92
    %v95 = vsel %vm56, %v93, 0.0
    %96 = vadd.xlane.f32.xlu0 %v95
    %v97 = vpop.xlane.xlu0 %96
    %v98 = vsel %vm56, %v94, 0.0
    %99 = vadd.xlane.f32.xlu0 %v98
    %v100 = vpop.xlane.xlu0 %99
    %v101 = vrcp.pop 32.0
    %v102 = vmul.f32 32.0, %v101
    %v103 = vsub.f32 1.0, %v102
    %v104 = vmul.f32 %v101, %v103
    %v105 = vadd.f32 %v101, %v104
    %vm106 = vweird.f32 %v101
    %v107 = vsel %vm106, %v101, %v105
    %v108 = vmul.f32 %v97, %v107
    %v109 = vmul.f32 %v100, %v107
    %v110 = vsub.f32 %v93, %v108
    %v111 = vsub.f32 %v94, %v109
    %v112 = vmul.f32 %v110, %v110
    %v113 = vmul.f32 %v111, %v111
    %v114 = vsel %vm56, %v112, 0.0
    %115 = vadd.xlane.f32.xlu0 %v114
    %v116 = vpop.xlane.xlu0 %115
    %v117 = vsel %vm56, %v113, 0.0
    %118 = vadd.xlane.f32.xlu0 %v117
    %v119 = vpop.xlane.xlu0 %118
    %v120 = vmul.f32 %v116, %v107
    %v121 = vmul.f32 %v119, %v107
    %v122 = vadd.f32 %v120, 1e-05
    %v123 = vadd.f32 %v121, 1e-05
    %v124 = vrsqrt.pop %v122
    %v125 = vmul.f32 %v124, %v122
    %v126 = vmul.f32 %v125, %v124
    %v127 = vmul.f32 0.5, %v126
    %v128 = vsub.f32 1.5, %v127
    %v129 = vmul.f32 %v124, %v128
    %vm130 = vweird.f32 %v122
    %vm131 = vweird.f32 %v124
    %vm132 = vmor %vm130, %vm131
    %v133 = vsel %vm132, %v124, %v129
    %v134 = vrsqrt.pop %v123
    %v135 = vmul.f32 %v134, %v123
    %v136 = vmul.f32 %v135, %v134
    %v137 = vmul.f32 0.5, %v136
    %v138 = vsub.f32 1.5, %v137
    %v139 = vmul.f32 %v134, %v138
    %vm140 = vweird.f32 %v123
    %vm141 = vweird.f32 %v134
    %vm142 = vmor %vm140, %vm141
    %v143 = vsel %vm142, %v134, %v139
    %v144 = vmul.f32 %v110, %v133
    %v145 = vmul.f32 %v111, %v143
    %v146 = vld [vmem:[%s4] sm:$0x1]
    %v148 = vperm.slane %v146, 0
    %v150 = vmul.f32 %v144, %v148
    %v151 = vmul.f32 %v145, %v148
    %v152 = vld [vmem:[%s5] sm:$0x1]
    %v154 = vperm.slane %v152, 0
    %v156 = vadd.f32 %v150, %v154
    %v157 = vadd.f32 %v151, %v154
    %v158 = vpack.c.bf16 %v156, %v156
    %v159 = vpack.c.bf16 %v157, %v157
    %vm160 = vcmask 257024
    %161 = vst.msk [vmem:[%s6] sm:$0xf] %vm160, %v158
    %162 = vst.msk [vmem:[%s6 + $0x4] sm:$0xf] %vm160, %v159
  $region33: #{decoder_forward.19} parent=0 // pred_fallthru
    _
  // Predicated region
  $region34: #{decoder_forward.19} parent=0 // pred_check
    _
  $region35: #{decoder_forward.19} parent=0 // pred_check_branch
    %164 = sbr.rel (0) target = $region37
  $region36: #{decoder_forward.19} parent=0 // pred_region
    _
  $region37: #{decoder_forward.19} parent=0 // pred_fallthru
    _
  // Predicated region
  $region38: #{decoder_forward.19} parent=0 // pred_check
    _
  $region39: #{decoder_forward.19} parent=0 // pred_check_branch
    %166 = sbr.rel (0) target = $region41
  $region40: #{decoder_forward.19} parent=0 // pred_region
    _
  $region41: #{decoder_forward.19} parent=0 // pred_fallthru
    _

// kernel: decoder_forward.17
$region0: #{decoder_forward.17}
  #allocation0 [shape = 'u32[]', space=smem, size = 0x4, offset = 0x4, fixed_abs, tag = 'smem constant byte address 0x4 - core index']
  #allocation1 [shape = 'u32[72,128]{1,0:T(1,128)}', space=vmem, size = 0x9000, scoped, tag = 'internal scratch']
  #allocation2 [shape = 'f32[16,32]{1,0:T(8,128)}', space=vmem, size = 0x2000, scoped, tag = 'scratch operand']
  %s0 = inlined_call_operand.vmem [shape: bf16[16,32], index: 0, kind: input, shape index: {}]
  %s1 = inlined_call_operand.vmem [shape: bf16[3,32,32], index: 1, kind: input, shape index: {}]
  %s2 = inlined_call_operand.vmem [shape: f32[3,1,32], index: 2, kind: input, shape index: {}]
  %s3 = inlined_call_operand.vmem [shape: bf16[3,16,32], index: 3, kind: output, shape index: {}]
  %s4 = sld [smem:[#allocation0]]
  $region53: #{decoder_forward.17} parent=0
    _
  %s6 = ssub.s32 1, %s4
  %s7 = scalar_select 0, %s6, %s4
  loop: start=0, step=1, limit=5
  $region2: #{decoder_forward.17} parent=0 // loop_pre_header
    _
  $region3: #{decoder_forward.17} parent=0 // loop_header
    %s9 = sphi 0, %s13
    %p10 = scmp.ge.s32.totalorder %s9, 5
    %s16 = sphi 0, %s42
    %s17 = sphi 0, %s38
    %s18 = sphi 0, %s34
    %s19 = sphi 0, %s30
    %s20 = sphi 0, %s16
    %s21 = sphi 0, %s17
    %s22 = sphi 0, %s18
    %s23 = sphi 0, %s19
    %s24 = sphi 0, %s20
    %s25 = sphi 0, %s21
    %s26 = sphi 0, %s22
    %s27 = sphi 0, %s23
    %s47 = sphi 0, %s49
    %s50 = sphi 0, %s47
    %s51 = sphi 0, %s50
    %s67 = sphi 0, %s51
    %s77 = sphi 0, %s79
    %s80 = sphi 0, %s77
    %s81 = sphi 0, %s80
    %s97 = sphi 0, %s81
    %s105 = sphi 0, %s107
    %s108 = sphi 0, %s105
    %s109 = sphi 0, %s108
    %s125 = sphi 0, %s109
    %s135 = sphi 0, %s137
    %s138 = sphi 0, %s135
    %s139 = sphi 0, %s138
    %s155 = sphi 0, %s139
  $region4: #{decoder_forward.17} parent=0 // loop_header_branch
    %12 = sbr.rel (%p10) target = $region8
  $region5: #{decoder_forward.17} parent=0 // loop_body
    %s14 = ssub.s32 %s9, 1
    %s15 = ssub.s32 %s9, 2
    %s28 = sadd.s32 1, %s19
    %p29 = scmp.ge.s32.totalorder %s28, 1
    %s30 = scalar_select %p29, 0, %s28
    %s31 = sadd.s32 1, %s18
    %s32 = scalar_select %p29, %s31, %s18
    %p33 = scmp.ge.s32.totalorder %s32, 1
    %s34 = scalar_select %p33, 0, %s32
    %s35 = sadd.s32 1, %s17
    %s36 = scalar_select %p33, %s35, %s17
    %p37 = scmp.ge.s32.totalorder %s36, 1
    %s38 = scalar_select %p37, 0, %s36
    %s39 = sadd.s32 1, %s16
    %s40 = scalar_select %p37, %s39, %s16
    %p41 = scmp.ge.s32.totalorder %s40, 3
    %s42 = scalar_select %p41, 0, %s40
    %s43 = ssub.s32 %s17, %s38
    %s44 = ssub.s32 %s19, %s30
    %s45 = sor.u32 %s43, %s44
    %p46 = scmp.eq.s32.totalorder %s45, 0
    %s48 = sadd.s32 %s47, 1
    %s49 = scalar_select %p46, %s47, %s48
    %p52 = pneg %p46
    %p53 = scmp.eq.s32.totalorder %s9, 2
    %p54 = por %p52, %p53
    %p55 = scmp.ne.s32.totalorder %s47, %s50
    %p56 = scmp.eq.s32.totalorder %s9, 0
    %p57 = por %p55, %p56
    %p58 = scmp.ne.s32.totalorder %s47, %s50
    %p59 = scmp.eq.s32.totalorder %s14, 2
    %p60 = por %p58, %p59
    %p61 = scmp.ne.s32.totalorder %s50, %s51
    %p62 = scmp.eq.s32.totalorder %s14, 0
    %p63 = por %p61, %p62
    %p64 = scmp.ne.s32.totalorder %s50, %s51
    %p65 = scmp.eq.s32.totalorder %s15, 2
    %p66 = por %p64, %p65
    %p68 = scmp.ne.s32.totalorder %s51, %s67
    %p69 = scmp.eq.s32.totalorder %s15, 0
    %p70 = por %p68, %p69
    %s71 = ssub.s32 %s16, %s42
    %s72 = ssub.s32 %s19, %s30
    %s73 = sor.u32 %s71, %s72
    %s74 = ssub.s32 %s18, %s34
    %s75 = sor.u32 %s73, %s74
    %p76 = scmp.eq.s32.totalorder %s75, 0
    %s78 = sadd.s32 %s77, 1
    %s79 = scalar_select %p76, %s77, %s78
    %p82 = pneg %p76
    %p83 = scmp.eq.s32.totalorder %s9, 2
    %p84 = por %p82, %p83
    %p85 = scmp.ne.s32.totalorder %s77, %s80
    %p86 = scmp.eq.s32.totalorder %s9, 0
    %p87 = por %p85, %p86
    %p88 = scmp.ne.s32.totalorder %s77, %s80
    %p89 = scmp.eq.s32.totalorder %s14, 2
    %p90 = por %p88, %p89
    %p91 = scmp.ne.s32.totalorder %s80, %s81
    %p92 = scmp.eq.s32.totalorder %s14, 0
    %p93 = por %p91, %p92
    %p94 = scmp.ne.s32.totalorder %s80, %s81
    %p95 = scmp.eq.s32.totalorder %s15, 2
    %p96 = por %p94, %p95
    %p98 = scmp.ne.s32.totalorder %s81, %s97
    %p99 = scmp.eq.s32.totalorder %s15, 0
    %p100 = por %p98, %p99
    %s101 = ssub.s32 %s16, %s42
    %s102 = ssub.s32 %s18, %s34
    %s103 = sor.u32 %s101, %s102
    %p104 = scmp.eq.s32.totalorder %s103, 0
    %s106 = sadd.s32 %s105, 1
    %s107 = scalar_select %p104, %s105, %s106
    %p110 = pneg %p104
    %p111 = scmp.eq.s32.totalorder %s9, 2
    %p112 = por %p110, %p111
    %p113 = scmp.ne.s32.totalorder %s105, %s108
    %p114 = scmp.eq.s32.totalorder %s9, 0
    %p115 = por %p113, %p114
    %p116 = scmp.ne.s32.totalorder %s105, %s108
    %p117 = scmp.eq.s32.totalorder %s14, 2
    %p118 = por %p116, %p117
    %p119 = scmp.ne.s32.totalorder %s108, %s109
    %p120 = scmp.eq.s32.totalorder %s14, 0
    %p121 = por %p119, %p120
    %p122 = scmp.ne.s32.totalorder %s108, %s109
    %p123 = scmp.eq.s32.totalorder %s15, 2
    %p124 = por %p122, %p123
    %p126 = scmp.ne.s32.totalorder %s109, %s125
    %p127 = scmp.eq.s32.totalorder %s15, 0
    %p128 = por %p126, %p127
    %s129 = ssub.s32 %s16, %s42
    %s130 = ssub.s32 %s17, %s38
    %s131 = sor.u32 %s129, %s130
    %s132 = ssub.s32 %s18, %s34
    %s133 = sor.u32 %s131, %s132
    %p134 = scmp.eq.s32.totalorder %s133, 0
    %s136 = sadd.s32 %s135, 1
    %s137 = scalar_select %p134, %s135, %s136
    %p140 = pneg %p134
    %p141 = scmp.eq.s32.totalorder %s9, 2
    %p142 = por %p140, %p141
    %p143 = scmp.ne.s32.totalorder %s135, %s138
    %p144 = scmp.eq.s32.totalorder %s9, 0
    %p145 = por %p143, %p144
    %p146 = scmp.ne.s32.totalorder %s135, %s138
    %p147 = scmp.eq.s32.totalorder %s14, 2
    %p148 = por %p146, %p147
    %p149 = scmp.ne.s32.totalorder %s138, %s139
    %p150 = scmp.eq.s32.totalorder %s14, 0
    %p151 = por %p149, %p150
    %p152 = scmp.ne.s32.totalorder %s138, %s139
    %p153 = scmp.eq.s32.totalorder %s15, 2
    %p154 = por %p152, %p153
    %p156 = scmp.ne.s32.totalorder %s139, %s155
    %p157 = scmp.eq.s32.totalorder %s15, 0
    %p158 = por %p156, %p157
    %p159 = scmp.le.s32.totalorder 1, %s9
    %p160 = scmp.lt.s32.totalorder %s9, 4
    %p161 = pnand %p159, %p160
    %p162 = pneg %p161
    // Predicated region
    $region9: #{decoder_forward.17} parent=5 // pred_check
      _
    $region10: #{decoder_forward.17} parent=5 // pred_check_branch
      %164 = sbr.rel (%p161) target = $region12
    $region11: #{decoder_forward.17} parent=5 // pred_region
      %s165 = ssub.s32 %s9, 1
      // Predicated region
      $region13: #{decoder_forward.17} parent=11 // pred_check
        %p166 = pneg %p63
      $region14: #{decoder_forward.17} parent=11 // pred_check_branch
        %168 = sbr.rel (%p166) target = $region16
      $region15: #{decoder_forward.17} parent=11 // pred_region
        %s169 = smul.u32 2, %s21
        %p170 = scmp.lt.s32.totalorder %s169, 1
        %s171 = scalar_select %p170, %s169, 1
        %p172 = scmp.lt.s32.totalorder %s23, 0
        %s173 = scalar_select %p172, %s23, 0
        %s174 = sadd.s32 %s173, %s171
        %s175 = smul.addr %s174, 4
        %s176 = scalar_lea.vmem %s0, %s175
        %s177 = smul.u32 2, %s21
      $region16: #{decoder_forward.17} parent=11 // pred_fallthru
        _
    $region12: #{decoder_forward.17} parent=5 // pred_fallthru
      _
    %p178 = scmp.lt.s32.totalorder %s9, 3
    // Predicated region
    $region17: #{decoder_forward.17} parent=5 // pred_check
      %p179 = pneg %p178
    $region18: #{decoder_forward.17} parent=5 // pred_check_branch
      %181 = sbr.rel (%p179) target = $region20
    $region19: #{decoder_forward.17} parent=5 // pred_region
      // Predicated region
      $region21: #{decoder_forward.17} parent=19 // pred_check
        %p182 = pneg %p87
      $region22: #{decoder_forward.17} parent=19 // pred_check_branch
        %184 = sbr.rel (%p182) target = $region24
      $region23: #{decoder_forward.17} parent=19 // pred_region
        %s185 = smul.u32 4, %s19
        %p186 = scmp.lt.s32.totalorder %s16, 2
        %s187 = scalar_select %p186, %s16, 2
        %p188 = scmp.lt.s32.totalorder %s185, 3
        %s189 = scalar_select %p188, %s185, 3
        %p190 = scmp.lt.s32.totalorder %s18, 0
        %s191 = scalar_select %p190, %s18, 0
        %s192 = sadd.s32 %s191, %s189
        %s193 = smul.addr %s187, 4
        %s194 = sadd.s32 %s192, %s193
        %s195 = smul.addr %s194, 4
        %s196 = scalar_lea.vmem %s1, %s195
        %s197 = smul.u32 4, %s19
      $region24: #{decoder_forward.17} parent=19 // pred_fallthru
        _
      // Predicated region
      $region25: #{decoder_forward.17} parent=19 // pred_check
        %p198 = pneg %p115
      $region26: #{decoder_forward.17} parent=19 // pred_check_branch
        %200 = sbr.rel (%p198) target = $region28
      $region27: #{decoder_forward.17} parent=19 // pred_region
        %p201 = scmp.lt.s32.totalorder %s16, 2
        %s202 = scalar_select %p201, %s16, 2
        %p203 = scmp.lt.s32.totalorder %s18, 0
        %s204 = scalar_select %p203, %s18, 0
        %s205 = sadd.s32 %s204, %s202
        %s206 = scalar_lea.vmem %s2, %s205
      $region28: #{decoder_forward.17} parent=19 // pred_fallthru
        _
    $region20: #{decoder_forward.17} parent=5 // pred_fallthru
      _
    %p207 = scmp.le.s32.totalorder 1, %s9
    %p208 = scmp.lt.s32.totalorder %s9, 4
    %p209 = pnand %p207, %p208
    %p210 = pneg %p209
    // Predicated region
    $region29: #{decoder_forward.17} parent=5 // pred_check
      _
    $region30: #{decoder_forward.17} parent=5 // pred_check_branch
      %212 = sbr.rel (%p209) target = $region32
    $region31: #{decoder_forward.17} parent=5 // pred_region
      %s213 = ssub.s32 %s9, 1
      %s214 = smul.u32 2, %s21
      %p215 = scmp.lt.s32.totalorder %s214, 1
      %s216 = scalar_select %p215, %s214, 1
      %p217 = scmp.lt.s32.totalorder %s23, 0
      %s218 = scalar_select %p217, %s23, 0
      %s219 = sadd.s32 %s218, %s216
      %s220 = smul.addr %s219, 4
      %s221 = scalar_lea.vmem %s0, %s220
      %p222 = pneg %p63
      %p223 = pneg %p60
      %s224 = smul.u32 4, %s23
      %p225 = scmp.lt.s32.totalorder %s20, 2
      %s226 = scalar_select %p225, %s20, 2
      %p227 = scmp.lt.s32.totalorder %s224, 3
      %s228 = scalar_select %p227, %s224, 3
      %p229 = scmp.lt.s32.totalorder %s22, 0
      %s230 = scalar_select %p229, %s22, 0
      %s231 = sadd.s32 %s230, %s228
      %s232 = smul.addr %s226, 4
      %s233 = sadd.s32 %s231, %s232
      %s234 = smul.addr %s233, 4
      %s235 = scalar_lea.vmem %s1, %s234
      %p236 = pneg %p93
      %p237 = pneg %p90
      %p238 = scmp.lt.s32.totalorder %s20, 2
      %s239 = scalar_select %p238, %s20, 2
      %p240 = scmp.lt.s32.totalorder %s22, 0
      %s241 = scalar_select %p240, %s22, 0
      %s242 = sadd.s32 %s241, %s239
      %s243 = scalar_lea.vmem %s2, %s242
      %p244 = pneg %p121
      %p245 = pneg %p118
      %p246 = pneg %p151
      %p247 = pneg %p148
      %s248 = smul.u32 2, %s21
      %p249 = scmp.lt.s32.totalorder %s20, 2
      %s250 = scalar_select %p249, %s20, 2
      %p251 = scmp.lt.s32.totalorder %s248, 1
      %s252 = scalar_select %p251, %s248, 1
      %p253 = scmp.lt.s32.totalorder %s22, 0
      %s254 = scalar_select %p253, %s22, 0
      %s255 = sadd.s32 %s254, %s252
      %s256 = smul.addr %s250, 2
      %s257 = sadd.s32 %s255, %s256
      %s258 = smul.addr %s257, 4
      %s259 = scalar_lea.vmem %s3, %s258
      %s260 = smul.u32 2, %s21
      %p261 = scmp.lt.s32.totalorder %s260, 1
      %s262 = scalar_select %p261, %s260, 1
      %p263 = scmp.lt.s32.totalorder %s23, 0
      %s264 = scalar_select %p263, %s23, 0
      %s265 = sadd.s32 %s264, %s262
      %s266 = smul.addr %s265, 4
      %s267 = scalar_lea.vmem %s0, %s266
      %s268 = smul.u32 2, %s21
      %s269 = smul.u32 4, %s23
      %p270 = scmp.lt.s32.totalorder %s20, 2
      %s271 = scalar_select %p270, %s20, 2
      %p272 = scmp.lt.s32.totalorder %s269, 3
      %s273 = scalar_select %p272, %s269, 3
      %p274 = scmp.lt.s32.totalorder %s22, 0
      %s275 = scalar_select %p274, %s22, 0
      %s276 = sadd.s32 %s275, %s273
      %s277 = smul.addr %s271, 4
      %s278 = sadd.s32 %s276, %s277
      %s279 = smul.addr %s278, 4
      %s280 = scalar_lea.vmem %s1, %s279
      %s281 = smul.u32 4, %s23
      %p282 = scmp.lt.s32.totalorder %s20, 2
      %s283 = scalar_select %p282, %s20, 2
      %p284 = scmp.lt.s32.totalorder %s22, 0
      %s285 = scalar_select %p284, %s22, 0
      %s286 = sadd.s32 %s285, %s283
      %s287 = scalar_lea.vmem %s2, %s286
      %s288 = smul.u32 2, %s21
      %p289 = scmp.lt.s32.totalorder %s20, 2
      %s290 = scalar_select %p289, %s20, 2
      %p291 = scmp.lt.s32.totalorder %s288, 1
      %s292 = scalar_select %p291, %s288, 1
      %p293 = scmp.lt.s32.totalorder %s22, 0
      %s294 = scalar_select %p293, %s22, 0
      %s295 = sadd.s32 %s294, %s292
      %s296 = smul.addr %s290, 2
      %s297 = sadd.s32 %s295, %s296
      %s298 = smul.addr %s297, 4
      %s299 = scalar_lea.vmem %s3, %s298
      %s300 = smul.u32 2, %s21
      %p302 = scmp.eq.s32.totalorder %s23, 0
      // Predicated region
      $region33: #{decoder_forward.17} parent=31 // pred_check
        %p303 = pneg %p302
      $region34: #{decoder_forward.17} parent=31 // pred_check_branch
        %305 = sbr.rel (%p303) target = $region36
      $region35: #{decoder_forward.17} parent=31 // pred_region
        %vm306 = vcmask 261120
        %307 = vst.msk [vmem:[#allocation2] sm:$0xff] %vm306, 0.0
        %308 = vst.msk [vmem:[#allocation2 + $0x8] sm:$0xff] %vm306, 0.0
      $region36: #{decoder_forward.17} parent=31 // pred_fallthru
        _
      %v309 = vld [vmem:[#allocation2] sm:$0xff]
      %v310 = vld [vmem:[#allocation2 + $0x8] sm:$0xff]
      %v311 = vld [vmem:[%s267] sm:$0xf]
      %v312 = vld [vmem:[%s267 + $0x4] sm:$0xf]
      %v313 = vld [vmem:[%s280] sm:$0xf]
      %v314 = vld [vmem:[%s280 + $0x4] sm:$0xf]
      %v315 = vld [vmem:[%s280 + $0x8] sm:$0xf]
      %v316 = vld [vmem:[%s280 + $0xc] sm:$0xf]
      %v319 = vunpack.c.l.b16 %v311
      %v320 = vunpack.c.l.b16 %v312
      %v321 = vpack.c.b16 %v320, %v319
      %v326 = vunpack.c.l.b16 %v313
      %v327 = vunpack.c.l.b16 %v314
      %v328 = vunpack.c.l.b16 %v315
      %v329 = vunpack.c.l.b16 %v316
      %v330 = vpack.c.b16 %v327, %v326
      %v331 = vpack.c.b16 %v329, %v328
      %vm334 = vcmask 261120
      %v336 = vsel %vm334, %v321, 0
      %338 = vmatpush.bf16.msra.mxu0 0
      %339 = vmatpush.bf16.msra.mxu0 0
      %340 = vmatpush.bf16.msra.mxu0 0
      %341 = vmatpush.bf16.msra.mxu0 0
      %342 = vmatpush.bf16.msra.mxu0 0
      %343 = vmatpush.bf16.msra.mxu0 0
      %344 = vmatpush.bf16.msra.mxu0 %v331
      %345 = vmatpush.bf16.msra.mxu0 %v330
      %346 = vmatmul.bf16.gmra.mxu0 %v336
      %v347 = vpop.f32.mrf.mxu0
      %v348 = vadd.f32 0.0, %v347
      %v349 = vpop.f32.mrf.mxu0
      %v350 = vadd.f32 0.0, %v349
      %351 = vdwg.mxu0
      %v352 = vadd.f32 %v309, %v348
      %v353 = vadd.f32 %v310, %v350
      %354 = vst.msk [vmem:[#allocation2] sm:$0xff] %vm334, %v352
      %355 = vst.msk [vmem:[#allocation2 + $0x8] sm:$0xff] %vm334, %v353
      // Predicated region
      $region37: #{decoder_forward.17} parent=31 // pred_check
        %p356 = pneg %p302
      $region38: #{decoder_forward.17} parent=31 // pred_check_branch
        %358 = sbr.rel (%p356) target = $region40
      $region39: #{decoder_forward.17} parent=31 // pred_region
        %v359 = vld [vmem:[#allocation2] sm:$0xff]
        %v360 = vld [vmem:[#allocation2 + $0x8] sm:$0xff]
        %v361 = vld [vmem:[%s287] sm:$0x1]
        %v363 = vperm.slane %v361, 0
        %v365 = vadd.f32 %v359, %v363
        %v366 = vadd.f32 %v360, %v363
        %v367 = vpack.c.bf16 %v365, %v365
        %v368 = vpack.c.bf16 %v366, %v366
        %vm369 = vcmask 257024
        %370 = vst.msk [vmem:[%s299] sm:$0xf] %vm369, %v367
        %371 = vst.msk [vmem:[%s299 + $0x4] sm:$0xf] %vm369, %v368
      $region40: #{decoder_forward.17} parent=31 // pred_fallthru
        _
      %s372 = smul.u32 2, %s21
      %p373 = scmp.lt.s32.totalorder %s20, 2
      %s374 = scalar_select %p373, %s20, 2
      %p375 = scmp.lt.s32.totalorder %s372, 1
      %s376 = scalar_select %p375, %s372, 1
      %p377 = scmp.lt.s32.totalorder %s22, 0
      %s378 = scalar_select %p377, %s22, 0
      %s379 = sadd.s32 %s378, %s376
      %s380 = smul.addr %s374, 2
      %s381 = sadd.s32 %s379, %s380
      %s382 = smul.addr %s381, 4
      %s383 = scalar_lea.vmem %s3, %s382
      // Predicated region
      $region41: #{decoder_forward.17} parent=31 // pred_check
        %p384 = pneg %p148
      $region42: #{decoder_forward.17} parent=31 // pred_check_branch
        %386 = sbr.rel (%p384) target = $region44
      $region43: #{decoder_forward.17} parent=31 // pred_region
        %s387 = smul.u32 2, %s21
      $region44: #{decoder_forward.17} parent=31 // pred_fallthru
        _
    $region32: #{decoder_forward.17} parent=5 // pred_fallthru
      _
    %p388 = scmp.le.s32.totalorder 2, %s9
    // Predicated region
    $region45: #{decoder_forward.17} parent=5 // pred_check
      %p389 = pneg %p388
    $region46: #{decoder_forward.17} parent=5 // pred_check_branch
      %391 = sbr.rel (%p389) target = $region48
    $region47: #{decoder_forward.17} parent=5 // pred_region
      %s392 = ssub.s32 %s9, 2
      // Predicated region
      $region49: #{decoder_forward.17} parent=47 // pred_check
        %p393 = pneg %p154
      $region50: #{decoder_forward.17} parent=47 // pred_check_branch
        %395 = sbr.rel (%p393) target = $region52
      $region51: #{decoder_forward.17} parent=47 // pred_region
        %s396 = smul.u32 2, %s25
        %p397 = scmp.lt.s32.totalorder %s24, 2
        %s398 = scalar_select %p397, %s24, 2
        %p399 = scmp.lt.s32.totalorder %s396, 1
        %s400 = scalar_select %p399, %s396, 1
        %p401 = scmp.lt.s32.totalorder %s26, 0
        %s402 = scalar_select %p401, %s26, 0
        %s403 = sadd.s32 %s402, %s400
        %s404 = smul.addr %s398, 2
        %s405 = sadd.s32 %s403, %s404
        %s406 = smul.addr %s405, 4
        %s407 = scalar_lea.vmem %s3, %s406
      $region52: #{decoder_forward.17} parent=47 // pred_fallthru
        _
    $region48: #{decoder_forward.17} parent=5 // pred_fallthru
      _
  $region6: #{decoder_forward.17} parent=0 // loop_footer
    %s13 = sadd.s32 1, %s9
  $region7: #{decoder_forward.17} parent=0 // loop_footer_branch
    %8 = sbr.rel target = $region3
  $region8: #{decoder_forward.17} parent=0 // loop_exit
    _

// kernel: decoder_forward.20
$region0: #{decoder_forward.20}
  #allocation0 [shape = 'u32[]', space=smem, size = 0x4, offset = 0x4, fixed_abs, tag = 'smem constant byte address 0x4 - core index']
  #allocation1 [shape = 'u32[72,128]{1,0:T(1,128)}', space=vmem, size = 0x9000, scoped, tag = 'internal scratch']
  #allocation2 [shape = 'f32[16,32]{1,0:T(8,128)}', space=vmem, size = 0x2000, scoped, tag = 'scratch operand']
  %s0 = inlined_call_operand.vmem [shape: bf16[16,32], index: 0, kind: input, shape index: {}]
  %s1 = inlined_call_operand.vmem [shape: bf16[32,32], index: 1, kind: input, shape index: {}]
  %s2 = inlined_call_operand.vmem [shape: f32[1,32], index: 2, kind: input, shape index: {}]
  %s3 = inlined_call_operand.vmem [shape: bf16[16,32], index: 3, kind: output, shape index: {}]
  %s4 = sld [smem:[#allocation0]]
  $region30: #{decoder_forward.20} parent=0
    _
  %s6 = ssub.s32 1, %s4
  %s7 = scalar_select 0, %s6, %s4
  // Predicated region
  $region2: #{decoder_forward.20} parent=0 // pred_check
    _
  $region3: #{decoder_forward.20} parent=0 // pred_check_branch
    %9 = sbr.rel (0) target = $region5
  $region4: #{decoder_forward.20} parent=0 // pred_region
    _
  $region5: #{decoder_forward.20} parent=0 // pred_fallthru
    _
  // Predicated region
  $region6: #{decoder_forward.20} parent=0 // pred_check
    _
  $region7: #{decoder_forward.20} parent=0 // pred_check_branch
    %11 = sbr.rel (0) target = $region9
  $region8: #{decoder_forward.20} parent=0 // pred_region
    _
  $region9: #{decoder_forward.20} parent=0 // pred_fallthru
    _
  // Predicated region
  $region10: #{decoder_forward.20} parent=0 // pred_check
    _
  $region11: #{decoder_forward.20} parent=0 // pred_check_branch
    %13 = sbr.rel (0) target = $region13
  $region12: #{decoder_forward.20} parent=0 // pred_region
    _
  $region13: #{decoder_forward.20} parent=0 // pred_fallthru
    _
  %p15 = scmp.eq.s32.totalorder 0, 0
  // Predicated region
  $region14: #{decoder_forward.20} parent=0 // pred_check
    %p16 = pneg %p15
  $region15: #{decoder_forward.20} parent=0 // pred_check_branch
    %18 = sbr.rel (%p16) target = $region17
  $region16: #{decoder_forward.20} parent=0 // pred_region
    %vm19 = vcmask 261120
    %20 = vst.msk [vmem:[#allocation2] sm:$0xff] %vm19, 0.0
    %21 = vst.msk [vmem:[#allocation2 + $0x8] sm:$0xff] %vm19, 0.0
  $region17: #{decoder_forward.20} parent=0 // pred_fallthru
    _
  %v22 = vld [vmem:[#allocation2] sm:$0xff]
  %v23 = vld [vmem:[#allocation2 + $0x8] sm:$0xff]
  %v24 = vld [vmem:[%s0] sm:$0xf]
  %v25 = vld [vmem:[%s0 + $0x4] sm:$0xf]
  %v26 = vld [vmem:[%s1] sm:$0xf]
  %v27 = vld [vmem:[%s1 + $0x4] sm:$0xf]
  %v28 = vld [vmem:[%s1 + $0x8] sm:$0xf]
  %v29 = vld [vmem:[%s1 + $0xc] sm:$0xf]
  %v32 = vunpack.c.l.b16 %v24
  %v33 = vunpack.c.l.b16 %v25
  %v34 = vpack.c.b16 %v33, %v32
  %v39 = vunpack.c.l.b16 %v26
  %v40 = vunpack.c.l.b16 %v27
  %v41 = vunpack.c.l.b16 %v28
  %v42 = vunpack.c.l.b16 %v29
  %v43 = vpack.c.b16 %v40, %v39
  %v44 = vpack.c.b16 %v42, %v41
  %vm47 = vcmask 261120
  %v49 = vsel %vm47, %v34, 0
  %51 = vmatpush.bf16.msra.mxu0 0
  %52 = vmatpush.bf16.msra.mxu0 0
  %53 = vmatpush.bf16.msra.mxu0 0
  %54 = vmatpush.bf16.msra.mxu0 0
  %55 = vmatpush.bf16.msra.mxu0 0
  %56 = vmatpush.bf16.msra.mxu0 0
  %57 = vmatpush.bf16.msra.mxu0 %v44
  %58 = vmatpush.bf16.msra.mxu0 %v43
  %59 = vmatmul.bf16.gmra.mxu0 %v49
  %v60 = vpop.f32.mrf.mxu0
  %v61 = vadd.f32 0.0, %v60
  %v62 = vpop.f32.mrf.mxu0
  %v63 = vadd.f32 0.0, %v62
  %64 = vdwg.mxu0
  %v65 = vadd.f32 %v22, %v61
  %v66 = vadd.f32 %v23, %v63
  %67 = vst.msk [vmem:[#allocation2] sm:$0xff] %vm47, %v65
  %68 = vst.msk [vmem:[#allocation2 + $0x8] sm:$0xff] %vm47, %v66
  // Predicated region
  $region18: #{decoder_forward.20} parent=0 // pred_check
    %p69 = pneg %p15
  $region19: #{decoder_forward.20} parent=0 // pred_check_branch
    %71 = sbr.rel (%p69) target = $region21
  $region20: #{decoder_forward.20} parent=0 // pred_region
    %v72 = vld [vmem:[#allocation2] sm:$0xff]
    %v73 = vld [vmem:[#allocation2 + $0x8] sm:$0xff]
    %v74 = vld [vmem:[%s2] sm:$0x1]
    %v76 = vperm.slane %v74, 0
    %v78 = vadd.f32 %v72, %v76
    %v79 = vadd.f32 %v73, %v76
    %v80 = vpack.c.bf16 %v78, %v78
    %v81 = vpack.c.bf16 %v79, %v79
    %vm82 = vcmask 257024
    %83 = vst.msk [vmem:[%s3] sm:$0xf] %vm82, %v80
    %84 = vst.msk [vmem:[%s3 + $0x4] sm:$0xf] %vm82, %v81
  $region21: #{decoder_forward.20} parent=0 // pred_fallthru
    _
  // Predicated region
  $region22: #{decoder_forward.20} parent=0 // pred_check
    _
  $region23: #{decoder_forward.20} parent=0 // pred_check_branch
    %86 = sbr.rel (0) target = $region25
  $region24: #{decoder_forward.20} parent=0 // pred_region
    _
  $region25: #{decoder_forward.20} parent=0 // pred_fallthru
    _
  // Predicated region
  $region26: #{decoder_forward.20} parent=0 // pred_check
    _
  $region27: #{decoder_forward.20} parent=0 // pred_check_branch
    %88 = sbr.rel (0) target = $region29
  $region28: #{decoder_forward.20} parent=0 // pred_region
    _
  $region29: #{decoder_forward.20} parent=0 // pred_fallthru
    _

// kernel: decoder_forward.18
$region0: #{decoder_forward.18}
  #allocation0 [shape = 'u32[]', space=smem, size = 0x4, offset = 0x4, fixed_abs, tag = 'smem constant byte address 0x4 - core index']
  #allocation1 [shape = 'u32[72,128]{1,0:T(1,128)}', space=vmem, size = 0x9000, scoped, tag = 'internal scratch']
  #allocation2 [shape = 'f32[4,8,1]{2,1,0:T(8,128)}', space=vmem, size = 0x4000, scoped, tag = 'scratch operand']
  #allocation3 [shape = 'f32[4,8,1]{2,1,0:T(8,128)}', space=vmem, size = 0x4000, scoped, tag = 'scratch operand']
  #allocation4 [shape = 'f32[4,8,8]{2,1,0:T(8,128)}', space=vmem, size = 0x4000, scoped, tag = 'scratch operand']
  %s0 = inlined_call_operand.vmem [shape: bf16[3,2,8,32], index: 0, kind: input, shape index: {}, may-alias: {0,1,2}]
  %s1 = inlined_call_operand.vmem [shape: bf16[3,2,8,32], index: 1, kind: input, shape index: {}, may-alias: {0,1,2}]
  %s2 = inlined_call_operand.vmem [shape: bf16[3,2,8,32], index: 2, kind: input, shape index: {}, may-alias: {0,1,2}]
  %s3 = inlined_call_operand.vmem [shape: bf16[2,1,8], index: 3, kind: input, shape index: {}]
  %s4 = inlined_call_operand.vmem [shape: bf16[2,8,32], index: 4, kind: output, shape index: {}]
  %s5 = sld [smem:[#allocation0]]
  $region57: #{decoder_forward.18} parent=0
    _
  %s7 = ssub.s32 1, %s5
  %s8 = scalar_select 0, %s7, %s5
  loop: start=0, step=1, limit=4
  $region2: #{decoder_forward.18} parent=0 // loop_pre_header
    _
  $region3: #{decoder_forward.18} parent=0 // loop_header
    %s10 = sphi 0, %s14
    %p11 = scmp.ge.s32.totalorder %s10, 4
    %s17 = sphi 0, %s36
    %s18 = sphi 0, %s32
    %s19 = sphi 0, %s28
    %s20 = sphi 0, %s17
    %s21 = sphi 0, %s18
    %s22 = sphi 0, %s19
    %s23 = sphi 0, %s20
    %s24 = sphi 0, %s21
    %s25 = sphi 0, %s22
    %s41 = sphi 0, %s43
    %s44 = sphi 0, %s41
    %s45 = sphi 0, %s44
    %s61 = sphi 0, %s45
    %s69 = sphi 0, %s71
    %s72 = sphi 0, %s69
    %s73 = sphi 0, %s72
    %s89 = sphi 0, %s73
    %s97 = sphi 0, %s99
    %s100 = sphi 0, %s97
    %s101 = sphi 0, %s100
    %s117 = sphi 0, %s101
    %s125 = sphi 0, %s127
    %s128 = sphi 0, %s125
    %s129 = sphi 0, %s128
    %s145 = sphi 0, %s129
    %s153 = sphi 0, %s155
    %s156 = sphi 0, %s153
    %s157 = sphi 0, %s156
    %s173 = sphi 0, %s157
  $region4: #{decoder_forward.18} parent=0 // loop_header_branch
    %13 = sbr.rel (%p11) target = $region8
  $region5: #{decoder_forward.18} parent=0 // loop_body
    %s15 = ssub.s32 %s10, 1
    %s16 = ssub.s32 %s10, 2
    %s26 = sadd.s32 1, %s19
    %p27 = scmp.ge.s32.totalorder %s26, 1
    %s28 = scalar_select %p27, 0, %s26
    %s29 = sadd.s32 1, %s18
    %s30 = scalar_select %p27, %s29, %s18
    %p31 = scmp.ge.s32.totalorder %s30, 1
    %s32 = scalar_select %p31, 0, %s30
    %s33 = sadd.s32 1, %s17
    %s34 = scalar_select %p31, %s33, %s17
    %p35 = scmp.ge.s32.totalorder %s34, 2
    %s36 = scalar_select %p35, 0, %s34
    %s37 = ssub.s32 %s17, %s36
    %s38 = ssub.s32 %s18, %s32
    %s39 = sor.u32 %s37, %s38
    %p40 = scmp.eq.s32.totalorder %s39, 0
    %s42 = sadd.s32 %s41, 1
    %s43 = scalar_select %p40, %s41, %s42
    %p46 = pneg %p40
    %p47 = scmp.eq.s32.totalorder %s10, 1
    %p48 = por %p46, %p47
    %p49 = scmp.ne.s32.totalorder %s41, %s44
    %p50 = scmp.eq.s32.totalorder %s10, 0
    %p51 = por %p49, %p50
    %p52 = scmp.ne.s32.totalorder %s41, %s44
    %p53 = scmp.eq.s32.totalorder %s15, 1
    %p54 = por %p52, %p53
    %p55 = scmp.ne.s32.totalorder %s44, %s45
    %p56 = scmp.eq.s32.totalorder %s15, 0
    %p57 = por %p55, %p56
    %p58 = scmp.ne.s32.totalorder %s44, %s45
    %p59 = scmp.eq.s32.totalorder %s16, 1
    %p60 = por %p58, %p59
    %p62 = scmp.ne.s32.totalorder %s45, %s61
    %p63 = scmp.eq.s32.totalorder %s16, 0
    %p64 = por %p62, %p63
    %s65 = ssub.s32 %s17, %s36
    %s66 = ssub.s32 %s19, %s28
    %s67 = sor.u32 %s65, %s66
    %p68 = scmp.eq.s32.totalorder %s67, 0
    %s70 = sadd.s32 %s69, 1
    %s71 = scalar_select %p68, %s69, %s70
    %p74 = pneg %p68
    %p75 = scmp.eq.s32.totalorder %s10, 1
    %p76 = por %p74, %p75
    %p77 = scmp.ne.s32.totalorder %s69, %s72
    %p78 = scmp.eq.s32.totalorder %s10, 0
    %p79 = por %p77, %p78
    %p80 = scmp.ne.s32.totalorder %s69, %s72
    %p81 = scmp.eq.s32.totalorder %s15, 1
    %p82 = por %p80, %p81
    %p83 = scmp.ne.s32.totalorder %s72, %s73
    %p84 = scmp.eq.s32.totalorder %s15, 0
    %p85 = por %p83, %p84
    %p86 = scmp.ne.s32.totalorder %s72, %s73
    %p87 = scmp.eq.s32.totalorder %s16, 1
    %p88 = por %p86, %p87
    %p90 = scmp.ne.s32.totalorder %s73, %s89
    %p91 = scmp.eq.s32.totalorder %s16, 0
    %p92 = por %p90, %p91
    %s93 = ssub.s32 %s17, %s36
    %s94 = ssub.s32 %s19, %s28
    %s95 = sor.u32 %s93, %s94
    %p96 = scmp.eq.s32.totalorder %s95, 0
    %s98 = sadd.s32 %s97, 1
    %s99 = scalar_select %p96, %s97, %s98
    %p102 = pneg %p96
    %p103 = scmp.eq.s32.totalorder %s10, 1
    %p104 = por %p102, %p103
    %p105 = scmp.ne.s32.totalorder %s97, %s100
    %p106 = scmp.eq.s32.totalorder %s10, 0
    %p107 = por %p105, %p106
    %p108 = scmp.ne.s32.totalorder %s97, %s100
    %p109 = scmp.eq.s32.totalorder %s15, 1
    %p110 = por %p108, %p109
    %p111 = scmp.ne.s32.totalorder %s100, %s101
    %p112 = scmp.eq.s32.totalorder %s15, 0
    %p113 = por %p111, %p112
    %p114 = scmp.ne.s32.totalorder %s100, %s101
    %p115 = scmp.eq.s32.totalorder %s16, 1
    %p116 = por %p114, %p115
    %p118 = scmp.ne.s32.totalorder %s101, %s117
    %p119 = scmp.eq.s32.totalorder %s16, 0
    %p120 = por %p118, %p119
    %s121 = ssub.s32 %s17, %s36
    %s122 = ssub.s32 %s19, %s28
    %s123 = sor.u32 %s121, %s122
    %p124 = scmp.eq.s32.totalorder %s123, 0
    %s126 = sadd.s32 %s125, 1
    %s127 = scalar_select %p124, %s125, %s126
    %p130 = pneg %p124
    %p131 = scmp.eq.s32.totalorder %s10, 1
    %p132 = por %p130, %p131
    %p133 = scmp.ne.s32.totalorder %s125, %s128
    %p134 = scmp.eq.s32.totalorder %s10, 0
    %p135 = por %p133, %p134
    %p136 = scmp.ne.s32.totalorder %s125, %s128
    %p137 = scmp.eq.s32.totalorder %s15, 1
    %p138 = por %p136, %p137
    %p139 = scmp.ne.s32.totalorder %s128, %s129
    %p140 = scmp.eq.s32.totalorder %s15, 0
    %p141 = por %p139, %p140
    %p142 = scmp.ne.s32.totalorder %s128, %s129
    %p143 = scmp.eq.s32.totalorder %s16, 1
    %p144 = por %p142, %p143
    %p146 = scmp.ne.s32.totalorder %s129, %s145
    %p147 = scmp.eq.s32.totalorder %s16, 0
    %p148 = por %p146, %p147
    %s149 = ssub.s32 %s17, %s36
    %s150 = ssub.s32 %s18, %s32
    %s151 = sor.u32 %s149, %s150
    %p152 = scmp.eq.s32.totalorder %s151, 0
    %s154 = sadd.s32 %s153, 1
    %s155 = scalar_select %p152, %s153, %s154
    %p158 = pneg %p152
    %p159 = scmp.eq.s32.totalorder %s10, 1
    %p160 = por %p158, %p159
    %p161 = scmp.ne.s32.totalorder %s153, %s156
    %p162 = scmp.eq.s32.totalorder %s10, 0
    %p163 = por %p161, %p162
    %p164 = scmp.ne.s32.totalorder %s153, %s156
    %p165 = scmp.eq.s32.totalorder %s15, 1
    %p166 = por %p164, %p165
    %p167 = scmp.ne.s32.totalorder %s156, %s157
    %p168 = scmp.eq.s32.totalorder %s15, 0
    %p169 = por %p167, %p168
    %p170 = scmp.ne.s32.totalorder %s156, %s157
    %p171 = scmp.eq.s32.totalorder %s16, 1
    %p172 = por %p170, %p171
    %p174 = scmp.ne.s32.totalorder %s157, %s173
    %p175 = scmp.eq.s32.totalorder %s16, 0
    %p176 = por %p174, %p175
    %p177 = scmp.le.s32.totalorder 1, %s10
    %p178 = scmp.lt.s32.totalorder %s10, 3
    %p179 = pnand %p177, %p178
    %p180 = pneg %p179
    // Predicated region
    $region9: #{decoder_forward.18} parent=5 // pred_check
      _
    $region10: #{decoder_forward.18} parent=5 // pred_check_branch
      %182 = sbr.rel (%p179) target = $region12
    $region11: #{decoder_forward.18} parent=5 // pred_region
      %s183 = ssub.s32 %s10, 1
    $region12: #{decoder_forward.18} parent=5 // pred_fallthru
      _
    %p184 = scmp.lt.s32.totalorder %s10, 2
    // Predicated region
    $region13: #{decoder_forward.18} parent=5 // pred_check
      %p185 = pneg %p184
    $region14: #{decoder_forward.18} parent=5 // pred_check_branch
      %187 = sbr.rel (%p185) target = $region16
    $region15: #{decoder_forward.18} parent=5 // pred_region
      // Predicated region
      $region17: #{decoder_forward.18} parent=15 // pred_check
        %p188 = pneg %p51
      $region18: #{decoder_forward.18} parent=15 // pred_check_branch
        %190 = sbr.rel (%p188) target = $region20
      $region19: #{decoder_forward.18} parent=15 // pred_region
        %p191 = scmp.lt.s32.totalorder %s17, 1
        %s192 = scalar_select %p191, %s17, 1
        %p193 = scmp.lt.s32.totalorder %s18, 0
        %s194 = scalar_select %p193, %s18, 0
        %s195 = sadd.s32 %s194, %s192
        %s196 = smul.addr %s195, 4
        %s197 = scalar_lea.vmem %s0, %s196
      $region20: #{decoder_forward.18} parent=15 // pred_fallthru
        _
      // Predicated region
      $region21: #{decoder_forward.18} parent=15 // pred_check
        %p198 = pneg %p79
      $region22: #{decoder_forward.18} parent=15 // pred_check_branch
        %200 = sbr.rel (%p198) target = $region24
      $region23: #{decoder_forward.18} parent=15 // pred_region
        %p201 = scmp.lt.s32.totalorder %s17, 1
        %s202 = scalar_select %p201, %s17, 1
        %p203 = scmp.lt.s32.totalorder %s19, 0
        %s204 = scalar_select %p203, %s19, 0
        %s205 = sadd.s32 %s204, %s202
        %s206 = sadd.s32 %s205, 2
        %s207 = smul.addr %s206, 4
        %s208 = scalar_lea.vmem %s1, %s207
      $region24: #{decoder_forward.18} parent=15 // pred_fallthru
        _
      // Predicated region
      $region25: #{decoder_forward.18} parent=15 // pred_check
        %p209 = pneg %p107
      $region26: #{decoder_forward.18} parent=15 // pred_check_branch
        %211 = sbr.rel (%p209) target = $region28
      $region27: #{decoder_forward.18} parent=15 // pred_region
        %p212 = scmp.lt.s32.totalorder %s17, 1
        %s213 = scalar_select %p212, %s17, 1
        %p214 = scmp.lt.s32.totalorder %s19, 0
        %s215 = scalar_select %p214, %s19, 0
        %s216 = sadd.s32 %s215, %s213
        %s217 = sadd.s32 %s216, 4
        %s218 = smul.addr %s217, 4
        %s219 = scalar_lea.vmem %s2, %s218
      $region28: #{decoder_forward.18} parent=15 // pred_fallthru
        _
      // Predicated region
      $region29: #{decoder_forward.18} parent=15 // pred_check
        %p220 = pneg %p135
      $region30: #{decoder_forward.18} parent=15 // pred_check_branch
        %222 = sbr.rel (%p220) target = $region32
      $region31: #{decoder_forward.18} parent=15 // pred_region
        %p223 = scmp.lt.s32.totalorder %s17, 1
        %s224 = scalar_select %p223, %s17, 1
        %p225 = scmp.lt.s32.totalorder %s19, 0
        %s226 = scalar_select %p225, %s19, 0
        %s227 = sadd.s32 %s226, %s224
        %s228 = scalar_lea.vmem %s3, %s227
      $region32: #{decoder_forward.18} parent=15 // pred_fallthru
        _
    $region16: #{decoder_forward.18} parent=5 // pred_fallthru
      _
    %p229 = scmp.le.s32.totalorder 1, %s10
    %p230 = scmp.lt.s32.totalorder %s10, 3
    %p231 = pnand %p229, %p230
    %p232 = pneg %p231
    // Predicated region
    $region33: #{decoder_forward.18} parent=5 // pred_check
      _
    $region34: #{decoder_forward.18} parent=5 // pred_check_branch
      %234 = sbr.rel (%p231) target = $region36
    $region35: #{decoder_forward.18} parent=5 // pred_region
      %s235 = ssub.s32 %s10, 1
      %p236 = scmp.lt.s32.totalorder %s20, 1
      %s237 = scalar_select %p236, %s20, 1
      %p238 = scmp.lt.s32.totalorder %s21, 0
      %s239 = scalar_select %p238, %s21, 0
      %s240 = sadd.s32 %s239, %s237
      %s241 = smul.addr %s240, 4
      %s242 = scalar_lea.vmem %s0, %s241
      %p243 = pneg %p57
      %p244 = pneg %p54
      %p245 = scmp.lt.s32.totalorder %s20, 1
      %s246 = scalar_select %p245, %s20, 1
      %p247 = scmp.lt.s32.totalorder %s22, 0
      %s248 = scalar_select %p247, %s22, 0
      %s249 = sadd.s32 %s248, %s246
      %s250 = sadd.s32 %s249, 2
      %s251 = smul.addr %s250, 4
      %s252 = scalar_lea.vmem %s1, %s251
      %p253 = pneg %p85
      %p254 = pneg %p82
      %p255 = scmp.lt.s32.totalorder %s20, 1
      %s256 = scalar_select %p255, %s20, 1
      %p257 = scmp.lt.s32.totalorder %s22, 0
      %s258 = scalar_select %p257, %s22, 0
      %s259 = sadd.s32 %s258, %s256
      %s260 = sadd.s32 %s259, 4
      %s261 = smul.addr %s260, 4
      %s262 = scalar_lea.vmem %s2, %s261
      %p263 = pneg %p113
      %p264 = pneg %p110
      %p265 = scmp.lt.s32.totalorder %s20, 1
      %s266 = scalar_select %p265, %s20, 1
      %p267 = scmp.lt.s32.totalorder %s22, 0
      %s268 = scalar_select %p267, %s22, 0
      %s269 = sadd.s32 %s268, %s266
      %s270 = scalar_lea.vmem %s3, %s269
      %p271 = pneg %p141
      %p272 = pneg %p138
      %p273 = pneg %p169
      %p274 = pneg %p166
      %p275 = scmp.lt.s32.totalorder %s20, 1
      %s276 = scalar_select %p275, %s20, 1
      %p277 = scmp.lt.s32.totalorder %s21, 0
      %s278 = scalar_select %p277, %s21, 0
      %s279 = sadd.s32 %s278, %s276
      %s280 = smul.addr %s279, 4
      %s281 = scalar_lea.vmem %s4, %s280
      %p282 = scmp.lt.s32.totalorder %s20, 1
      %s283 = scalar_select %p282, %s20, 1
      %p284 = scmp.lt.s32.totalorder %s21, 0
      %s285 = scalar_select %p284, %s21, 0
      %s286 = sadd.s32 %s285, %s283
      %s287 = smul.addr %s286, 4
      %s288 = scalar_lea.vmem %s0, %s287
      %p289 = scmp.lt.s32.totalorder %s20, 1
      %s290 = scalar_select %p289, %s20, 1
      %p291 = scmp.lt.s32.totalorder %s22, 0
      %s292 = scalar_select %p291, %s22, 0
      %s293 = sadd.s32 %s292, %s290
      %s294 = sadd.s32 %s293, 2
      %s295 = smul.addr %s294, 4
      %s296 = scalar_lea.vmem %s1, %s295
      %p297 = scmp.lt.s32.totalorder %s20, 1
      %s298 = scalar_select %p297, %s20, 1
      %p299 = scmp.lt.s32.totalorder %s22, 0
      %s300 = scalar_select %p299, %s22, 0
      %s301 = sadd.s32 %s300, %s298
      %s302 = sadd.s32 %s301, 4
      %s303 = smul.addr %s302, 4
      %s304 = scalar_lea.vmem %s2, %s303
      %p305 = scmp.lt.s32.totalorder %s20, 1
      %s306 = scalar_select %p305, %s20, 1
      %p307 = scmp.lt.s32.totalorder %s22, 0
      %s308 = scalar_select %p307, %s22, 0
      %s309 = sadd.s32 %s308, %s306
      %s310 = scalar_lea.vmem %s3, %s309
      %p311 = scmp.lt.s32.totalorder %s20, 1
      %s312 = scalar_select %p311, %s20, 1
      %p313 = scmp.lt.s32.totalorder %s21, 0
      %s314 = scalar_select %p313, %s21, 0
      %s315 = sadd.s32 %s314, %s312
      %s316 = smul.addr %s315, 4
      %s317 = scalar_lea.vmem %s4, %s316
      %p319 = scmp.eq.s32.totalorder %s22, 0
      // Predicated region
      $region37: #{decoder_forward.18} parent=35 // pred_check
        %p320 = pneg %p319
      $region38: #{decoder_forward.18} parent=35 // pred_check_branch
        %322 = sbr.rel (%p320) target = $region40
      $region39: #{decoder_forward.18} parent=35 // pred_region
        %vm323 = vcmask 7168
        %324 = vst.msk [vmem:[#allocation2] sm:$0xff] %vm323, -inf
        %325 = vst.msk [vmem:[#allocation2 + $0x8] sm:$0xff] %vm323, -inf
        %326 = vst.msk [vmem:[#allocation2 + $0x10] sm:$0xff] %vm323, -inf
        %327 = vst.msk [vmem:[#allocation2 + $0x18] sm:$0xff] %vm323, -inf
        %328 = vst.msk [vmem:[#allocation3] sm:$0xff] %vm323, 0.0
        %329 = vst.msk [vmem:[#allocation3 + $0x8] sm:$0xff] %vm323, 0.0
        %330 = vst.msk [vmem:[#allocation3 + $0x10] sm:$0xff] %vm323, 0.0
        %331 = vst.msk [vmem:[#allocation3 + $0x18] sm:$0xff] %vm323, 0.0
        %vm332 = vcmask 64512
        %333 = vst.msk [vmem:[#allocation4] sm:$0xff] %vm332, 0.0
        %334 = vst.msk [vmem:[#allocation4 + $0x8] sm:$0xff] %vm332, 0.0
        %335 = vst.msk [vmem:[#allocation4 + $0x10] sm:$0xff] %vm332, 0.0
        %336 = vst.msk [vmem:[#allocation4 + $0x18] sm:$0xff] %vm332, 0.0
      $region40: #{decoder_forward.18} parent=35 // pred_fallthru
        _
      %v337 = vld [vmem:[%s288] sm:$0xf]
      %v338 = vld [vmem:[%s296] sm:$0xf]
      %v339 = vld [vmem:[%s304] sm:$0xf]
      %v340 = vld [vmem:[%s310] sm:$0x1]
      %v341 = vunpack.c.l.bf16 %v340
      %s342 = smul.u32 %s21, 8
      %v343 = vlaneseq
      %v344 = vshrl.u32 %v343, 7
      %v345 = vstv %s342
      %v346 = vadd.s32 %v345, %v344
      %s347 = smul.u32 %s22, 8
      %v348 = vlaneseq
      %v349 = vand.u32 %v348, 127
      %v350 = vstv %s347
      %v351 = vadd.s32 %v350, %v349
      %vm352 = vcmp.le.s32.totalorder %v351, %v346
      %v353 = vperm.slane %v341, 0
      %v354 = vsel %vm352, %v353, -1e+09
      %vm355 = vcmask 64512
      %v357 = vsel %vm355, %v337, 0
      %v360 = vsel %vm355, %v338, 0
      %362 = vmatpush.bf16.xpose.msra.mxu0 0
      %363 = vmatpush.bf16.xpose.msra.mxu0 0
      %364 = vmatpush.bf16.xpose.msra.mxu0 0
      %365 = vmatpush.bf16.xpose.msra.mxu0 0
      %366 = vmatpush.bf16.xpose.msra.mxu0 0
      %367 = vmatpush.bf16.xpose.msra.mxu0 0
      %368 = vmatpush.bf16.xpose.msra.mxu0 0
      %369 = vmatpush.bf16.xpose.msra.mxu0 %v360
      %370 = vmatmul.bf16.gmra.mxu0 %v357
      %v371 = vpop.f32.mrf.mxu0
      %v372 = vadd.f32 0.0, %v371
      %v373 = vpop.f32.mrf.mxu0
      %374 = vdwg.mxu0
      %v375 = vmul.f32 %v372, 0.35355338
      %v376 = vadd.f32 %v375, %v354
      %v377 = vld [vmem:[#allocation2] sm:$0xff]
      %v378 = vsel %vm355, %v376, -inf
      %379 = vmax.xlane.f32.xlu0 %v378
      %v380 = vpop.xlane.xlu0 %379
      %v381 = vmax.f32 %v377, %v380
      %v382 = vsub.f32 %v377, %v381
      %v383 = vmul.f32 %v382, 1.442695
      %v384 = vpow.pop %v383
      %386 = vset.pattern.permute.xlu0 0
      %387 = vperm.xlu0 %386, %v381
      %v388 = vpop.permute.xlu0 %387
      %v390 = vsub.f32 %v376, %v388
      %v391 = vmul.f32 %v390, 1.442695
      %v392 = vpow.pop %v391
      %v393 = vld [vmem:[#allocation3] sm:$0xff]
      %v394 = vmul.f32 %v384, %v393
      %v395 = vsel %vm355, %v392, 0.0
      %396 = vadd.xlane.f32.xlu0 %v395
      %v397 = vpop.xlane.xlu0 %396
      %v398 = vadd.f32 %v394, %v397
      %vm399 = vcmask 7168
      %400 = vst.msk [vmem:[#allocation3] sm:$0xff] %vm399, %v398
      %v401 = vld [vmem:[#allocation4] sm:$0xff]
      %403 = vset.pattern.permute.xlu0 0
      %404 = vperm.xlu0 %403, %v384
      %v405 = vpop.permute.xlu0 %404
      %v407 = vmul.f32 %v405, %v401
      %v408 = vpack.c.bf16 %v392, %v392
      %v410 = vsel %vm355, %v408, 0
      %vm412 = vcmask 1043456
      %v414 = vsel %vm412, %v339, 0
      %416 = vmatpush.bf16.msra.mxu0 0
      %417 = vmatpush.bf16.msra.mxu0 0
      %418 = vmatpush.bf16.msra.mxu0 0
      %419 = vmatpush.bf16.msra.mxu0 0
      %420 = vmatpush.bf16.msra.mxu0 0
      %421 = vmatpush.bf16.msra.mxu0 0
      %422 = vmatpush.bf16.msra.mxu0 0
      %423 = vmatpush.bf16.msra.mxu0 %v414
      %424 = vmatmul.bf16.gmra.mxu0 %v410
      %v425 = vpop.f32.mrf.mxu0
      %v426 = vadd.f32 0.0, %v425
      %v427 = vpop.f32.mrf.mxu0
      %428 = vdwg.mxu0
      %v429 = vadd.f32 %v407, %v426
      %430 = vst.msk [vmem:[#allocation4] sm:$0xff] %vm355, %v429
      %431 = vst.msk [vmem:[#allocation2] sm:$0xff] %vm399, %v381
      %v433 = vunpack.c.l.b16 %v337
      %v434 = vpack.c.b16 %v433, %v433
      %435 = vrot.lane.b32.xlu0 %v434, 120
      %v436 = vpop.permute.xlu0 %435
      %v438 = vunpack.c.l.b16 %v338
      %v439 = vpack.c.b16 %v438, %v438
      %440 = vrot.lane.b32.xlu0 %v439, 120
      %v441 = vpop.permute.xlu0 %440
      %v443 = vsel %vm355, %v436, 0
      %v446 = vsel %vm355, %v441, 0
      %448 = vmatpush.bf16.xpose.msra.mxu0 0
      %449 = vmatpush.bf16.xpose.msra.mxu0 0
      %450 = vmatpush.bf16.xpose.msra.mxu0 0
      %451 = vmatpush.bf16.xpose.msra.mxu0 0
      %452 = vmatpush.bf16.xpose.msra.mxu0 0
      %453 = vmatpush.bf16.xpose.msra.mxu0 0
      %454 = vmatpush.bf16.xpose.msra.mxu0 0
      %455 = vmatpush.bf16.xpose.msra.mxu0 %v446
      %456 = vmatmul.bf16.gmra.mxu0 %v443
      %v457 = vpop.f32.mrf.mxu0
      %v458 = vadd.f32 0.0, %v457
      %v459 = vpop.f32.mrf.mxu0
      %460 = vdwg.mxu0
      %v461 = vmul.f32 %v458, 0.35355338
      %v462 = vadd.f32 %v461, %v354
      %s463 = scalar_lea.vmem [#allocation2], 8
      %v464 = vld [vmem:[%s463] sm:$0xff]
      %v465 = vsel %vm355, %v462, -inf
      %466 = vmax.xlane.f32.xlu0 %v465
      %v467 = vpop.xlane.xlu0 %466
      %v468 = vmax.f32 %v464, %v467
      %v469 = vsub.f32 %v464, %v468
      %v470 = vmul.f32 %v469, 1.442695
      %v471 = vpow.pop %v470
      %473 = vset.pattern.permute.xlu0 0
      %474 = vperm.xlu0 %473, %v468
      %v475 = vpop.permute.xlu0 %474
      %v477 = vsub.f32 %v462, %v475
      %v478 = vmul.f32 %v477, 1.442695
      %v479 = vpow.pop %v478
      %s480 = scalar_lea.vmem [#allocation3], 8
      %v481 = vld [vmem:[%s480] sm:$0xff]
      %v482 = vmul.f32 %v471, %v481
      %v483 = vsel %vm355, %v479, 0.0
      %484 = vadd.xlane.f32.xlu0 %v483
      %v485 = vpop.xlane.xlu0 %484
      %v486 = vadd.f32 %v482, %v485
      %487 = vst.msk [vmem:[%s480] sm:$0xff] %vm399, %v486
      %s488 = scalar_lea.vmem [#allocation4], 8
      %v489 = vld [vmem:[%s488] sm:$0xff]
      %491 = vset.pattern.permute.xlu0 0
      %492 = vperm.xlu0 %491, %v471
      %v493 = vpop.permute.xlu0 %492
      %v495 = vmul.f32 %v493, %v489
      %v496 = vpack.c.bf16 %v479, %v479
      %v498 = vunpack.c.l.b16 %v339
      %v499 = vpack.c.b16 %v498, %v498
      %500 = vrot.lane.b32.xlu0 %v499, 120
      %v501 = vpop.permute.xlu0 %500
      %v503 = vsel %vm355, %v496, 0
      %v506 = vsel %vm412, %v501, 0
      %508 = vmatpush.bf16.msra.mxu0 0
      %509 = vmatpush.bf16.msra.mxu0 0
      %510 = vmatpush.bf16.msra.mxu0 0
      %511 = vmatpush.bf16.msra.mxu0 0
      %512 = vmatpush.bf16.msra.mxu0 0
      %513 = vmatpush.bf16.msra.mxu0 0
      %514 = vmatpush.bf16.msra.mxu0 0
      %515 = vmatpush.bf16.msra.mxu0 %v506
      %516 = vmatmul.bf16.gmra.mxu0 %v503
      %v517 = vpop.f32.mrf.mxu0
      %v518 = vadd.f32 0.0, %v517
      %v519 = vpop.f32.mrf.mxu0
      %520 = vdwg.mxu0
      %v521 = vadd.f32 %v495, %v518
      %522 = vst.msk [vmem:[%s488] sm:$0xff] %vm355, %v521
      %523 = vst.msk [vmem:[%s463] sm:$0xff] %vm399, %v468
      %524 = vrot.lane.b32.xlu0 %v434, 112
      %v525 = vpop.permute.xlu0 %524
      %526 = vrot.lane.b32.xlu0 %v439, 112
      %v527 = vpop.permute.xlu0 %526
      %v529 = vsel %vm355, %v525, 0
      %v532 = vsel %vm355, %v527, 0
      %534 = vmatpush.bf16.xpose.msra.mxu0 0
      %535 = vmatpush.bf16.xpose.msra.mxu0 0
      %536 = vmatpush.bf16.xpose.msra.mxu0 0
      %537 = vmatpush.bf16.xpose.msra.mxu0 0
      %538 = vmatpush.bf16.xpose.msra.mxu0 0
      %539 = vmatpush.bf16.xpose.msra.mxu0 0
      %540 = vmatpush.bf16.xpose.msra.mxu0 0
      %541 = vmatpush.bf16.xpose.msra.mxu0 %v532
      %542 = vmatmul.bf16.gmra.mxu0 %v529
      %v543 = vpop.f32.mrf.mxu0
      %v544 = vadd.f32 0.0, %v543
      %v545 = vpop.f32.mrf.mxu0
      %546 = vdwg.mxu0
      %v547 = vmul.f32 %v544, 0.35355338
      %v548 = vadd.f32 %v547, %v354
      %s549 = scalar_lea.vmem [#allocation2], 16
      %v550 = vld [vmem:[%s549] sm:$0xff]
      %v551 = vsel %vm355, %v548, -inf
      %552 = vmax.xlane.f32.xlu0 %v551
      %v553 = vpop.xlane.xlu0 %552
      %v554 = vmax.f32 %v550, %v553
      %v555 = vsub.f32 %v550, %v554
      %v556 = vmul.f32 %v555, 1.442695
      %v557 = vpow.pop %v556
      %559 = vset.pattern.permute.xlu0 0
      %560 = vperm.xlu0 %559, %v554
      %v561 = vpop.permute.xlu0 %560
      %v563 = vsub.f32 %v548, %v561
      %v564 = vmul.f32 %v563, 1.442695
      %v565 = vpow.pop %v564
      %s566 = scalar_lea.vmem [#allocation3], 16
      %v567 = vld [vmem:[%s566] sm:$0xff]
      %v568 = vmul.f32 %v557, %v567
      %v569 = vsel %vm355, %v565, 0.0
      %570 = vadd.xlane.f32.xlu0 %v569
      %v571 = vpop.xlane.xlu0 %570
      %v572 = vadd.f32 %v568, %v571
      %573 = vst.msk [vmem:[%s566] sm:$0xff] %vm399, %v572
      %s574 = scalar_lea.vmem [#allocation4], 16
      %v575 = vld [vmem:[%s574] sm:$0xff]
      %577 = vset.pattern.permute.xlu0 0
      %578 = vperm.xlu0 %577, %v557
      %v579 = vpop.permute.xlu0 %578
      %v581 = vmul.f32 %v579, %v575
      %v582 = vpack.c.bf16 %v565, %v565
      %583 = vrot.lane.b32.xlu0 %v499, 112
      %v584 = vpop.permute.xlu0 %583
      %v586 = vsel %vm355, %v582, 0
      %v589 = vsel %vm412, %v584, 0
      %591 = vmatpush.bf16.msra.mxu0 0
      %592 = vmatpush.bf16.msra.mxu0 0
      %593 = vmatpush.bf16.msra.mxu0 0
      %594 = vmatpush.bf16.msra.mxu0 0
      %595 = vmatpush.bf16.msra.mxu0 0
      %596 = vmatpush.bf16.msra.mxu0 0
      %597 = vmatpush.bf16.msra.mxu0 0
      %598 = vmatpush.bf16.msra.mxu0 %v589
      %599 = vmatmul.bf16.gmra.mxu0 %v586
      %v600 = vpop.f32.mrf.mxu0
      %v601 = vadd.f32 0.0, %v600
      %v602 = vpop.f32.mrf.mxu0
      %603 = vdwg.mxu0
      %v604 = vadd.f32 %v581, %v601
      %605 = vst.msk [vmem:[%s574] sm:$0xff] %vm355, %v604
      %606 = vst.msk [vmem:[%s549] sm:$0xff] %vm399, %v554
      %607 = vrot.lane.b32.xlu0 %v434, 104
      %v608 = vpop.permute.xlu0 %607
      %609 = vrot.lane.b32.xlu0 %v439, 104
      %v610 = vpop.permute.xlu0 %609
      %v612 = vsel %vm355, %v608, 0
      %v615 = vsel %vm355, %v610, 0
      %617 = vmatpush.bf16.xpose.msra.mxu0 0
      %618 = vmatpush.bf16.xpose.msra.mxu0 0
      %619 = vmatpush.bf16.xpose.msra.mxu0 0
      %620 = vmatpush.bf16.xpose.msra.mxu0 0
      %621 = vmatpush.bf16.xpose.msra.mxu0 0
      %622 = vmatpush.bf16.xpose.msra.mxu0 0
      %623 = vmatpush.bf16.xpose.msra.mxu0 0
      %624 = vmatpush.bf16.xpose.msra.mxu0 %v615
      %625 = vmatmul.bf16.gmra.mxu0 %v612
      %v626 = vpop.f32.mrf.mxu0
      %v627 = vadd.f32 0.0, %v626
      %v628 = vpop.f32.mrf.mxu0
      %629 = vdwg.mxu0
      %v630 = vmul.f32 %v627, 0.35355338
      %v631 = vadd.f32 %v630, %v354
      %s632 = scalar_lea.vmem [#allocation2], 24
      %v633 = vld [vmem:[%s632] sm:$0xff]
      %v634 = vsel %vm355, %v631, -inf
      %635 = vmax.xlane.f32.xlu0 %v634
      %v636 = vpop.xlane.xlu0 %635
      %v637 = vmax.f32 %v633, %v636
      %v638 = vsub.f32 %v633, %v637
      %v639 = vmul.f32 %v638, 1.442695
      %v640 = vpow.pop %v639
      %642 = vset.pattern.permute.xlu0 0
      %643 = vperm.xlu0 %642, %v637
      %v644 = vpop.permute.xlu0 %643
      %v646 = vsub.f32 %v631, %v644
      %v647 = vmul.f32 %v646, 1.442695
      %v648 = vpow.pop %v647
      %s649 = scalar_lea.vmem [#allocation3], 24
      %v650 = vld [vmem:[%s649] sm:$0xff]
      %v651 = vmul.f32 %v640, %v650
      %v652 = vsel %vm355, %v648, 0.0
      %653 = vadd.xlane.f32.xlu0 %v652
      %v654 = vpop.xlane.xlu0 %653
      %v655 = vadd.f32 %v651, %v654
      %656 = vst.msk [vmem:[%s649] sm:$0xff] %vm399, %v655
      %s657 = scalar_lea.vmem [#allocation4], 24
      %v658 = vld [vmem:[%s657] sm:$0xff]
      %660 = vset.pattern.permute.xlu0 0
      %661 = vperm.xlu0 %660, %v640
      %v662 = vpop.permute.xlu0 %661
      %v664 = vmul.f32 %v662, %v658
      %v665 = vpack.c.bf16 %v648, %v648
      %666 = vrot.lane.b32.xlu0 %v499, 104
      %v667 = vpop.permute.xlu0 %666
      %v669 = vsel %vm355, %v665, 0
      %v672 = vsel %vm412, %v667, 0
      %674 = vmatpush.bf16.msra.mxu0 0
      %675 = vmatpush.bf16.msra.mxu0 0
      %676 = vmatpush.bf16.msra.mxu0 0
      %677 = vmatpush.bf16.msra.mxu0 0
      %678 = vmatpush.bf16.msra.mxu0 0
      %679 = vmatpush.bf16.msra.mxu0 0
      %680 = vmatpush.bf16.msra.mxu0 0
      %681 = vmatpush.bf16.msra.mxu0 %v672
      %682 = vmatmul.bf16.gmra.mxu0 %v669
      %v683 = vpop.f32.mrf.mxu0
      %v684 = vadd.f32 0.0, %v683
      %v685 = vpop.f32.mrf.mxu0
      %686 = vdwg.mxu0
      %v687 = vadd.f32 %v664, %v684
      %688 = vst.msk [vmem:[%s657] sm:$0xff] %vm355, %v687
      %689 = vst.msk [vmem:[%s632] sm:$0xff] %vm399, %v637
      // Predicated region
      $region41: #{decoder_forward.18} parent=35 // pred_check
        %p690 = pneg %p319
      $region42: #{decoder_forward.18} parent=35 // pred_check_branch
        %692 = sbr.rel (%p690) target = $region44
      $region43: #{decoder_forward.18} parent=35 // pred_region
        %v693 = vld [vmem:[#allocation4] sm:$0xff]
        %v694 = vld [vmem:[#allocation3] sm:$0xff]
        %v695 = vrcp.pop %v694
        %697 = vset.pattern.permute.xlu0 0
        %698 = vperm.xlu0 %697, %v695
        %v699 = vpop.permute.xlu0 %698
        %v701 = vmul.f32 %v693, %v699
        %v702 = vld [vmem:[%s488] sm:$0xff]
        %v703 = vld [vmem:[%s480] sm:$0xff]
        %v704 = vrcp.pop %v703
        %706 = vset.pattern.permute.xlu0 0
        %707 = vperm.xlu0 %706, %v704
        %v708 = vpop.permute.xlu0 %707
        %v710 = vmul.f32 %v702, %v708
        %v711 = vld [vmem:[%s574] sm:$0xff]
        %v712 = vld [vmem:[%s566] sm:$0xff]
        %v713 = vrcp.pop %v712
        %715 = vset.pattern.permute.xlu0 0
        %716 = vperm.xlu0 %715, %v713
        %v717 = vpop.permute.xlu0 %716
        %v719 = vmul.f32 %v711, %v717
        %v720 = vld [vmem:[%s657] sm:$0xff]
        %v721 = vld [vmem:[%s649] sm:$0xff]
        %v722 = vrcp.pop %v721
        %724 = vset.pattern.permute.xlu0 0
        %725 = vperm.xlu0 %724, %v722
        %v726 = vpop.permute.xlu0 %725
        %v728 = vmul.f32 %v720, %v726
        %730 = vrot.lane.b32.xlu0 %v710, 8
        %v731 = vpop.permute.xlu0 %730
        %734 = vrot.lane.b32.xlu0 %v719, 16
        %v735 = vpop.permute.xlu0 %734
        %738 = vrot.lane.b32.xlu0 %v728, 24
        %v739 = vpop.permute.xlu0 %738
        %v741 = vsel %vm355, %v701, %v731
        %vm742 = vcmask 130048
        %v743 = vsel %vm742, %v741, %v735
        %vm744 = vcmask 195584
        %v745 = vsel %vm744, %v743, %v739
        %v746 = vpack.c.bf16 %v745, %v745
        %vm747 = vcmask 257024
        %748 = vst.msk [vmem:[%s317] sm:$0xf] %vm747, %v746
      $region44: #{decoder_forward.18} parent=35 // pred_fallthru
        _
      %p749 = scmp.lt.s32.totalorder %s20, 1
      %s750 = scalar_select %p749, %s20, 1
      %p751 = scmp.lt.s32.totalorder %s21, 0
      %s752 = scalar_select %p751, %s21, 0
      %s753 = sadd.s32 %s752, %s750
      %s754 = smul.addr %s753, 4
      %s755 = scalar_lea.vmem %s4, %s754
      // Predicated region
      $region45: #{decoder_forward.18} parent=35 // pred_check
        %p756 = pneg %p166
      $region46: #{decoder_forward.18} parent=35 // pred_check_branch
        %758 = sbr.rel (%p756) target = $region48
      $region47: #{decoder_forward.18} parent=35 // pred_region
        _
      $region48: #{decoder_forward.18} parent=35 // pred_fallthru
        _
    $region36: #{decoder_forward.18} parent=5 // pred_fallthru
      _
    %p759 = scmp.le.s32.totalorder 2, %s10
    // Predicated region
    $region49: #{decoder_forward.18} parent=5 // pred_check
      %p760 = pneg %p759
    $region50: #{decoder_forward.18} parent=5 // pred_check_branch
      %762 = sbr.rel (%p760) target = $region52
    $region51: #{decoder_forward.18} parent=5 // pred_region
      %s763 = ssub.s32 %s10, 2
      // Predicated region
      $region53: #{decoder_forward.18} parent=51 // pred_check
        %p764 = pneg %p172
      $region54: #{decoder_forward.18} parent=51 // pred_check_branch
        %766 = sbr.rel (%p764) target = $region56
      $region55: #{decoder_forward.18} parent=51 // pred_region
        %p767 = scmp.lt.s32.totalorder %s23, 1
        %s768 = scalar_select %p767, %s23, 1
        %p769 = scmp.lt.s32.totalorder %s24, 0
        %s770 = scalar_select %p769, %s24, 0
        %s771 = sadd.s32 %s770, %s768
        %s772 = smul.addr %s771, 4
        %s773 = scalar_lea.vmem %s4, %s772
      $region56: #{decoder_forward.18} parent=51 // pred_fallthru
        _
    $region52: #{decoder_forward.18} parent=5 // pred_fallthru
      _
  $region6: #{decoder_forward.18} parent=0 // loop_footer
    %s14 = sadd.s32 1, %s10
  $region7: #{decoder_forward.18} parent=0 // loop_footer_branch
    %9 = sbr.rel target = $region3
  $region8: #{decoder_forward.18} parent=0 // loop_exit
    _

// kernel: decoder_forward.21
$region0: #{decoder_forward.21}
  #allocation0 [shape = 'u32[]', space=smem, size = 0x4, offset = 0x4, fixed_abs, tag = 'smem constant byte address 0x4 - core index']
  #allocation1 [shape = 'u32[72,128]{1,0:T(1,128)}', space=vmem, size = 0x9000, scoped, tag = 'internal scratch']
  #allocation2 [shape = 'f32[16,32]{1,0:T(8,128)}', space=vmem, size = 0x2000, scoped, tag = 'scratch operand']
  %s0 = inlined_call_operand.vmem [shape: bf16[16,32], index: 0, kind: input, shape index: {}]
  %s1 = inlined_call_operand.vmem [shape: bf16[2,32,32], index: 1, kind: input, shape index: {}]
  %s2 = inlined_call_operand.vmem [shape: f32[2,1,32], index: 2, kind: input, shape index: {}]
  %s3 = inlined_call_operand.vmem [shape: bf16[2,16,32], index: 3, kind: output, shape index: {}]
  %s4 = sld [smem:[#allocation0]]
  $region53: #{decoder_forward.21} parent=0
    _
  %s6 = ssub.s32 1, %s4
  %s7 = scalar_select 0, %s6, %s4
  loop: start=0, step=1, limit=4
  $region2: #{decoder_forward.21} parent=0 // loop_pre_header
    _
  $region3: #{decoder_forward.21} parent=0 // loop_header
    %s9 = sphi 0, %s13
    %p10 = scmp.ge.s32.totalorder %s9, 4
    %s16 = sphi 0, %s42
    %s17 = sphi 0, %s38
    %s18 = sphi 0, %s34
    %s19 = sphi 0, %s30
    %s20 = sphi 0, %s16
    %s21 = sphi 0, %s17
    %s22 = sphi 0, %s18
    %s23 = sphi 0, %s19
    %s24 = sphi 0, %s20
    %s25 = sphi 0, %s21
    %s26 = sphi 0, %s22
    %s27 = sphi 0, %s23
    %s47 = sphi 0, %s49
    %s50 = sphi 0, %s47
    %s51 = sphi 0, %s50
    %s67 = sphi 0, %s51
    %s77 = sphi 0, %s79
    %s80 = sphi 0, %s77
    %s81 = sphi 0, %s80
    %s97 = sphi 0, %s81
    %s105 = sphi 0, %s107
    %s108 = sphi 0, %s105
    %s109 = sphi 0, %s108
    %s125 = sphi 0, %s109
    %s135 = sphi 0, %s137
    %s138 = sphi 0, %s135
    %s139 = sphi 0, %s138
    %s155 = sphi 0, %s139
  $region4: #{decoder_forward.21} parent=0 // loop_header_branch
    %12 = sbr.rel (%p10) target = $region8
  $region5: #{decoder_forward.21} parent=0 // loop_body
    %s14 = ssub.s32 %s9, 1
    %s15 = ssub.s32 %s9, 2
    %s28 = sadd.s32 1, %s19
    %p29 = scmp.ge.s32.totalorder %s28, 1
    %s30 = scalar_select %p29, 0, %s28
    %s31 = sadd.s32 1, %s18
    %s32 = scalar_select %p29, %s31, %s18
    %p33 = scmp.ge.s32.totalorder %s32, 1
    %s34 = scalar_select %p33, 0, %s32
    %s35 = sadd.s32 1, %s17
    %s36 = scalar_select %p33, %s35, %s17
    %p37 = scmp.ge.s32.totalorder %s36, 1
    %s38 = scalar_select %p37, 0, %s36
    %s39 = sadd.s32 1, %s16
    %s40 = scalar_select %p37, %s39, %s16
    %p41 = scmp.ge.s32.totalorder %s40, 2
    %s42 = scalar_select %p41, 0, %s40
    %s43 = ssub.s32 %s17, %s38
    %s44 = ssub.s32 %s19, %s30
    %s45 = sor.u32 %s43, %s44
    %p46 = scmp.eq.s32.totalorder %s45, 0
    %s48 = sadd.s32 %s47, 1
    %s49 = scalar_select %p46, %s47, %s48
    %p52 = pneg %p46
    %p53 = scmp.eq.s32.totalorder %s9, 1
    %p54 = por %p52, %p53
    %p55 = scmp.ne.s32.totalorder %s47, %s50
    %p56 = scmp.eq.s32.totalorder %s9, 0
    %p57 = por %p55, %p56
    %p58 = scmp.ne.s32.totalorder %s47, %s50
    %p59 = scmp.eq.s32.totalorder %s14, 1
    %p60 = por %p58, %p59
    %p61 = scmp.ne.s32.totalorder %s50, %s51
    %p62 = scmp.eq.s32.totalorder %s14, 0
    %p63 = por %p61, %p62
    %p64 = scmp.ne.s32.totalorder %s50, %s51
    %p65 = scmp.eq.s32.totalorder %s15, 1
    %p66 = por %p64, %p65
    %p68 = scmp.ne.s32.totalorder %s51, %s67
    %p69 = scmp.eq.s32.totalorder %s15, 0
    %p70 = por %p68, %p69
    %s71 = ssub.s32 %s16, %s42
    %s72 = ssub.s32 %s19, %s30
    %s73 = sor.u32 %s71, %s72
    %s74 = ssub.s32 %s18, %s34
    %s75 = sor.u32 %s73, %s74
    %p76 = scmp.eq.s32.totalorder %s75, 0
    %s78 = sadd.s32 %s77, 1
    %s79 = scalar_select %p76, %s77, %s78
    %p82 = pneg %p76
    %p83 = scmp.eq.s32.totalorder %s9, 1
    %p84 = por %p82, %p83
    %p85 = scmp.ne.s32.totalorder %s77, %s80
    %p86 = scmp.eq.s32.totalorder %s9, 0
    %p87 = por %p85, %p86
    %p88 = scmp.ne.s32.totalorder %s77, %s80
    %p89 = scmp.eq.s32.totalorder %s14, 1
    %p90 = por %p88, %p89
    %p91 = scmp.ne.s32.totalorder %s80, %s81
    %p92 = scmp.eq.s32.totalorder %s14, 0
    %p93 = por %p91, %p92
    %p94 = scmp.ne.s32.totalorder %s80, %s81
    %p95 = scmp.eq.s32.totalorder %s15, 1
    %p96 = por %p94, %p95
    %p98 = scmp.ne.s32.totalorder %s81, %s97
    %p99 = scmp.eq.s32.totalorder %s15, 0
    %p100 = por %p98, %p99
    %s101 = ssub.s32 %s16, %s42
    %s102 = ssub.s32 %s18, %s34
    %s103 = sor.u32 %s101, %s102
    %p104 = scmp.eq.s32.totalorder %s103, 0
    %s106 = sadd.s32 %s105, 1
    %s107 = scalar_select %p104, %s105, %s106
    %p110 = pneg %p104
    %p111 = scmp.eq.s32.totalorder %s9, 1
    %p112 = por %p110, %p111
    %p113 = scmp.ne.s32.totalorder %s105, %s108
    %p114 = scmp.eq.s32.totalorder %s9, 0
    %p115 = por %p113, %p114
    %p116 = scmp.ne.s32.totalorder %s105, %s108
    %p117 = scmp.eq.s32.totalorder %s14, 1
    %p118 = por %p116, %p117
    %p119 = scmp.ne.s32.totalorder %s108, %s109
    %p120 = scmp.eq.s32.totalorder %s14, 0
    %p121 = por %p119, %p120
    %p122 = scmp.ne.s32.totalorder %s108, %s109
    %p123 = scmp.eq.s32.totalorder %s15, 1
    %p124 = por %p122, %p123
    %p126 = scmp.ne.s32.totalorder %s109, %s125
    %p127 = scmp.eq.s32.totalorder %s15, 0
    %p128 = por %p126, %p127
    %s129 = ssub.s32 %s16, %s42
    %s130 = ssub.s32 %s17, %s38
    %s131 = sor.u32 %s129, %s130
    %s132 = ssub.s32 %s18, %s34
    %s133 = sor.u32 %s131, %s132
    %p134 = scmp.eq.s32.totalorder %s133, 0
    %s136 = sadd.s32 %s135, 1
    %s137 = scalar_select %p134, %s135, %s136
    %p140 = pneg %p134
    %p141 = scmp.eq.s32.totalorder %s9, 1
    %p142 = por %p140, %p141
    %p143 = scmp.ne.s32.totalorder %s135, %s138
    %p144 = scmp.eq.s32.totalorder %s9, 0
    %p145 = por %p143, %p144
    %p146 = scmp.ne.s32.totalorder %s135, %s138
    %p147 = scmp.eq.s32.totalorder %s14, 1
    %p148 = por %p146, %p147
    %p149 = scmp.ne.s32.totalorder %s138, %s139
    %p150 = scmp.eq.s32.totalorder %s14, 0
    %p151 = por %p149, %p150
    %p152 = scmp.ne.s32.totalorder %s138, %s139
    %p153 = scmp.eq.s32.totalorder %s15, 1
    %p154 = por %p152, %p153
    %p156 = scmp.ne.s32.totalorder %s139, %s155
    %p157 = scmp.eq.s32.totalorder %s15, 0
    %p158 = por %p156, %p157
    %p159 = scmp.le.s32.totalorder 1, %s9
    %p160 = scmp.lt.s32.totalorder %s9, 3
    %p161 = pnand %p159, %p160
    %p162 = pneg %p161
    // Predicated region
    $region9: #{decoder_forward.21} parent=5 // pred_check
      _
    $region10: #{decoder_forward.21} parent=5 // pred_check_branch
      %164 = sbr.rel (%p161) target = $region12
    $region11: #{decoder_forward.21} parent=5 // pred_region
      %s165 = ssub.s32 %s9, 1
      // Predicated region
      $region13: #{decoder_forward.21} parent=11 // pred_check
        %p166 = pneg %p63
      $region14: #{decoder_forward.21} parent=11 // pred_check_branch
        %168 = sbr.rel (%p166) target = $region16
      $region15: #{decoder_forward.21} parent=11 // pred_region
        %s169 = smul.u32 2, %s21
        %p170 = scmp.lt.s32.totalorder %s169, 1
        %s171 = scalar_select %p170, %s169, 1
        %p172 = scmp.lt.s32.totalorder %s23, 0
        %s173 = scalar_select %p172, %s23, 0
        %s174 = sadd.s32 %s173, %s171
        %s175 = smul.addr %s174, 4
        %s176 = scalar_lea.vmem %s0, %s175
        %s177 = smul.u32 2, %s21
      $region16: #{decoder_forward.21} parent=11 // pred_fallthru
        _
    $region12: #{decoder_forward.21} parent=5 // pred_fallthru
      _
    %p178 = scmp.lt.s32.totalorder %s9, 2
    // Predicated region
    $region17: #{decoder_forward.21} parent=5 // pred_check
      %p179 = pneg %p178
    $region18: #{decoder_forward.21} parent=5 // pred_check_branch
      %181 = sbr.rel (%p179) target = $region20
    $region19: #{decoder_forward.21} parent=5 // pred_region
      // Predicated region
      $region21: #{decoder_forward.21} parent=19 // pred_check
        %p182 = pneg %p87
      $region22: #{decoder_forward.21} parent=19 // pred_check_branch
        %184 = sbr.rel (%p182) target = $region24
      $region23: #{decoder_forward.21} parent=19 // pred_region
        %s185 = smul.u32 4, %s19
        %p186 = scmp.lt.s32.totalorder %s16, 1
        %s187 = scalar_select %p186, %s16, 1
        %p188 = scmp.lt.s32.totalorder %s185, 3
        %s189 = scalar_select %p188, %s185, 3
        %p190 = scmp.lt.s32.totalorder %s18, 0
        %s191 = scalar_select %p190, %s18, 0
        %s192 = sadd.s32 %s191, %s189
        %s193 = smul.addr %s187, 4
        %s194 = sadd.s32 %s192, %s193
        %s195 = smul.addr %s194, 4
        %s196 = scalar_lea.vmem %s1, %s195
        %s197 = smul.u32 4, %s19
      $region24: #{decoder_forward.21} parent=19 // pred_fallthru
        _
      // Predicated region
      $region25: #{decoder_forward.21} parent=19 // pred_check
        %p198 = pneg %p115
      $region26: #{decoder_forward.21} parent=19 // pred_check_branch
        %200 = sbr.rel (%p198) target = $region28
      $region27: #{decoder_forward.21} parent=19 // pred_region
        %p201 = scmp.lt.s32.totalorder %s16, 1
        %s202 = scalar_select %p201, %s16, 1
        %p203 = scmp.lt.s32.totalorder %s18, 0
        %s204 = scalar_select %p203, %s18, 0
        %s205 = sadd.s32 %s204, %s202
        %s206 = scalar_lea.vmem %s2, %s205
      $region28: #{decoder_forward.21} parent=19 // pred_fallthru
        _
    $region20: #{decoder_forward.21} parent=5 // pred_fallthru
      _
    %p207 = scmp.le.s32.totalorder 1, %s9
    %p208 = scmp.lt.s32.totalorder %s9, 3
    %p209 = pnand %p207, %p208
    %p210 = pneg %p209
    // Predicated region
    $region29: #{decoder_forward.21} parent=5 // pred_check
      _
    $region30: #{decoder_forward.21} parent=5 // pred_check_branch
      %212 = sbr.rel (%p209) target = $region32
    $region31: #{decoder_forward.21} parent=5 // pred_region
      %s213 = ssub.s32 %s9, 1
      %s214 = smul.u32 2, %s21
      %p215 = scmp.lt.s32.totalorder %s214, 1
      %s216 = scalar_select %p215, %s214, 1
      %p217 = scmp.lt.s32.totalorder %s23, 0
      %s218 = scalar_select %p217, %s23, 0
      %s219 = sadd.s32 %s218, %s216
      %s220 = smul.addr %s219, 4
      %s221 = scalar_lea.vmem %s0, %s220
      %p222 = pneg %p63
      %p223 = pneg %p60
      %s224 = smul.u32 4, %s23
      %p225 = scmp.lt.s32.totalorder %s20, 1
      %s226 = scalar_select %p225, %s20, 1
      %p227 = scmp.lt.s32.totalorder %s224, 3
      %s228 = scalar_select %p227, %s224, 3
      %p229 = scmp.lt.s32.totalorder %s22, 0
      %s230 = scalar_select %p229, %s22, 0
      %s231 = sadd.s32 %s230, %s228
      %s232 = smul.addr %s226, 4
      %s233 = sadd.s32 %s231, %s232
      %s234 = smul.addr %s233, 4
      %s235 = scalar_lea.vmem %s1, %s234
      %p236 = pneg %p93
      %p237 = pneg %p90
      %p238 = scmp.lt.s32.totalorder %s20, 1
      %s239 = scalar_select %p238, %s20, 1
      %p240 = scmp.lt.s32.totalorder %s22, 0
      %s241 = scalar_select %p240, %s22, 0
      %s242 = sadd.s32 %s241, %s239
      %s243 = scalar_lea.vmem %s2, %s242
      %p244 = pneg %p121
      %p245 = pneg %p118
      %p246 = pneg %p151
      %p247 = pneg %p148
      %s248 = smul.u32 2, %s21
      %p249 = scmp.lt.s32.totalorder %s20, 1
      %s250 = scalar_select %p249, %s20, 1
      %p251 = scmp.lt.s32.totalorder %s248, 1
      %s252 = scalar_select %p251, %s248, 1
      %p253 = scmp.lt.s32.totalorder %s22, 0
      %s254 = scalar_select %p253, %s22, 0
      %s255 = sadd.s32 %s254, %s252
      %s256 = smul.addr %s250, 2
      %s257 = sadd.s32 %s255, %s256
      %s258 = smul.addr %s257, 4
      %s259 = scalar_lea.vmem %s3, %s258
      %s260 = smul.u32 2, %s21
      %p261 = scmp.lt.s32.totalorder %s260, 1
      %s262 = scalar_select %p261, %s260, 1
      %p263 = scmp.lt.s32.totalorder %s23, 0
      %s264 = scalar_select %p263, %s23, 0
      %s265 = sadd.s32 %s264, %s262
      %s266 = smul.addr %s265, 4
      %s267 = scalar_lea.vmem %s0, %s266
      %s268 = smul.u32 2, %s21
      %s269 = smul.u32 4, %s23
      %p270 = scmp.lt.s32.totalorder %s20, 1
      %s271 = scalar_select %p270, %s20, 1
      %p272 = scmp.lt.s32.totalorder %s269, 3
      %s273 = scalar_select %p272, %s269, 3
      %p274 = scmp.lt.s32.totalorder %s22, 0
      %s275 = scalar_select %p274, %s22, 0
      %s276 = sadd.s32 %s275, %s273
      %s277 = smul.addr %s271, 4
      %s278 = sadd.s32 %s276, %s277
      %s279 = smul.addr %s278, 4
      %s280 = scalar_lea.vmem %s1, %s279
      %s281 = smul.u32 4, %s23
      %p282 = scmp.lt.s32.totalorder %s20, 1
      %s283 = scalar_select %p282, %s20, 1
      %p284 = scmp.lt.s32.totalorder %s22, 0
      %s285 = scalar_select %p284, %s22, 0
      %s286 = sadd.s32 %s285, %s283
      %s287 = scalar_lea.vmem %s2, %s286
      %s288 = smul.u32 2, %s21
      %p289 = scmp.lt.s32.totalorder %s20, 1
      %s290 = scalar_select %p289, %s20, 1
      %p291 = scmp.lt.s32.totalorder %s288, 1
      %s292 = scalar_select %p291, %s288, 1
      %p293 = scmp.lt.s32.totalorder %s22, 0
      %s294 = scalar_select %p293, %s22, 0
      %s295 = sadd.s32 %s294, %s292
      %s296 = smul.addr %s290, 2
      %s297 = sadd.s32 %s295, %s296
      %s298 = smul.addr %s297, 4
      %s299 = scalar_lea.vmem %s3, %s298
      %s300 = smul.u32 2, %s21
      %p302 = scmp.eq.s32.totalorder %s23, 0
      // Predicated region
      $region33: #{decoder_forward.21} parent=31 // pred_check
        %p303 = pneg %p302
      $region34: #{decoder_forward.21} parent=31 // pred_check_branch
        %305 = sbr.rel (%p303) target = $region36
      $region35: #{decoder_forward.21} parent=31 // pred_region
        %vm306 = vcmask 261120
        %307 = vst.msk [vmem:[#allocation2] sm:$0xff] %vm306, 0.0
        %308 = vst.msk [vmem:[#allocation2 + $0x8] sm:$0xff] %vm306, 0.0
      $region36: #{decoder_forward.21} parent=31 // pred_fallthru
        _
      %v309 = vld [vmem:[#allocation2] sm:$0xff]
      %v310 = vld [vmem:[#allocation2 + $0x8] sm:$0xff]
      %v311 = vld [vmem:[%s267] sm:$0xf]
      %v312 = vld [vmem:[%s267 + $0x4] sm:$0xf]
      %v313 = vld [vmem:[%s280] sm:$0xf]
      %v314 = vld [vmem:[%s280 + $0x4] sm:$0xf]
      %v315 = vld [vmem:[%s280 + $0x8] sm:$0xf]
      %v316 = vld [vmem:[%s280 + $0xc] sm:$0xf]
      %v319 = vunpack.c.l.b16 %v311
      %v320 = vunpack.c.l.b16 %v312
      %v321 = vpack.c.b16 %v320, %v319
      %v326 = vunpack.c.l.b16 %v313
      %v327 = vunpack.c.l.b16 %v314
      %v328 = vunpack.c.l.b16 %v315
      %v329 = vunpack.c.l.b16 %v316
      %v330 = vpack.c.b16 %v327, %v326
      %v331 = vpack.c.b16 %v329, %v328
      %vm334 = vcmask 261120
      %v336 = vsel %vm334, %v321, 0
      %338 = vmatpush.bf16.msra.mxu0 0
      %339 = vmatpush.bf16.msra.mxu0 0
      %340 = vmatpush.bf16.msra.mxu0 0
      %341 = vmatpush.bf16.msra.mxu0 0
      %342 = vmatpush.bf16.msra.mxu0 0
      %343 = vmatpush.bf16.msra.mxu0 0
      %344 = vmatpush.bf16.msra.mxu0 %v331
      %345 = vmatpush.bf16.msra.mxu0 %v330
      %346 = vmatmul.bf16.gmra.mxu0 %v336
      %v347 = vpop.f32.mrf.mxu0
      %v348 = vadd.f32 0.0, %v347
      %v349 = vpop.f32.mrf.mxu0
      %v350 = vadd.f32 0.0, %v349
      %351 = vdwg.mxu0
      %v352 = vadd.f32 %v309, %v348
      %v353 = vadd.f32 %v310, %v350
      %354 = vst.msk [vmem:[#allocation2] sm:$0xff] %vm334, %v352
      %355 = vst.msk [vmem:[#allocation2 + $0x8] sm:$0xff] %vm334, %v353
      // Predicated region
      $region37: #{decoder_forward.21} parent=31 // pred_check
        %p356 = pneg %p302
      $region38: #{decoder_forward.21} parent=31 // pred_check_branch
        %358 = sbr.rel (%p356) target = $region40
      $region39: #{decoder_forward.21} parent=31 // pred_region
        %v359 = vld [vmem:[#allocation2] sm:$0xff]
        %v360 = vld [vmem:[#allocation2 + $0x8] sm:$0xff]
        %v361 = vld [vmem:[%s287] sm:$0x1]
        %v363 = vperm.slane %v361, 0
        %v365 = vadd.f32 %v359, %v363
        %v366 = vadd.f32 %v360, %v363
        %v367 = vpack.c.bf16 %v365, %v365
        %v368 = vpack.c.bf16 %v366, %v366
        %vm369 = vcmask 257024
        %370 = vst.msk [vmem:[%s299] sm:$0xf] %vm369, %v367
        %371 = vst.msk [vmem:[%s299 + $0x4] sm:$0xf] %vm369, %v368
      $region40: #{decoder_forward.21} parent=31 // pred_fallthru
        _
      %s372 = smul.u32 2, %s21
      %p373 = scmp.lt.s32.totalorder %s20, 1
      %s374 = scalar_select %p373, %s20, 1
      %p375 = scmp.lt.s32.totalorder %s372, 1
      %s376 = scalar_select %p375, %s372, 1
      %p377 = scmp.lt.s32.totalorder %s22, 0
      %s378 = scalar_select %p377, %s22, 0
      %s379 = sadd.s32 %s378, %s376
      %s380 = smul.addr %s374, 2
      %s381 = sadd.s32 %s379, %s380
      %s382 = smul.addr %s381, 4
      %s383 = scalar_lea.vmem %s3, %s382
      // Predicated region
      $region41: #{decoder_forward.21} parent=31 // pred_check
        %p384 = pneg %p148
      $region42: #{decoder_forward.21} parent=31 // pred_check_branch
        %386 = sbr.rel (%p384) target = $region44
      $region43: #{decoder_forward.21} parent=31 // pred_region
        %s387 = smul.u32 2, %s21
      $region44: #{decoder_forward.21} parent=31 // pred_fallthru
        _
    $region32: #{decoder_forward.21} parent=5 // pred_fallthru
      _
    %p388 = scmp.le.s32.totalorder 2, %s9
    // Predicated region
    $region45: #{decoder_forward.21} parent=5 // pred_check
      %p389 = pneg %p388
    $region46: #{decoder_forward.21} parent=5 // pred_check_branch
      %391 = sbr.rel (%p389) target = $region48
    $region47: #{decoder_forward.21} parent=5 // pred_region
      %s392 = ssub.s32 %s9, 2
      // Predicated region
      $region49: #{decoder_forward.21} parent=47 // pred_check
        %p393 = pneg %p154
      $region50: #{decoder_forward.21} parent=47 // pred_check_branch
        %395 = sbr.rel (%p393) target = $region52
      $region51: #{decoder_forward.21} parent=47 // pred_region
        %s396 = smul.u32 2, %s25
        %p397 = scmp.lt.s32.totalorder %s24, 1
        %s398 = scalar_select %p397, %s24, 1
        %p399 = scmp.lt.s32.totalorder %s396, 1
        %s400 = scalar_select %p399, %s396, 1
        %p401 = scmp.lt.s32.totalorder %s26, 0
        %s402 = scalar_select %p401, %s26, 0
        %s403 = sadd.s32 %s402, %s400
        %s404 = smul.addr %s398, 2
        %s405 = sadd.s32 %s403, %s404
        %s406 = smul.addr %s405, 4
        %s407 = scalar_lea.vmem %s3, %s406
      $region52: #{decoder_forward.21} parent=47 // pred_fallthru
        _
    $region48: #{decoder_forward.21} parent=5 // pred_fallthru
      _
  $region6: #{decoder_forward.21} parent=0 // loop_footer
    %s13 = sadd.s32 1, %s9
  $region7: #{decoder_forward.21} parent=0 // loop_footer_branch
    %8 = sbr.rel target = $region3
  $region8: #{decoder_forward.21} parent=0 // loop_exit
    _

// kernel: decoder_forward.33
$region0: #{decoder_forward.33}
  #allocation0 [shape = 'u32[]', space=smem, size = 0x4, offset = 0x4, fixed_abs, tag = 'smem constant byte address 0x4 - core index']
  #allocation1 [shape = 'u32[72,128]{1,0:T(1,128)}', space=vmem, size = 0x9000, scoped, tag = 'internal scratch']
  #allocation2 [shape = 'f32[16,128]{1,0:T(8,128)}', space=vmem, size = 0x2000, scoped, tag = 'scratch operand']
  %s0 = inlined_call_operand.vmem [shape: bf16[16,32], index: 0, kind: input, shape index: {}]
  %s1 = inlined_call_operand.vmem [shape: bf16[32,128], index: 1, kind: input, shape index: {}]
  %s2 = inlined_call_operand.vmem [shape: f32[1,128], index: 2, kind: input, shape index: {}]
  %s3 = inlined_call_operand.hbm [shape: f32[16,128], index: 3, kind: output, shape index: {}]
  %s4 = sld [smem:[#allocation0]]
  $region30: #{decoder_forward.33} parent=0
    _
  %s6 = ssub.s32 1, %s4
  %s7 = scalar_select 0, %s6, %s4
  $region1: #{decoder_forward.33} parent=0
    #allocation3 [shape = 'u8[8192]{0}', space=vmem, size = 0x2000, scoped, tag = 'output window, operand 0, single buffered']
    #allocation4 [shape = 's32[1]{0}', space=sflag, size = 0x4, scoped, tag = 'scoped memory for decoder_forward.33']
    %8 = vsyncpa [#allocation4], 0
    // Predicated region
    $region2: #{decoder_forward.33} parent=1 // pred_check
      _
    $region3: #{decoder_forward.33} parent=1 // pred_check_branch
      %10 = sbr.rel (0) target = $region5
    $region4: #{decoder_forward.33} parent=1 // pred_region
      _
    $region5: #{decoder_forward.33} parent=1 // pred_fallthru
      _
    // Predicated region
    $region6: #{decoder_forward.33} parent=1 // pred_check
      _
    $region7: #{decoder_forward.33} parent=1 // pred_check_branch
      %12 = sbr.rel (0) target = $region9
    $region8: #{decoder_forward.33} parent=1 // pred_region
      _
    $region9: #{decoder_forward.33} parent=1 // pred_fallthru
      _
    // Predicated region
    $region10: #{decoder_forward.33} parent=1 // pred_check
      _
    $region11: #{decoder_forward.33} parent=1 // pred_check_branch
      %14 = sbr.rel (0) target = $region13
    $region12: #{decoder_forward.33} parent=1 // pred_region
      _
    $region13: #{decoder_forward.33} parent=1 // pred_fallthru
      _
    %p16 = scmp.eq.s32.totalorder 0, 0
    // Predicated region
    $region14: #{decoder_forward.33} parent=1 // pred_check
      %p17 = pneg %p16
    $region15: #{decoder_forward.33} parent=1 // pred_check_branch
      %19 = sbr.rel (%p17) target = $region17
    $region16: #{decoder_forward.33} parent=1 // pred_region
      %20 = vst [vmem:[#allocation2] sm:$0xff] 0.0
      %21 = vst [vmem:[#allocation2 + $0x8] sm:$0xff] 0.0
    $region17: #{decoder_forward.33} parent=1 // pred_fallthru
      _
    %v22 = vld [vmem:[#allocation2] sm:$0xff]
    %v23 = vld [vmem:[#allocation2 + $0x8] sm:$0xff]
    %v24 = vld [vmem:[%s0] sm:$0xf]
    %v25 = vld [vmem:[%s0 + $0x4] sm:$0xf]
    %v26 = vld [vmem:[%s1] sm:$0xf]
    %v27 = vld [vmem:[%s1 + $0x4] sm:$0xf]
    %v28 = vld [vmem:[%s1 + $0x8] sm:$0xf]
    %v29 = vld [vmem:[%s1 + $0xc] sm:$0xf]
    %v32 = vunpack.c.l.b16 %v24
    %v33 = vunpack.c.l.b16 %v25
    %v34 = vpack.c.b16 %v33, %v32
    %v39 = vunpack.c.l.b16 %v26
    %v40 = vunpack.c.l.b16 %v27
    %v41 = vunpack.c.l.b16 %v28
    %v42 = vunpack.c.l.b16 %v29
    %v43 = vpack.c.b16 %v40, %v39
    %v44 = vpack.c.b16 %v42, %v41
    %vm47 = vcmask 261120
    %v49 = vsel %vm47, %v34, 0
    %51 = vmatpush.bf16.msra.mxu0 0
    %52 = vmatpush.bf16.msra.mxu0 0
    %53 = vmatpush.bf16.msra.mxu0 0
    %54 = vmatpush.bf16.msra.mxu0 0
    %55 = vmatpush.bf16.msra.mxu0 0
    %56 = vmatpush.bf16.msra.mxu0 0
    %57 = vmatpush.bf16.msra.mxu0 %v44
    %58 = vmatpush.bf16.msra.mxu0 %v43
    %59 = vmatmul.bf16.gmra.mxu0 %v49
    %v60 = vpop.f32.mrf.mxu0
    %v61 = vadd.f32 0.0, %v60
    %v62 = vpop.f32.mrf.mxu0
    %v63 = vadd.f32 0.0, %v62
    %64 = vdwg.mxu0
    %v65 = vadd.f32 %v22, %v61
    %v66 = vadd.f32 %v23, %v63
    %67 = vst [vmem:[#allocation2] sm:$0xff] %v65
    %68 = vst [vmem:[#allocation2 + $0x8] sm:$0xff] %v66
    // Predicated region
    $region18: #{decoder_forward.33} parent=1 // pred_check
      %p69 = pneg %p16
    $region19: #{decoder_forward.33} parent=1 // pred_check_branch
      %71 = sbr.rel (%p69) target = $region21
    $region20: #{decoder_forward.33} parent=1 // pred_region
      %v72 = vld [vmem:[#allocation2] sm:$0xff]
      %v73 = vld [vmem:[#allocation2 + $0x8] sm:$0xff]
      %v74 = vld [vmem:[%s2] sm:$0x1]
      %v76 = vperm.slane %v74, 0
      %v78 = vadd.f32 %v72, %v76
      %v79 = vadd.f32 %v73, %v76
      %80 = vst [vmem:[#allocation3] sm:$0xff] %v78
      %81 = vst [vmem:[#allocation3 + $0x8] sm:$0xff] %v79
    $region21: #{decoder_forward.33} parent=1 // pred_fallthru
      _
    // Predicated region
    $region22: #{decoder_forward.33} parent=1 // pred_check
      _
    $region23: #{decoder_forward.33} parent=1 // pred_check_branch
      %83 = sbr.rel (0) target = $region25
    $region24: #{decoder_forward.33} parent=1 // pred_region
      %85 = vsyncadd [#allocation4], 0
      %s86 = sshll.u32 [#allocation3], 4
      %s87 = int_to_ptr.vmem [resolvable:$true] %s86
      %s88 = sshll.u32 %s3, 4
      %s89 = int_to_ptr.hbm [resolvable:$true] %s88
      %94 = dma.vmem_to_hbm [thread:$0]  %s87, 256, %s89, [#allocation4], 128, 128, 8
    $region25: #{decoder_forward.33} parent=1 // pred_fallthru
      _
    // Predicated region
    $region26: #{decoder_forward.33} parent=1 // pred_check
      _
    $region27: #{decoder_forward.33} parent=1 // pred_check_branch
      %96 = sbr.rel (0) target = $region29
    $region28: #{decoder_forward.33} parent=1 // pred_region
      %98 = dma.done [#allocation4], 256
    $region29: #{decoder_forward.33} parent=1 // pred_fallthru
      _
    %99 = vsyncpa [#allocation4], 1

// kernel: decoder_forward.24
$region0: #{decoder_forward.24}
  #allocation0 [shape = 'u32[]', space=smem, size = 0x4, offset = 0x4, fixed_abs, tag = 'smem constant byte address 0x4 - core index']
  #allocation1 [shape = 'u32[72,128]{1,0:T(1,128)}', space=vmem, size = 0x9000, scoped, tag = 'internal scratch']
  #allocation2 [shape = 'f32[16,32]{1,0:T(8,128)}', space=vmem, size = 0x2000, scoped, tag = 'scratch operand']
  %s0 = inlined_call_operand.vmem [shape: bf16[16,32], index: 0, kind: input, shape index: {}]
  %s1 = inlined_call_operand.vmem [shape: bf16[32,64], index: 1, kind: input, shape index: {}]
  %s2 = inlined_call_operand.vmem [shape: f32[1,64], index: 2, kind: input, shape index: {}]
  %s3 = inlined_call_operand.vmem [shape: bf16[64,32], index: 3, kind: input, shape index: {}]
  %s4 = inlined_call_operand.vmem [shape: f32[1,32], index: 4, kind: input, shape index: {}]
  %s5 = inlined_call_operand.vmem [shape: f32[1,32], index: 5, kind: input, shape index: {}]
  %s6 = inlined_call_operand.vmem [shape: f32[1,32], index: 6, kind: input, shape index: {}]
  %s7 = inlined_call_operand.vmem [shape: bf16[16,32], index: 7, kind: output, shape index: {}]
  %s8 = sld [smem:[#allocation0]]
  $region46: #{decoder_forward.24} parent=0
    _
  %s10 = ssub.s32 1, %s8
  %s11 = scalar_select 0, %s10, %s8
  // Predicated region
  $region2: #{decoder_forward.24} parent=0 // pred_check
    _
  $region3: #{decoder_forward.24} parent=0 // pred_check_branch
    %13 = sbr.rel (0) target = $region5
  $region4: #{decoder_forward.24} parent=0 // pred_region
    _
  $region5: #{decoder_forward.24} parent=0 // pred_fallthru
    _
  // Predicated region
  $region6: #{decoder_forward.24} parent=0 // pred_check
    _
  $region7: #{decoder_forward.24} parent=0 // pred_check_branch
    %15 = sbr.rel (0) target = $region9
  $region8: #{decoder_forward.24} parent=0 // pred_region
    _
  $region9: #{decoder_forward.24} parent=0 // pred_fallthru
    _
  // Predicated region
  $region10: #{decoder_forward.24} parent=0 // pred_check
    _
  $region11: #{decoder_forward.24} parent=0 // pred_check_branch
    %17 = sbr.rel (0) target = $region13
  $region12: #{decoder_forward.24} parent=0 // pred_region
    _
  $region13: #{decoder_forward.24} parent=0 // pred_fallthru
    _
  // Predicated region
  $region14: #{decoder_forward.24} parent=0 // pred_check
    _
  $region15: #{decoder_forward.24} parent=0 // pred_check_branch
    %19 = sbr.rel (0) target = $region17
  $region16: #{decoder_forward.24} parent=0 // pred_region
    _
  $region17: #{decoder_forward.24} parent=0 // pred_fallthru
    _
  // Predicated region
  $region18: #{decoder_forward.24} parent=0 // pred_check
    _
  $region19: #{decoder_forward.24} parent=0 // pred_check_branch
    %21 = sbr.rel (0) target = $region21
  $region20: #{decoder_forward.24} parent=0 // pred_region
    _
  $region21: #{decoder_forward.24} parent=0 // pred_fallthru
    _
  // Predicated region
  $region22: #{decoder_forward.24} parent=0 // pred_check
    _
  $region23: #{decoder_forward.24} parent=0 // pred_check_branch
    %23 = sbr.rel (0) target = $region25
  $region24: #{decoder_forward.24} parent=0 // pred_region
    _
  $region25: #{decoder_forward.24} parent=0 // pred_fallthru
    _
  // Predicated region
  $region26: #{decoder_forward.24} parent=0 // pred_check
    _
  $region27: #{decoder_forward.24} parent=0 // pred_check_branch
    %25 = sbr.rel (0) target = $region29
  $region28: #{decoder_forward.24} parent=0 // pred_region
    _
  $region29: #{decoder_forward.24} parent=0 // pred_fallthru
    _
  %p27 = scmp.eq.s32.totalorder 0, 0
  // Predicated region
  $region30: #{decoder_forward.24} parent=0 // pred_check
    %p28 = pneg %p27
  $region31: #{decoder_forward.24} parent=0 // pred_check_branch
    %30 = sbr.rel (%p28) target = $region33
  $region32: #{decoder_forward.24} parent=0 // pred_region
    %vm31 = vcmask 261120
    %32 = vst.msk [vmem:[#allocation2] sm:$0xff] %vm31, 0.0
    %33 = vst.msk [vmem:[#allocation2 + $0x8] sm:$0xff] %vm31, 0.0
  $region33: #{decoder_forward.24} parent=0 // pred_fallthru
    _
  %v34 = vld [vmem:[%s0] sm:$0xf]
  %v35 = vld [vmem:[%s0 + $0x4] sm:$0xf]
  %v36 = vld [vmem:[%s1] sm:$0xf]
  %v37 = vld [vmem:[%s1 + $0x4] sm:$0xf]
  %v38 = vld [vmem:[%s1 + $0x8] sm:$0xf]
  %v39 = vld [vmem:[%s1 + $0xc] sm:$0xf]
  %v40 = vld [vmem:[%s2] sm:$0x1]
  %v42 = vperm.slane %v40, 0
  %v46 = vunpack.c.l.b16 %v34
  %v47 = vunpack.c.l.b16 %v35
  %v48 = vpack.c.b16 %v47, %v46
  %v53 = vunpack.c.l.b16 %v36
  %v54 = vunpack.c.l.b16 %v37
  %v55 = vunpack.c.l.b16 %v38
  %v56 = vunpack.c.l.b16 %v39
  %v57 = vpack.c.b16 %v54, %v53
  %v58 = vpack.c.b16 %v56, %v55
  %vm61 = vcmask 261120
  %v63 = vsel %vm61, %v48, 0
  %65 = vmatpush.bf16.msra.mxu0 0
  %66 = vmatpush.bf16.msra.mxu0 0
  %67 = vmatpush.bf16.msra.mxu0 0
  %68 = vmatpush.bf16.msra.mxu0 0
  %69 = vmatpush.bf16.msra.mxu0 0
  %70 = vmatpush.bf16.msra.mxu0 0
  %71 = vmatpush.bf16.msra.mxu0 %v58
  %72 = vmatpush.bf16.msra.mxu0 %v57
  %73 = vmatmul.bf16.gmra.mxu0 %v63
  %v74 = vpop.f32.mrf.mxu0
  %v75 = vadd.f32 %v42, %v74
  %v76 = vpop.f32.mrf.mxu0
  %v77 = vadd.f32 %v42, %v76
  %78 = vdwg.mxu0
  %v79 = vmax.f32 %v75, 0.0
  %v80 = vmax.f32 %v77, 0.0
  %v81 = vpack.c.bf16 %v80, %v79
  %v82 = vld [vmem:[#allocation2] sm:$0xff]
  %v83 = vld [vmem:[#allocation2 + $0x8] sm:$0xff]
  %v84 = vld [vmem:[%s3] sm:$0xf]
  %v85 = vld [vmem:[%s3 + $0x4] sm:$0xf]
  %v86 = vld [vmem:[%s3 + $0x8] sm:$0xf]
  %v87 = vld [vmem:[%s3 + $0xc] sm:$0xf]
  %v88 = vld [vmem:[%s3 + $0x10] sm:$0xf]
  %v89 = vld [vmem:[%s3 + $0x14] sm:$0xf]
  %v90 = vld [vmem:[%s3 + $0x18] sm:$0xf]
  %v91 = vld [vmem:[%s3 + $0x1c] sm:$0xf]
  %v100 = vunpack.c.l.b16 %v84
  %v101 = vunpack.c.l.b16 %v85
  %v102 = vunpack.c.l.b16 %v86
  %v103 = vunpack.c.l.b16 %v87
  %v104 = vunpack.c.l.b16 %v88
  %v105 = vunpack.c.l.b16 %v89
  %v106 = vunpack.c.l.b16 %v90
  %v107 = vunpack.c.l.b16 %v91
  %v108 = vpack.c.b16 %v101, %v100
  %v109 = vpack.c.b16 %v103, %v102
  %v110 = vpack.c.b16 %v105, %v104
  %v111 = vpack.c.b16 %v107, %v106
  %vm116 = vcmask 523264
  %v118 = vsel %vm116, %v81, 0
  %120 = vmatpush.bf16.msra.mxu0 0
  %121 = vmatpush.bf16.msra.mxu0 0
  %122 = vmatpush.bf16.msra.mxu0 0
  %123 = vmatpush.bf16.msra.mxu0 0
  %124 = vmatpush.bf16.msra.mxu0 %v111
  %125 = vmatpush.bf16.msra.mxu0 %v110
  %126 = vmatpush.bf16.msra.mxu0 %v109
  %127 = vmatpush.bf16.msra.mxu0 %v108
  %128 = vmatmul.bf16.gmra.mxu0 %v118
  %v129 = vpop.f32.mrf.mxu0
  %v130 = vadd.f32 0.0, %v129
  %v131 = vpop.f32.mrf.mxu0
  %v132 = vadd.f32 0.0, %v131
  %133 = vdwg.mxu0
  %v134 = vadd.f32 %v82, %v130
  %v135 = vadd.f32 %v83, %v132
  %136 = vst.msk [vmem:[#allocation2] sm:$0xff] %vm61, %v134
  %137 = vst.msk [vmem:[#allocation2 + $0x8] sm:$0xff] %vm61, %v135
  // Predicated region
  $region34: #{decoder_forward.24} parent=0 // pred_check
    %p138 = pneg %p27
  $region35: #{decoder_forward.24} parent=0 // pred_check_branch
    %140 = sbr.rel (%p138) target = $region37
  $region36: #{decoder_forward.24} parent=0 // pred_region
    %v141 = vld [vmem:[#allocation2] sm:$0xff]
    %v142 = vld [vmem:[#allocation2 + $0x8] sm:$0xff]
    %v143 = vld [vmem:[%s4] sm:$0x1]
    %v145 = vperm.slane %v143, 0
    %v147 = vadd.f32 %v141, %v145
    %v148 = vadd.f32 %v142, %v145
    %v149 = vld [vmem:[%s0] sm:$0xf]
    %v150 = vld [vmem:[%s0 + $0x4] sm:$0xf]
    %v151 = vunpack.c.l.bf16 %v149
    %v152 = vunpack.c.l.bf16 %v150
    %v153 = vadd.f32 %v147, %v151
    %v154 = vadd.f32 %v148, %v152
    %v155 = vsel %vm61, %v153, 0.0
    %156 = vadd.xlane.f32.xlu0 %v155
    %v157 = vpop.xlane.xlu0 %156
    %v158 = vsel %vm61, %v154, 0.0
    %159 = vadd.xlane.f32.xlu0 %v158
    %v160 = vpop.xlane.xlu0 %159
    %v161 = vrcp.pop 32.0
    %v162 = vmul.f32 32.0, %v161
    %v163 = vsub.f32 1.0, %v162
    %v164 = vmul.f32 %v161, %v163
    %v165 = vadd.f32 %v161, %v164
    %vm166 = vweird.f32 %v161
    %v167 = vsel %vm166, %v161, %v165
    %v168 = vmul.f32 %v157, %v167
    %v169 = vmul.f32 %v160, %v167
    %v170 = vsub.f32 %v153, %v168
    %v171 = vsub.f32 %v154, %v169
    %v172 = vmul.f32 %v170, %v170
    %v173 = vmul.f32 %v171, %v171
    %v174 = vsel %vm61, %v172, 0.0
    %175 = vadd.xlane.f32.xlu0 %v174
    %v176 = vpop.xlane.xlu0 %175
    %v177 = vsel %vm61, %v173, 0.0
    %178 = vadd.xlane.f32.xlu0 %v177
    %v179 = vpop.xlane.xlu0 %178
    %v180 = vmul.f32 %v176, %v167
    %v181 = vmul.f32 %v179, %v167
    %v182 = vadd.f32 %v180, 1e-05
    %v183 = vadd.f32 %v181, 1e-05
    %v184 = vrsqrt.pop %v182
    %v185 = vmul.f32 %v184, %v182
    %v186 = vmul.f32 %v185, %v184
    %v187 = vmul.f32 0.5, %v186
    %v188 = vsub.f32 1.5, %v187
    %v189 = vmul.f32 %v184, %v188
    %vm190 = vweird.f32 %v182
    %vm191 = vweird.f32 %v184
    %vm192 = vmor %vm190, %vm191
    %v193 = vsel %vm192, %v184, %v189
    %v194 = vrsqrt.pop %v183
    %v195 = vmul.f32 %v194, %v183
    %v196 = vmul.f32 %v195, %v194
    %v197 = vmul.f32 0.5, %v196
    %v198 = vsub.f32 1.5, %v197
    %v199 = vmul.f32 %v194, %v198
    %vm200 = vweird.f32 %v183
    %vm201 = vweird.f32 %v194
    %vm202 = vmor %vm200, %vm201
    %v203 = vsel %vm202, %v194, %v199
    %v204 = vmul.f32 %v170, %v193
    %v205 = vmul.f32 %v171, %v203
    %v206 = vld [vmem:[%s5] sm:$0x1]
    %v208 = vperm.slane %v206, 0
    %v210 = vmul.f32 %v204, %v208
    %v211 = vmul.f32 %v205, %v208
    %v212 = vld [vmem:[%s6] sm:$0x1]
    %v214 = vperm.slane %v212, 0
    %v216 = vadd.f32 %v210, %v214
    %v217 = vadd.f32 %v211, %v214
    %v218 = vpack.c.bf16 %v216, %v216
    %v219 = vpack.c.bf16 %v217, %v217
    %vm220 = vcmask 257024
    %221 = vst.msk [vmem:[%s7] sm:$0xf] %vm220, %v218
    %222 = vst.msk [vmem:[%s7 + $0x4] sm:$0xf] %vm220, %v219
  $region37: #{decoder_forward.24} parent=0 // pred_fallthru
    _
  // Predicated region
  $region38: #{decoder_forward.24} parent=0 // pred_check
    _
  $region39: #{decoder_forward.24} parent=0 // pred_check_branch
    %224 = sbr.rel (0) target = $region41
  $region40: #{decoder_forward.24} parent=0 // pred_region
    _
  $region41: #{decoder_forward.24} parent=0 // pred_fallthru
    _
  // Predicated region
  $region42: #{decoder_forward.24} parent=0 // pred_check
    _
  $region43: #{decoder_forward.24} parent=0 // pred_check_branch
    %226 = sbr.rel (0) target = $region45
  $region44: #{decoder_forward.24} parent=0 // pred_region
    _
  $region45: #{decoder_forward.24} parent=0 // pred_fallthru
    _

// kernel: decoder_forward.22
$region0: #{decoder_forward.22}
  #allocation0 [shape = 'u32[]', space=smem, size = 0x4, offset = 0x4, fixed_abs, tag = 'smem constant byte address 0x4 - core index']
  #allocation1 [shape = 'u32[72,128]{1,0:T(1,128)}', space=vmem, size = 0x9000, scoped, tag = 'internal scratch']
  #allocation2 [shape = 'f32[4,8,1]{2,1,0:T(8,128)}', space=vmem, size = 0x4000, scoped, tag = 'scratch operand']
  #allocation3 [shape = 'f32[4,8,1]{2,1,0:T(8,128)}', space=vmem, size = 0x4000, scoped, tag = 'scratch operand']
  #allocation4 [shape = 'f32[4,8,8]{2,1,0:T(8,128)}', space=vmem, size = 0x4000, scoped, tag = 'scratch operand']
  %s0 = inlined_call_operand.vmem [shape: bf16[1,2,8,32], index: 0, kind: input, shape index: {}]
  %s1 = inlined_call_operand.vmem [shape: bf16[2,2,8,32], index: 1, kind: input, shape index: {}, may-alias: {1,2}]
  %s2 = inlined_call_operand.vmem [shape: bf16[2,2,8,32], index: 2, kind: input, shape index: {}, may-alias: {1,2}]
  %s3 = inlined_call_operand.vmem [shape: bf16[2,1,8], index: 3, kind: input, shape index: {}]
  %s4 = inlined_call_operand.vmem [shape: bf16[2,8,32], index: 4, kind: output, shape index: {}]
  %s5 = sld [smem:[#allocation0]]
  $region57: #{decoder_forward.22} parent=0
    _
  %s7 = ssub.s32 1, %s5
  %s8 = scalar_select 0, %s7, %s5
  loop: start=0, step=1, limit=4
  $region2: #{decoder_forward.22} parent=0 // loop_pre_header
    _
  $region3: #{decoder_forward.22} parent=0 // loop_header
    %s10 = sphi 0, %s14
    %p11 = scmp.ge.s32.totalorder %s10, 4
    %s17 = sphi 0, %s36
    %s18 = sphi 0, %s32
    %s19 = sphi 0, %s28
    %s20 = sphi 0, %s17
    %s21 = sphi 0, %s18
    %s22 = sphi 0, %s19
    %s23 = sphi 0, %s20
    %s24 = sphi 0, %s21
    %s25 = sphi 0, %s22
    %s41 = sphi 0, %s43
    %s44 = sphi 0, %s41
    %s45 = sphi 0, %s44
    %s61 = sphi 0, %s45
    %s69 = sphi 0, %s71
    %s72 = sphi 0, %s69
    %s73 = sphi 0, %s72
    %s89 = sphi 0, %s73
    %s97 = sphi 0, %s99
    %s100 = sphi 0, %s97
    %s101 = sphi 0, %s100
    %s117 = sphi 0, %s101
    %s125 = sphi 0, %s127
    %s128 = sphi 0, %s125
    %s129 = sphi 0, %s128
    %s145 = sphi 0, %s129
    %s153 = sphi 0, %s155
    %s156 = sphi 0, %s153
    %s157 = sphi 0, %s156
    %s173 = sphi 0, %s157
  $region4: #{decoder_forward.22} parent=0 // loop_header_branch
    %13 = sbr.rel (%p11) target = $region8
  $region5: #{decoder_forward.22} parent=0 // loop_body
    %s15 = ssub.s32 %s10, 1
    %s16 = ssub.s32 %s10, 2
    %s26 = sadd.s32 1, %s19
    %p27 = scmp.ge.s32.totalorder %s26, 1
    %s28 = scalar_select %p27, 0, %s26
    %s29 = sadd.s32 1, %s18
    %s30 = scalar_select %p27, %s29, %s18
    %p31 = scmp.ge.s32.totalorder %s30, 1
    %s32 = scalar_select %p31, 0, %s30
    %s33 = sadd.s32 1, %s17
    %s34 = scalar_select %p31, %s33, %s17
    %p35 = scmp.ge.s32.totalorder %s34, 2
    %s36 = scalar_select %p35, 0, %s34
    %s37 = ssub.s32 %s17, %s36
    %s38 = ssub.s32 %s18, %s32
    %s39 = sor.u32 %s37, %s38
    %p40 = scmp.eq.s32.totalorder %s39, 0
    %s42 = sadd.s32 %s41, 1
    %s43 = scalar_select %p40, %s41, %s42
    %p46 = pneg %p40
    %p47 = scmp.eq.s32.totalorder %s10, 1
    %p48 = por %p46, %p47
    %p49 = scmp.ne.s32.totalorder %s41, %s44
    %p50 = scmp.eq.s32.totalorder %s10, 0
    %p51 = por %p49, %p50
    %p52 = scmp.ne.s32.totalorder %s41, %s44
    %p53 = scmp.eq.s32.totalorder %s15, 1
    %p54 = por %p52, %p53
    %p55 = scmp.ne.s32.totalorder %s44, %s45
    %p56 = scmp.eq.s32.totalorder %s15, 0
    %p57 = por %p55, %p56
    %p58 = scmp.ne.s32.totalorder %s44, %s45
    %p59 = scmp.eq.s32.totalorder %s16, 1
    %p60 = por %p58, %p59
    %p62 = scmp.ne.s32.totalorder %s45, %s61
    %p63 = scmp.eq.s32.totalorder %s16, 0
    %p64 = por %p62, %p63
    %s65 = ssub.s32 %s17, %s36
    %s66 = ssub.s32 %s19, %s28
    %s67 = sor.u32 %s65, %s66
    %p68 = scmp.eq.s32.totalorder %s67, 0
    %s70 = sadd.s32 %s69, 1
    %s71 = scalar_select %p68, %s69, %s70
    %p74 = pneg %p68
    %p75 = scmp.eq.s32.totalorder %s10, 1
    %p76 = por %p74, %p75
    %p77 = scmp.ne.s32.totalorder %s69, %s72
    %p78 = scmp.eq.s32.totalorder %s10, 0
    %p79 = por %p77, %p78
    %p80 = scmp.ne.s32.totalorder %s69, %s72
    %p81 = scmp.eq.s32.totalorder %s15, 1
    %p82 = por %p80, %p81
    %p83 = scmp.ne.s32.totalorder %s72, %s73
    %p84 = scmp.eq.s32.totalorder %s15, 0
    %p85 = por %p83, %p84
    %p86 = scmp.ne.s32.totalorder %s72, %s73
    %p87 = scmp.eq.s32.totalorder %s16, 1
    %p88 = por %p86, %p87
    %p90 = scmp.ne.s32.totalorder %s73, %s89
    %p91 = scmp.eq.s32.totalorder %s16, 0
    %p92 = por %p90, %p91
    %s93 = ssub.s32 %s17, %s36
    %s94 = ssub.s32 %s19, %s28
    %s95 = sor.u32 %s93, %s94
    %p96 = scmp.eq.s32.totalorder %s95, 0
    %s98 = sadd.s32 %s97, 1
    %s99 = scalar_select %p96, %s97, %s98
    %p102 = pneg %p96
    %p103 = scmp.eq.s32.totalorder %s10, 1
    %p104 = por %p102, %p103
    %p105 = scmp.ne.s32.totalorder %s97, %s100
    %p106 = scmp.eq.s32.totalorder %s10, 0
    %p107 = por %p105, %p106
    %p108 = scmp.ne.s32.totalorder %s97, %s100
    %p109 = scmp.eq.s32.totalorder %s15, 1
    %p110 = por %p108, %p109
    %p111 = scmp.ne.s32.totalorder %s100, %s101
    %p112 = scmp.eq.s32.totalorder %s15, 0
    %p113 = por %p111, %p112
    %p114 = scmp.ne.s32.totalorder %s100, %s101
    %p115 = scmp.eq.s32.totalorder %s16, 1
    %p116 = por %p114, %p115
    %p118 = scmp.ne.s32.totalorder %s101, %s117
    %p119 = scmp.eq.s32.totalorder %s16, 0
    %p120 = por %p118, %p119
    %s121 = ssub.s32 %s17, %s36
    %s122 = ssub.s32 %s19, %s28
    %s123 = sor.u32 %s121, %s122
    %p124 = scmp.eq.s32.totalorder %s123, 0
    %s126 = sadd.s32 %s125, 1
    %s127 = scalar_select %p124, %s125, %s126
    %p130 = pneg %p124
    %p131 = scmp.eq.s32.totalorder %s10, 1
    %p132 = por %p130, %p131
    %p133 = scmp.ne.s32.totalorder %s125, %s128
    %p134 = scmp.eq.s32.totalorder %s10, 0
    %p135 = por %p133, %p134
    %p136 = scmp.ne.s32.totalorder %s125, %s128
    %p137 = scmp.eq.s32.totalorder %s15, 1
    %p138 = por %p136, %p137
    %p139 = scmp.ne.s32.totalorder %s128, %s129
    %p140 = scmp.eq.s32.totalorder %s15, 0
    %p141 = por %p139, %p140
    %p142 = scmp.ne.s32.totalorder %s128, %s129
    %p143 = scmp.eq.s32.totalorder %s16, 1
    %p144 = por %p142, %p143
    %p146 = scmp.ne.s32.totalorder %s129, %s145
    %p147 = scmp.eq.s32.totalorder %s16, 0
    %p148 = por %p146, %p147
    %s149 = ssub.s32 %s17, %s36
    %s150 = ssub.s32 %s18, %s32
    %s151 = sor.u32 %s149, %s150
    %p152 = scmp.eq.s32.totalorder %s151, 0
    %s154 = sadd.s32 %s153, 1
    %s155 = scalar_select %p152, %s153, %s154
    %p158 = pneg %p152
    %p159 = scmp.eq.s32.totalorder %s10, 1
    %p160 = por %p158, %p159
    %p161 = scmp.ne.s32.totalorder %s153, %s156
    %p162 = scmp.eq.s32.totalorder %s10, 0
    %p163 = por %p161, %p162
    %p164 = scmp.ne.s32.totalorder %s153, %s156
    %p165 = scmp.eq.s32.totalorder %s15, 1
    %p166 = por %p164, %p165
    %p167 = scmp.ne.s32.totalorder %s156, %s157
    %p168 = scmp.eq.s32.totalorder %s15, 0
    %p169 = por %p167, %p168
    %p170 = scmp.ne.s32.totalorder %s156, %s157
    %p171 = scmp.eq.s32.totalorder %s16, 1
    %p172 = por %p170, %p171
    %p174 = scmp.ne.s32.totalorder %s157, %s173
    %p175 = scmp.eq.s32.totalorder %s16, 0
    %p176 = por %p174, %p175
    %p177 = scmp.le.s32.totalorder 1, %s10
    %p178 = scmp.lt.s32.totalorder %s10, 3
    %p179 = pnand %p177, %p178
    %p180 = pneg %p179
    // Predicated region
    $region9: #{decoder_forward.22} parent=5 // pred_check
      _
    $region10: #{decoder_forward.22} parent=5 // pred_check_branch
      %182 = sbr.rel (%p179) target = $region12
    $region11: #{decoder_forward.22} parent=5 // pred_region
      %s183 = ssub.s32 %s10, 1
    $region12: #{decoder_forward.22} parent=5 // pred_fallthru
      _
    %p184 = scmp.lt.s32.totalorder %s10, 2
    // Predicated region
    $region13: #{decoder_forward.22} parent=5 // pred_check
      %p185 = pneg %p184
    $region14: #{decoder_forward.22} parent=5 // pred_check_branch
      %187 = sbr.rel (%p185) target = $region16
    $region15: #{decoder_forward.22} parent=5 // pred_region
      // Predicated region
      $region17: #{decoder_forward.22} parent=15 // pred_check
        %p188 = pneg %p51
      $region18: #{decoder_forward.22} parent=15 // pred_check_branch
        %190 = sbr.rel (%p188) target = $region20
      $region19: #{decoder_forward.22} parent=15 // pred_region
        %p191 = scmp.lt.s32.totalorder %s17, 1
        %s192 = scalar_select %p191, %s17, 1
        %p193 = scmp.lt.s32.totalorder %s18, 0
        %s194 = scalar_select %p193, %s18, 0
        %s195 = sadd.s32 %s194, %s192
        %s196 = smul.addr %s195, 4
        %s197 = scalar_lea.vmem %s0, %s196
      $region20: #{decoder_forward.22} parent=15 // pred_fallthru
        _
      // Predicated region
      $region21: #{decoder_forward.22} parent=15 // pred_check
        %p198 = pneg %p79
      $region22: #{decoder_forward.22} parent=15 // pred_check_branch
        %200 = sbr.rel (%p198) target = $region24
      $region23: #{decoder_forward.22} parent=15 // pred_region
        %p201 = scmp.lt.s32.totalorder %s17, 1
        %s202 = scalar_select %p201, %s17, 1
        %p203 = scmp.lt.s32.totalorder %s19, 0
        %s204 = scalar_select %p203, %s19, 0
        %s205 = sadd.s32 %s204, %s202
        %s206 = smul.addr %s205, 4
        %s207 = scalar_lea.vmem %s1, %s206
      $region24: #{decoder_forward.22} parent=15 // pred_fallthru
        _
      // Predicated region
      $region25: #{decoder_forward.22} parent=15 // pred_check
        %p208 = pneg %p107
      $region26: #{decoder_forward.22} parent=15 // pred_check_branch
        %210 = sbr.rel (%p208) target = $region28
      $region27: #{decoder_forward.22} parent=15 // pred_region
        %p211 = scmp.lt.s32.totalorder %s17, 1
        %s212 = scalar_select %p211, %s17, 1
        %p213 = scmp.lt.s32.totalorder %s19, 0
        %s214 = scalar_select %p213, %s19, 0
        %s215 = sadd.s32 %s214, %s212
        %s216 = sadd.s32 %s215, 2
        %s217 = smul.addr %s216, 4
        %s218 = scalar_lea.vmem %s2, %s217
      $region28: #{decoder_forward.22} parent=15 // pred_fallthru
        _
      // Predicated region
      $region29: #{decoder_forward.22} parent=15 // pred_check
        %p219 = pneg %p135
      $region30: #{decoder_forward.22} parent=15 // pred_check_branch
        %221 = sbr.rel (%p219) target = $region32
      $region31: #{decoder_forward.22} parent=15 // pred_region
        %p222 = scmp.lt.s32.totalorder %s17, 1
        %s223 = scalar_select %p222, %s17, 1
        %p224 = scmp.lt.s32.totalorder %s19, 0
        %s225 = scalar_select %p224, %s19, 0
        %s226 = sadd.s32 %s225, %s223
        %s227 = scalar_lea.vmem %s3, %s226
      $region32: #{decoder_forward.22} parent=15 // pred_fallthru
        _
    $region16: #{decoder_forward.22} parent=5 // pred_fallthru
      _
    %p228 = scmp.le.s32.totalorder 1, %s10
    %p229 = scmp.lt.s32.totalorder %s10, 3
    %p230 = pnand %p228, %p229
    %p231 = pneg %p230
    // Predicated region
    $region33: #{decoder_forward.22} parent=5 // pred_check
      _
    $region34: #{decoder_forward.22} parent=5 // pred_check_branch
      %233 = sbr.rel (%p230) target = $region36
    $region35: #{decoder_forward.22} parent=5 // pred_region
      %s234 = ssub.s32 %s10, 1
      %p235 = scmp.lt.s32.totalorder %s20, 1
      %s236 = scalar_select %p235, %s20, 1
      %p237 = scmp.lt.s32.totalorder %s21, 0
      %s238 = scalar_select %p237, %s21, 0
      %s239 = sadd.s32 %s238, %s236
      %s240 = smul.addr %s239, 4
      %s241 = scalar_lea.vmem %s0, %s240
      %p242 = pneg %p57
      %p243 = pneg %p54
      %p244 = scmp.lt.s32.totalorder %s20, 1
      %s245 = scalar_select %p244, %s20, 1
      %p246 = scmp.lt.s32.totalorder %s22, 0
      %s247 = scalar_select %p246, %s22, 0
      %s248 = sadd.s32 %s247, %s245
      %s249 = smul.addr %s248, 4
      %s250 = scalar_lea.vmem %s1, %s249
      %p251 = pneg %p85
      %p252 = pneg %p82
      %p253 = scmp.lt.s32.totalorder %s20, 1
      %s254 = scalar_select %p253, %s20, 1
      %p255 = scmp.lt.s32.totalorder %s22, 0
      %s256 = scalar_select %p255, %s22, 0
      %s257 = sadd.s32 %s256, %s254
      %s258 = sadd.s32 %s257, 2
      %s259 = smul.addr %s258, 4
      %s260 = scalar_lea.vmem %s2, %s259
      %p261 = pneg %p113
      %p262 = pneg %p110
      %p263 = scmp.lt.s32.totalorder %s20, 1
      %s264 = scalar_select %p263, %s20, 1
      %p265 = scmp.lt.s32.totalorder %s22, 0
      %s266 = scalar_select %p265, %s22, 0
      %s267 = sadd.s32 %s266, %s264
      %s268 = scalar_lea.vmem %s3, %s267
      %p269 = pneg %p141
      %p270 = pneg %p138
      %p271 = pneg %p169
      %p272 = pneg %p166
      %p273 = scmp.lt.s32.totalorder %s20, 1
      %s274 = scalar_select %p273, %s20, 1
      %p275 = scmp.lt.s32.totalorder %s21, 0
      %s276 = scalar_select %p275, %s21, 0
      %s277 = sadd.s32 %s276, %s274
      %s278 = smul.addr %s277, 4
      %s279 = scalar_lea.vmem %s4, %s278
      %p280 = scmp.lt.s32.totalorder %s20, 1
      %s281 = scalar_select %p280, %s20, 1
      %p282 = scmp.lt.s32.totalorder %s21, 0
      %s283 = scalar_select %p282, %s21, 0
      %s284 = sadd.s32 %s283, %s281
      %s285 = smul.addr %s284, 4
      %s286 = scalar_lea.vmem %s0, %s285
      %p287 = scmp.lt.s32.totalorder %s20, 1
      %s288 = scalar_select %p287, %s20, 1
      %p289 = scmp.lt.s32.totalorder %s22, 0
      %s290 = scalar_select %p289, %s22, 0
      %s291 = sadd.s32 %s290, %s288
      %s292 = smul.addr %s291, 4
      %s293 = scalar_lea.vmem %s1, %s292
      %p294 = scmp.lt.s32.totalorder %s20, 1
      %s295 = scalar_select %p294, %s20, 1
      %p296 = scmp.lt.s32.totalorder %s22, 0
      %s297 = scalar_select %p296, %s22, 0
      %s298 = sadd.s32 %s297, %s295
      %s299 = sadd.s32 %s298, 2
      %s300 = smul.addr %s299, 4
      %s301 = scalar_lea.vmem %s2, %s300
      %p302 = scmp.lt.s32.totalorder %s20, 1
      %s303 = scalar_select %p302, %s20, 1
      %p304 = scmp.lt.s32.totalorder %s22, 0
      %s305 = scalar_select %p304, %s22, 0
      %s306 = sadd.s32 %s305, %s303
      %s307 = scalar_lea.vmem %s3, %s306
      %p308 = scmp.lt.s32.totalorder %s20, 1
      %s309 = scalar_select %p308, %s20, 1
      %p310 = scmp.lt.s32.totalorder %s21, 0
      %s311 = scalar_select %p310, %s21, 0
      %s312 = sadd.s32 %s311, %s309
      %s313 = smul.addr %s312, 4
      %s314 = scalar_lea.vmem %s4, %s313
      %p316 = scmp.eq.s32.totalorder %s22, 0
      // Predicated region
      $region37: #{decoder_forward.22} parent=35 // pred_check
        %p317 = pneg %p316
      $region38: #{decoder_forward.22} parent=35 // pred_check_branch
        %319 = sbr.rel (%p317) target = $region40
      $region39: #{decoder_forward.22} parent=35 // pred_region
        %vm320 = vcmask 7168
        %321 = vst.msk [vmem:[#allocation2] sm:$0xff] %vm320, -inf
        %322 = vst.msk [vmem:[#allocation2 + $0x8] sm:$0xff] %vm320, -inf
        %323 = vst.msk [vmem:[#allocation2 + $0x10] sm:$0xff] %vm320, -inf
        %324 = vst.msk [vmem:[#allocation2 + $0x18] sm:$0xff] %vm320, -inf
        %325 = vst.msk [vmem:[#allocation3] sm:$0xff] %vm320, 0.0
        %326 = vst.msk [vmem:[#allocation3 + $0x8] sm:$0xff] %vm320, 0.0
        %327 = vst.msk [vmem:[#allocation3 + $0x10] sm:$0xff] %vm320, 0.0
        %328 = vst.msk [vmem:[#allocation3 + $0x18] sm:$0xff] %vm320, 0.0
        %vm329 = vcmask 64512
        %330 = vst.msk [vmem:[#allocation4] sm:$0xff] %vm329, 0.0
        %331 = vst.msk [vmem:[#allocation4 + $0x8] sm:$0xff] %vm329, 0.0
        %332 = vst.msk [vmem:[#allocation4 + $0x10] sm:$0xff] %vm329, 0.0
        %333 = vst.msk [vmem:[#allocation4 + $0x18] sm:$0xff] %vm329, 0.0
      $region40: #{decoder_forward.22} parent=35 // pred_fallthru
        _
      %v334 = vld [vmem:[%s286] sm:$0xf]
      %v335 = vld [vmem:[%s293] sm:$0xf]
      %v336 = vld [vmem:[%s301] sm:$0xf]
      %v337 = vld [vmem:[%s307] sm:$0x1]
      %v338 = vunpack.c.l.bf16 %v337
      %vm339 = vcmask 64512
      %v341 = vsel %vm339, %v334, 0
      %v344 = vsel %vm339, %v335, 0
      %346 = vmatpush.bf16.xpose.msra.mxu0 0
      %347 = vmatpush.bf16.xpose.msra.mxu0 0
      %348 = vmatpush.bf16.xpose.msra.mxu0 0
      %349 = vmatpush.bf16.xpose.msra.mxu0 0
      %350 = vmatpush.bf16.xpose.msra.mxu0 0
      %351 = vmatpush.bf16.xpose.msra.mxu0 0
      %352 = vmatpush.bf16.xpose.msra.mxu0 0
      %353 = vmatpush.bf16.xpose.msra.mxu0 %v344
      %354 = vmatmul.bf16.gmra.mxu0 %v341
      %v355 = vpop.f32.mrf.mxu0
      %v356 = vadd.f32 0.0, %v355
      %v357 = vpop.f32.mrf.mxu0
      %358 = vdwg.mxu0
      %v359 = vmul.f32 %v356, 0.35355338
      %v360 = vperm.slane %v338, 0
      %v361 = vadd.f32 %v359, %v360
      %v362 = vld [vmem:[#allocation2] sm:$0xff]
      %v363 = vsel %vm339, %v361, -inf
      %364 = vmax.xlane.f32.xlu0 %v363
      %v365 = vpop.xlane.xlu0 %364
      %v366 = vmax.f32 %v362, %v365
      %v367 = vsub.f32 %v362, %v366
      %v368 = vmul.f32 %v367, 1.442695
      %v369 = vpow.pop %v368
      %371 = vset.pattern.permute.xlu0 0
      %372 = vperm.xlu0 %371, %v366
      %v373 = vpop.permute.xlu0 %372
      %v375 = vsub.f32 %v361, %v373
      %v376 = vmul.f32 %v375, 1.442695
      %v377 = vpow.pop %v376
      %v378 = vld [vmem:[#allocation3] sm:$0xff]
      %v379 = vmul.f32 %v369, %v378
      %v380 = vsel %vm339, %v377, 0.0
      %381 = vadd.xlane.f32.xlu0 %v380
      %v382 = vpop.xlane.xlu0 %381
      %v383 = vadd.f32 %v379, %v382
      %vm384 = vcmask 7168
      %385 = vst.msk [vmem:[#allocation3] sm:$0xff] %vm384, %v383
      %v386 = vld [vmem:[#allocation4] sm:$0xff]
      %388 = vset.pattern.permute.xlu0 0
      %389 = vperm.xlu0 %388, %v369
      %v390 = vpop.permute.xlu0 %389
      %v392 = vmul.f32 %v390, %v386
      %v393 = vpack.c.bf16 %v377, %v377
      %v395 = vsel %vm339, %v393, 0
      %vm397 = vcmask 1043456
      %v399 = vsel %vm397, %v336, 0
      %401 = vmatpush.bf16.msra.mxu0 0
      %402 = vmatpush.bf16.msra.mxu0 0
      %403 = vmatpush.bf16.msra.mxu0 0
      %404 = vmatpush.bf16.msra.mxu0 0
      %405 = vmatpush.bf16.msra.mxu0 0
      %406 = vmatpush.bf16.msra.mxu0 0
      %407 = vmatpush.bf16.msra.mxu0 0
      %408 = vmatpush.bf16.msra.mxu0 %v399
      %409 = vmatmul.bf16.gmra.mxu0 %v395
      %v410 = vpop.f32.mrf.mxu0
      %v411 = vadd.f32 0.0, %v410
      %v412 = vpop.f32.mrf.mxu0
      %413 = vdwg.mxu0
      %v414 = vadd.f32 %v392, %v411
      %415 = vst.msk [vmem:[#allocation4] sm:$0xff] %vm339, %v414
      %416 = vst.msk [vmem:[#allocation2] sm:$0xff] %vm384, %v366
      %v418 = vunpack.c.l.b16 %v334
      %v419 = vpack.c.b16 %v418, %v418
      %420 = vrot.lane.b32.xlu0 %v419, 120
      %v421 = vpop.permute.xlu0 %420
      %v423 = vunpack.c.l.b16 %v335
      %v424 = vpack.c.b16 %v423, %v423
      %425 = vrot.lane.b32.xlu0 %v424, 120
      %v426 = vpop.permute.xlu0 %425
      %v428 = vsel %vm339, %v421, 0
      %v431 = vsel %vm339, %v426, 0
      %433 = vmatpush.bf16.xpose.msra.mxu0 0
      %434 = vmatpush.bf16.xpose.msra.mxu0 0
      %435 = vmatpush.bf16.xpose.msra.mxu0 0
      %436 = vmatpush.bf16.xpose.msra.mxu0 0
      %437 = vmatpush.bf16.xpose.msra.mxu0 0
      %438 = vmatpush.bf16.xpose.msra.mxu0 0
      %439 = vmatpush.bf16.xpose.msra.mxu0 0
      %440 = vmatpush.bf16.xpose.msra.mxu0 %v431
      %441 = vmatmul.bf16.gmra.mxu0 %v428
      %v442 = vpop.f32.mrf.mxu0
      %v443 = vadd.f32 0.0, %v442
      %v444 = vpop.f32.mrf.mxu0
      %445 = vdwg.mxu0
      %v446 = vmul.f32 %v443, 0.35355338
      %v447 = vadd.f32 %v446, %v360
      %s448 = scalar_lea.vmem [#allocation2], 8
      %v449 = vld [vmem:[%s448] sm:$0xff]
      %v450 = vsel %vm339, %v447, -inf
      %451 = vmax.xlane.f32.xlu0 %v450
      %v452 = vpop.xlane.xlu0 %451
      %v453 = vmax.f32 %v449, %v452
      %v454 = vsub.f32 %v449, %v453
      %v455 = vmul.f32 %v454, 1.442695
      %v456 = vpow.pop %v455
      %458 = vset.pattern.permute.xlu0 0
      %459 = vperm.xlu0 %458, %v453
      %v460 = vpop.permute.xlu0 %459
      %v462 = vsub.f32 %v447, %v460
      %v463 = vmul.f32 %v462, 1.442695
      %v464 = vpow.pop %v463
      %s465 = scalar_lea.vmem [#allocation3], 8
      %v466 = vld [vmem:[%s465] sm:$0xff]
      %v467 = vmul.f32 %v456, %v466
      %v468 = vsel %vm339, %v464, 0.0
      %469 = vadd.xlane.f32.xlu0 %v468
      %v470 = vpop.xlane.xlu0 %469
      %v471 = vadd.f32 %v467, %v470
      %472 = vst.msk [vmem:[%s465] sm:$0xff] %vm384, %v471
      %s473 = scalar_lea.vmem [#allocation4], 8
      %v474 = vld [vmem:[%s473] sm:$0xff]
      %476 = vset.pattern.permute.xlu0 0
      %477 = vperm.xlu0 %476, %v456
      %v478 = vpop.permute.xlu0 %477
      %v480 = vmul.f32 %v478, %v474
      %v481 = vpack.c.bf16 %v464, %v464
      %v483 = vunpack.c.l.b16 %v336
      %v484 = vpack.c.b16 %v483, %v483
      %485 = vrot.lane.b32.xlu0 %v484, 120
      %v486 = vpop.permute.xlu0 %485
      %v488 = vsel %vm339, %v481, 0
      %v491 = vsel %vm397, %v486, 0
      %493 = vmatpush.bf16.msra.mxu0 0
      %494 = vmatpush.bf16.msra.mxu0 0
      %495 = vmatpush.bf16.msra.mxu0 0
      %496 = vmatpush.bf16.msra.mxu0 0
      %497 = vmatpush.bf16.msra.mxu0 0
      %498 = vmatpush.bf16.msra.mxu0 0
      %499 = vmatpush.bf16.msra.mxu0 0
      %500 = vmatpush.bf16.msra.mxu0 %v491
      %501 = vmatmul.bf16.gmra.mxu0 %v488
      %v502 = vpop.f32.mrf.mxu0
      %v503 = vadd.f32 0.0, %v502
      %v504 = vpop.f32.mrf.mxu0
      %505 = vdwg.mxu0
      %v506 = vadd.f32 %v480, %v503
      %507 = vst.msk [vmem:[%s473] sm:$0xff] %vm339, %v506
      %508 = vst.msk [vmem:[%s448] sm:$0xff] %vm384, %v453
      %509 = vrot.lane.b32.xlu0 %v419, 112
      %v510 = vpop.permute.xlu0 %509
      %511 = vrot.lane.b32.xlu0 %v424, 112
      %v512 = vpop.permute.xlu0 %511
      %v514 = vsel %vm339, %v510, 0
      %v517 = vsel %vm339, %v512, 0
      %519 = vmatpush.bf16.xpose.msra.mxu0 0
      %520 = vmatpush.bf16.xpose.msra.mxu0 0
      %521 = vmatpush.bf16.xpose.msra.mxu0 0
      %522 = vmatpush.bf16.xpose.msra.mxu0 0
      %523 = vmatpush.bf16.xpose.msra.mxu0 0
      %524 = vmatpush.bf16.xpose.msra.mxu0 0
      %525 = vmatpush.bf16.xpose.msra.mxu0 0
      %526 = vmatpush.bf16.xpose.msra.mxu0 %v517
      %527 = vmatmul.bf16.gmra.mxu0 %v514
      %v528 = vpop.f32.mrf.mxu0
      %v529 = vadd.f32 0.0, %v528
      %v530 = vpop.f32.mrf.mxu0
      %531 = vdwg.mxu0
      %v532 = vmul.f32 %v529, 0.35355338
      %v533 = vadd.f32 %v532, %v360
      %s534 = scalar_lea.vmem [#allocation2], 16
      %v535 = vld [vmem:[%s534] sm:$0xff]
      %v536 = vsel %vm339, %v533, -inf
      %537 = vmax.xlane.f32.xlu0 %v536
      %v538 = vpop.xlane.xlu0 %537
      %v539 = vmax.f32 %v535, %v538
      %v540 = vsub.f32 %v535, %v539
      %v541 = vmul.f32 %v540, 1.442695
      %v542 = vpow.pop %v541
      %544 = vset.pattern.permute.xlu0 0
      %545 = vperm.xlu0 %544, %v539
      %v546 = vpop.permute.xlu0 %545
      %v548 = vsub.f32 %v533, %v546
      %v549 = vmul.f32 %v548, 1.442695
      %v550 = vpow.pop %v549
      %s551 = scalar_lea.vmem [#allocation3], 16
      %v552 = vld [vmem:[%s551] sm:$0xff]
      %v553 = vmul.f32 %v542, %v552
      %v554 = vsel %vm339, %v550, 0.0
      %555 = vadd.xlane.f32.xlu0 %v554
      %v556 = vpop.xlane.xlu0 %555
      %v557 = vadd.f32 %v553, %v556
      %558 = vst.msk [vmem:[%s551] sm:$0xff] %vm384, %v557
      %s559 = scalar_lea.vmem [#allocation4], 16
      %v560 = vld [vmem:[%s559] sm:$0xff]
      %562 = vset.pattern.permute.xlu0 0
      %563 = vperm.xlu0 %562, %v542
      %v564 = vpop.permute.xlu0 %563
      %v566 = vmul.f32 %v564, %v560
      %v567 = vpack.c.bf16 %v550, %v550
      %568 = vrot.lane.b32.xlu0 %v484, 112
      %v569 = vpop.permute.xlu0 %568
      %v571 = vsel %vm339, %v567, 0
      %v574 = vsel %vm397, %v569, 0
      %576 = vmatpush.bf16.msra.mxu0 0
      %577 = vmatpush.bf16.msra.mxu0 0
      %578 = vmatpush.bf16.msra.mxu0 0
      %579 = vmatpush.bf16.msra.mxu0 0
      %580 = vmatpush.bf16.msra.mxu0 0
      %581 = vmatpush.bf16.msra.mxu0 0
      %582 = vmatpush.bf16.msra.mxu0 0
      %583 = vmatpush.bf16.msra.mxu0 %v574
      %584 = vmatmul.bf16.gmra.mxu0 %v571
      %v585 = vpop.f32.mrf.mxu0
      %v586 = vadd.f32 0.0, %v585
      %v587 = vpop.f32.mrf.mxu0
      %588 = vdwg.mxu0
      %v589 = vadd.f32 %v566, %v586
      %590 = vst.msk [vmem:[%s559] sm:$0xff] %vm339, %v589
      %591 = vst.msk [vmem:[%s534] sm:$0xff] %vm384, %v539
      %592 = vrot.lane.b32.xlu0 %v419, 104
      %v593 = vpop.permute.xlu0 %592
      %594 = vrot.lane.b32.xlu0 %v424, 104
      %v595 = vpop.permute.xlu0 %594
      %v597 = vsel %vm339, %v593, 0
      %v600 = vsel %vm339, %v595, 0
      %602 = vmatpush.bf16.xpose.msra.mxu0 0
      %603 = vmatpush.bf16.xpose.msra.mxu0 0
      %604 = vmatpush.bf16.xpose.msra.mxu0 0
      %605 = vmatpush.bf16.xpose.msra.mxu0 0
      %606 = vmatpush.bf16.xpose.msra.mxu0 0
      %607 = vmatpush.bf16.xpose.msra.mxu0 0
      %608 = vmatpush.bf16.xpose.msra.mxu0 0
      %609 = vmatpush.bf16.xpose.msra.mxu0 %v600
      %610 = vmatmul.bf16.gmra.mxu0 %v597
      %v611 = vpop.f32.mrf.mxu0
      %v612 = vadd.f32 0.0, %v611
      %v613 = vpop.f32.mrf.mxu0
      %614 = vdwg.mxu0
      %v615 = vmul.f32 %v612, 0.35355338
      %v616 = vadd.f32 %v615, %v360
      %s617 = scalar_lea.vmem [#allocation2], 24
      %v618 = vld [vmem:[%s617] sm:$0xff]
      %v619 = vsel %vm339, %v616, -inf
      %620 = vmax.xlane.f32.xlu0 %v619
      %v621 = vpop.xlane.xlu0 %620
      %v622 = vmax.f32 %v618, %v621
      %v623 = vsub.f32 %v618, %v622
      %v624 = vmul.f32 %v623, 1.442695
      %v625 = vpow.pop %v624
      %627 = vset.pattern.permute.xlu0 0
      %628 = vperm.xlu0 %627, %v622
      %v629 = vpop.permute.xlu0 %628
      %v631 = vsub.f32 %v616, %v629
      %v632 = vmul.f32 %v631, 1.442695
      %v633 = vpow.pop %v632
      %s634 = scalar_lea.vmem [#allocation3], 24
      %v635 = vld [vmem:[%s634] sm:$0xff]
      %v636 = vmul.f32 %v625, %v635
      %v637 = vsel %vm339, %v633, 0.0
      %638 = vadd.xlane.f32.xlu0 %v637
      %v639 = vpop.xlane.xlu0 %638
      %v640 = vadd.f32 %v636, %v639
      %641 = vst.msk [vmem:[%s634] sm:$0xff] %vm384, %v640
      %s642 = scalar_lea.vmem [#allocation4], 24
      %v643 = vld [vmem:[%s642] sm:$0xff]
      %645 = vset.pattern.permute.xlu0 0
      %646 = vperm.xlu0 %645, %v625
      %v647 = vpop.permute.xlu0 %646
      %v649 = vmul.f32 %v647, %v643
      %v650 = vpack.c.bf16 %v633, %v633
      %651 = vrot.lane.b32.xlu0 %v484, 104
      %v652 = vpop.permute.xlu0 %651
      %v654 = vsel %vm339, %v650, 0
      %v657 = vsel %vm397, %v652, 0
      %659 = vmatpush.bf16.msra.mxu0 0
      %660 = vmatpush.bf16.msra.mxu0 0
      %661 = vmatpush.bf16.msra.mxu0 0
      %662 = vmatpush.bf16.msra.mxu0 0
      %663 = vmatpush.bf16.msra.mxu0 0
      %664 = vmatpush.bf16.msra.mxu0 0
      %665 = vmatpush.bf16.msra.mxu0 0
      %666 = vmatpush.bf16.msra.mxu0 %v657
      %667 = vmatmul.bf16.gmra.mxu0 %v654
      %v668 = vpop.f32.mrf.mxu0
      %v669 = vadd.f32 0.0, %v668
      %v670 = vpop.f32.mrf.mxu0
      %671 = vdwg.mxu0
      %v672 = vadd.f32 %v649, %v669
      %673 = vst.msk [vmem:[%s642] sm:$0xff] %vm339, %v672
      %674 = vst.msk [vmem:[%s617] sm:$0xff] %vm384, %v622
      // Predicated region
      $region41: #{decoder_forward.22} parent=35 // pred_check
        %p675 = pneg %p316
      $region42: #{decoder_forward.22} parent=35 // pred_check_branch
        %677 = sbr.rel (%p675) target = $region44
      $region43: #{decoder_forward.22} parent=35 // pred_region
        %v678 = vld [vmem:[#allocation4] sm:$0xff]
        %v679 = vld [vmem:[#allocation3] sm:$0xff]
        %v680 = vrcp.pop %v679
        %682 = vset.pattern.permute.xlu0 0
        %683 = vperm.xlu0 %682, %v680
        %v684 = vpop.permute.xlu0 %683
        %v686 = vmul.f32 %v678, %v684
        %v687 = vld [vmem:[%s473] sm:$0xff]
        %v688 = vld [vmem:[%s465] sm:$0xff]
        %v689 = vrcp.pop %v688
        %691 = vset.pattern.permute.xlu0 0
        %692 = vperm.xlu0 %691, %v689
        %v693 = vpop.permute.xlu0 %692
        %v695 = vmul.f32 %v687, %v693
        %v696 = vld [vmem:[%s559] sm:$0xff]
        %v697 = vld [vmem:[%s551] sm:$0xff]
        %v698 = vrcp.pop %v697
        %700 = vset.pattern.permute.xlu0 0
        %701 = vperm.xlu0 %700, %v698
        %v702 = vpop.permute.xlu0 %701
        %v704 = vmul.f32 %v696, %v702
        %v705 = vld [vmem:[%s642] sm:$0xff]
        %v706 = vld [vmem:[%s634] sm:$0xff]
        %v707 = vrcp.pop %v706
        %709 = vset.pattern.permute.xlu0 0
        %710 = vperm.xlu0 %709, %v707
        %v711 = vpop.permute.xlu0 %710
        %v713 = vmul.f32 %v705, %v711
        %715 = vrot.lane.b32.xlu0 %v695, 8
        %v716 = vpop.permute.xlu0 %715
        %719 = vrot.lane.b32.xlu0 %v704, 16
        %v720 = vpop.permute.xlu0 %719
        %723 = vrot.lane.b32.xlu0 %v713, 24
        %v724 = vpop.permute.xlu0 %723
        %v726 = vsel %vm339, %v686, %v716
        %vm727 = vcmask 130048
        %v728 = vsel %vm727, %v726, %v720
        %vm729 = vcmask 195584
        %v730 = vsel %vm729, %v728, %v724
        %v731 = vpack.c.bf16 %v730, %v730
        %vm732 = vcmask 257024
        %733 = vst.msk [vmem:[%s314] sm:$0xf] %vm732, %v731
      $region44: #{decoder_forward.22} parent=35 // pred_fallthru
        _
      %p734 = scmp.lt.s32.totalorder %s20, 1
      %s735 = scalar_select %p734, %s20, 1
      %p736 = scmp.lt.s32.totalorder %s21, 0
      %s737 = scalar_select %p736, %s21, 0
      %s738 = sadd.s32 %s737, %s735
      %s739 = smul.addr %s738, 4
      %s740 = scalar_lea.vmem %s4, %s739
      // Predicated region
      $region45: #{decoder_forward.22} parent=35 // pred_check
        %p741 = pneg %p166
      $region46: #{decoder_forward.22} parent=35 // pred_check_branch
        %743 = sbr.rel (%p741) target = $region48
      $region47: #{decoder_forward.22} parent=35 // pred_region
        _
      $region48: #{decoder_forward.22} parent=35 // pred_fallthru
        _
    $region36: #{decoder_forward.22} parent=5 // pred_fallthru
      _
    %p744 = scmp.le.s32.totalorder 2, %s10
    // Predicated region
    $region49: #{decoder_forward.22} parent=5 // pred_check
      %p745 = pneg %p744
    $region50: #{decoder_forward.22} parent=5 // pred_check_branch
      %747 = sbr.rel (%p745) target = $region52
    $region51: #{decoder_forward.22} parent=5 // pred_region
      %s748 = ssub.s32 %s10, 2
      // Predicated region
      $region53: #{decoder_forward.22} parent=51 // pred_check
        %p749 = pneg %p172
      $region54: #{decoder_forward.22} parent=51 // pred_check_branch
        %751 = sbr.rel (%p749) target = $region56
      $region55: #{decoder_forward.22} parent=51 // pred_region
        %p752 = scmp.lt.s32.totalorder %s23, 1
        %s753 = scalar_select %p752, %s23, 1
        %p754 = scmp.lt.s32.totalorder %s24, 0
        %s755 = scalar_select %p754, %s24, 0
        %s756 = sadd.s32 %s755, %s753
        %s757 = smul.addr %s756, 4
        %s758 = scalar_lea.vmem %s4, %s757
      $region56: #{decoder_forward.22} parent=51 // pred_fallthru
        _
    $region52: #{decoder_forward.22} parent=5 // pred_fallthru
      _
  $region6: #{decoder_forward.22} parent=0 // loop_footer
    %s14 = sadd.s32 1, %s10
  $region7: #{decoder_forward.22} parent=0 // loop_footer_branch
    %9 = sbr.rel target = $region3
  $region8: #{decoder_forward.22} parent=0 // loop_exit
    _

</llo_original>
